<compile_context>
chip_gen: v7x
topology: tpu7x:2x2x1
jax: 0.10.0
libtpu: 0.0.40
codegen_flags: <defaults>
</compile_context>

<pallas_src>
import functools

import jax
import jax.numpy as jnp
import numpy as np
from jax.experimental import pallas as pl
from jax.experimental.pallas import tpu as pltpu

OUT_FEATURES = 3
OUT_PAD = 128          # lane-padded decoder output width (real outputs live in lanes [0, 3))


# ----------------------------------------------------------------------------- kernel
def _bilstm_decode_kernel(x_ref,        # (T*B, IN)
                          wih_ref,      # (IN, 8H)   columns: [fwd 4H | bwd 4H]
                          b_ref,        # (1, 8H)    folded b_ih + b_hh, both directions
                          whh_f_ref,    # (H, 4H)
                          whh_b_ref,    # (H, 4H)
                          wdec_ref,     # (H, OUT_PAD)   cols >= 3 are zero
                          bdec_ref,     # (1, OUT_PAD)
                          out_ref,      # (2B, OUT_PAD)  rows [0:B)=fwd, [B:2B)=bwd
                          *, T, B, H):
    G = 4 * H

    # ---- Hoisted input projection: one MXU matmul for all timesteps & both directions,
    #      biases folded in once.
    gx = (jnp.dot(x_ref[...], wih_ref[...], preferred_element_type=jnp.float32)
          + b_ref[...])                                                  # (T*B, 8H)

    whh_f = whh_f_ref[...]
    whh_b = whh_b_ref[...]

    h_f = jnp.zeros((B, H), jnp.float32)
    c_f = jnp.zeros((B, H), jnp.float32)
    h_b = jnp.zeros((B, H), jnp.float32)
    c_b = jnp.zeros((B, H), jnp.float32)

    def cell(g, c):
        # PyTorch gate order: i, f, g, o.
        # TODO(synk): with H=32 these are sub-vreg lane slices; a full-vreg sigmoid/tanh +
        # lane-mask + pltpu.roll formulation would push this onto idle EUP/XLU slots, but
        # the win is small relative to the hoisted projection.
        i_g = jax.nn.sigmoid(g[:, 0 * H:1 * H])
        f_g = jax.nn.sigmoid(g[:, 1 * H:2 * H])
        g_g = jnp.tanh(g[:, 2 * H:3 * H])
        o_g = jax.nn.sigmoid(g[:, 3 * H:4 * H])
        c_new = f_g * c + i_g * g_g
        h_new = o_g * jnp.tanh(c_new)
        return h_new, c_new

    # ---- Interleaved unrolled recurrence (T is small & static).
    for s in range(T):
        tb = T - 1 - s
        # Two independent recurrent dots issued back-to-back each step.
        gr_f = jnp.dot(h_f, whh_f, preferred_element_type=jnp.float32)   # (B, 4H)
        gr_b = jnp.dot(h_b, whh_b, preferred_element_type=jnp.float32)   # (B, 4H)
        g_f = gx[s * B:(s + 1) * B, 0:G] + gr_f
        g_b = gx[tb * B:(tb + 1) * B, G:2 * G] + gr_b
        h_f, c_f = cell(g_f, c_f)
        h_b, c_b = cell(g_b, c_b)

    # ---- Fused decode of h_n: one dot, lane-padded unmasked store.
    h_n = jnp.concatenate([h_f, h_b], axis=0)                            # (2B, H)
    out_ref[...] = (jnp.dot(h_n, wdec_ref[...], preferred_element_type=jnp.float32)
                    + bdec_ref[...])


# ----------------------------------------------------------------------------- wrapper
def lstm_forward(x, params):
    """x: (T, B, 1024) float32.  Returns decoder(h_n): (2, B, 3) float32."""
    T, B, IN = x.shape
    H = params["w_hh_f"].shape[1]          # w_hh: (4H, H)
    G = 4 * H

    # Glue (plain XLA, outside the kernel): transpose / concatenate / pad weights so the
    # kernel only does row-major, lane-aligned matmuls and unmasked stores.
    x2 = x.reshape(T * B, IN)
    wih_cat = jnp.concatenate([params["w_ih_f"].T, params["w_ih_b"].T], axis=1)   # (IN, 8H)
    b_cat = jnp.concatenate([params["b_ih_f"] + params["b_hh_f"],
                             params["b_ih_b"] + params["b_hh_b"]]).reshape(1, 2 * G)
    whh_f_t = params["w_hh_f"].T                                                  # (H, 4H)
    whh_b_t = params["w_hh_b"].T
    wdec_pad = jnp.zeros((H, OUT_PAD), jnp.float32).at[:, :OUT_FEATURES].set(params["w_dec"].T)
    bdec_pad = jnp.zeros((1, OUT_PAD), jnp.float32).at[:, :OUT_FEATURES].set(params["b_dec"])

    inputs = (x2, wih_cat, b_cat, whh_f_t, whh_b_t, wdec_pad, bdec_pad)

    def full_spec(shape):
        nd = len(shape)
        return pl.BlockSpec(shape, lambda i, nd=nd: (0,) * nd)

    kernel = functools.partial(_bilstm_decode_kernel, T=T, B=B, H=H)
    out_pad = pl.pallas_call(
        kernel,
        out_shape=jax.ShapeDtypeStruct((2 * B, OUT_PAD), jnp.float32),
        grid=(1,),
        in_specs=[full_spec(a.shape) for a in inputs],
        out_specs=full_spec((2 * B, OUT_PAD)),
        compiler_params=pltpu.CompilerParams(
            dimension_semantics=("arbitrary",)),
    )(*inputs)

    return out_pad[:, :OUT_FEATURES].reshape(2, B, OUT_FEATURES)


# ----------------------------------------------------------------------------- pure-JAX reference
def lstm_reference(x, params):
    T, B, _ = x.shape
    H = params["w_hh_f"].shape[1]

    def run(xs, wih, whh, b_ih, b_hh):
        h = jnp.zeros((B, H), jnp.float32)
        c = jnp.zeros((B, H), jnp.float32)
        for t in range(T):
            g = xs[t] @ wih.T + h @ whh.T + b_ih + b_hh
            i = jax.nn.sigmoid(g[:, :H])
            f = jax.nn.sigmoid(g[:, H:2 * H])
            gg = jnp.tanh(g[:, 2 * H:3 * H])
            o = jax.nn.sigmoid(g[:, 3 * H:])
            c = f * c + i * gg
            h = o * jnp.tanh(c)
        return h

    h_f = run(x, params["w_ih_f"], params["w_hh_f"], params["b_ih_f"], params["b_hh_f"])
    h_b = run(x[::-1], params["w_ih_b"], params["w_hh_b"], params["b_ih_b"], params["b_hh_b"])
    h_n = jnp.stack([h_f, h_b], axis=0)                       # (2, B, H)
    return h_n @ params["w_dec"].T + params["b_dec"]          # (2, B, 3)


# ----------------------------------------------------------------------------- params
def init_params(key, in_size, hidden):
    k = 1.0 / np.sqrt(hidden)
    keys = jax.random.split(key, 10)

    def u(kk, shape):
        return jax.random.uniform(kk, shape, jnp.float32, -k, k)

    return {
        "w_ih_f": u(keys[0], (4 * hidden, in_size)),
        "w_hh_f": u(keys[1], (4 * hidden, hidden)),
        "b_ih_f": u(keys[2], (4 * hidden,)),
        "b_hh_f": u(keys[3], (4 * hidden,)),
        "w_ih_b": u(keys[4], (4 * hidden, in_size)),
        "w_hh_b": u(keys[5], (4 * hidden, hidden)),
        "b_ih_b": u(keys[6], (4 * hidden,)),
        "b_hh_b": u(keys[7], (4 * hidden,)),
        "w_dec": u(keys[8], (3, hidden)),
        "b_dec": u(keys[9], (3,)),
    }


if __name__ == "__main__":
    T, B, IN = 8, 2, 1024          # seq=8, batch=2, input_size fixed at 1024 by the module
    MAX_SEQ_LEN = 32               # hidden_size = max_seq_len = 32  (4H = 128, lane-aligned)

    key = jax.random.PRNGKey(0)
    kx, kp = jax.random.split(key)
    x = jax.random.normal(kx, (T, B, IN), jnp.float32)
    params = init_params(kp, IN, MAX_SEQ_LEN)

    out = lstm_forward(x, params)
    out = jax.block_until_ready(out)

    ref = lstm_reference(x, params)
    assert out.shape == (2, B, 3), out.shape
    np.testing.assert_allclose(np.asarray(out), np.asarray(ref), atol=2e-4, rtol=2e-4)

    print("KERNEL_OK")
</pallas_src>

<mosaic_0001>
module attributes {stable_mosaic.version = 11 : i64} {
  func.func @_bilstm_decode_kernel(%arg0: i32, %arg1: memref<16x1024xf32, #tpu.memory_space<vmem>>, %arg2: memref<1024x256xf32, #tpu.memory_space<vmem>>, %arg3: memref<1x256xf32, #tpu.memory_space<vmem>>, %arg4: memref<32x128xf32, #tpu.memory_space<vmem>>, %arg5: memref<32x128xf32, #tpu.memory_space<vmem>>, %arg6: memref<32x128xf32, #tpu.memory_space<vmem>>, %arg7: memref<1x128xf32, #tpu.memory_space<vmem>>, %arg8: memref<4x128xf32, #tpu.memory_space<vmem>>) attributes {dimension_semantics = [#tpu.dimension_semantics<arbitrary>], iteration_bounds = array<i64: 1>, scalar_prefetch = 0 : i64, scratch_operands = 0 : i64, tpu.core_type = #tpu.core_type<tc>, window_params = [{pipeline_mode = #tpu.pipeline_mode<synchronous>, transform_indices = @transform_0, window_bounds = array<i64: 16, 1024>}, {pipeline_mode = #tpu.pipeline_mode<synchronous>, transform_indices = @transform_1, window_bounds = array<i64: 1024, 256>}, {pipeline_mode = #tpu.pipeline_mode<synchronous>, transform_indices = @transform_2, window_bounds = array<i64: 1, 256>}, {pipeline_mode = #tpu.pipeline_mode<synchronous>, transform_indices = @transform_3, window_bounds = array<i64: 32, 128>}, {pipeline_mode = #tpu.pipeline_mode<synchronous>, transform_indices = @transform_4, window_bounds = array<i64: 32, 128>}, {pipeline_mode = #tpu.pipeline_mode<synchronous>, transform_indices = @transform_5, window_bounds = array<i64: 32, 128>}, {pipeline_mode = #tpu.pipeline_mode<synchronous>, transform_indices = @transform_6, window_bounds = array<i64: 1, 128>}, {pipeline_mode = #tpu.pipeline_mode<synchronous>, transform_indices = @transform_7, window_bounds = array<i64: 4, 128>}]} {
    %c0 = arith.constant 0 : index
    %c0_0 = arith.constant 0 : index
    %0 = vector.load %arg1[%c0, %c0_0] : memref<16x1024xf32, #tpu.memory_space<vmem>>, vector<16x1024xf32>
    %c0_1 = arith.constant 0 : index
    %c0_2 = arith.constant 0 : index
    %1 = vector.load %arg2[%c0_1, %c0_2] : memref<1024x256xf32, #tpu.memory_space<vmem>>, vector<1024x256xf32>
    %cst = arith.constant dense<0.000000e+00> : vector<16x256xf32>
    %2 = tpu.matmul %0, %1, %cst {dimension_numbers = #tpu.dot_dimension_numbers<[1], [0], [0], [1], [0, 0, 1, 1], [], []>} : vector<16x1024xf32>, vector<1024x256xf32>, vector<16x256xf32> -> vector<16x256xf32>
    %c0_3 = arith.constant 0 : index
    %c0_4 = arith.constant 0 : index
    %3 = vector.load %arg3[%c0_3, %c0_4] : memref<1x256xf32, #tpu.memory_space<vmem>>, vector<1x256xf32>
    %4 = vector.broadcast %3 : vector<1x256xf32> to vector<16x256xf32>
    %5 = arith.addf %2, %4 : vector<16x256xf32>
    %c0_5 = arith.constant 0 : index
    %c0_6 = arith.constant 0 : index
    %6 = vector.load %arg4[%c0_5, %c0_6] : memref<32x128xf32, #tpu.memory_space<vmem>>, vector<32x128xf32>
    %c0_7 = arith.constant 0 : index
    %c0_8 = arith.constant 0 : index
    %7 = vector.load %arg5[%c0_7, %c0_8] : memref<32x128xf32, #tpu.memory_space<vmem>>, vector<32x128xf32>
    %cst_9 = arith.constant 0.000000e+00 : f32
    %8 = vector.broadcast %cst_9 : f32 to vector<2x32xf32>
    %cst_10 = arith.constant 0.000000e+00 : f32
    %9 = vector.broadcast %cst_10 : f32 to vector<2x32xf32>
    %cst_11 = arith.constant 0.000000e+00 : f32
    %10 = vector.broadcast %cst_11 : f32 to vector<2x32xf32>
    %cst_12 = arith.constant 0.000000e+00 : f32
    %11 = vector.broadcast %cst_12 : f32 to vector<2x32xf32>
    %cst_13 = arith.constant dense<0.000000e+00> : vector<2x128xf32>
    %12 = tpu.matmul %8, %6, %cst_13 {dimension_numbers = #tpu.dot_dimension_numbers<[1], [0], [0], [1], [0, 0, 1, 1], [], []>} : vector<2x32xf32>, vector<32x128xf32>, vector<2x128xf32> -> vector<2x128xf32>
    %cst_14 = arith.constant dense<0.000000e+00> : vector<2x128xf32>
    %13 = tpu.matmul %10, %7, %cst_14 {dimension_numbers = #tpu.dot_dimension_numbers<[1], [0], [0], [1], [0, 0, 1, 1], [], []>} : vector<2x32xf32>, vector<32x128xf32>, vector<2x128xf32> -> vector<2x128xf32>
    %14 = vector.extract_strided_slice %5 {offsets = [0, 0], sizes = [2, 128], strides = [1, 1]} : vector<16x256xf32> to vector<2x128xf32>
    %15 = arith.addf %14, %12 : vector<2x128xf32>
    %16 = vector.extract_strided_slice %5 {offsets = [14, 128], sizes = [2, 128], strides = [1, 1]} : vector<16x256xf32> to vector<2x128xf32>
    %17 = arith.addf %16, %13 : vector<2x128xf32>
    %18 = vector.extract_strided_slice %15 {offsets = [0, 0], sizes = [2, 32], strides = [1, 1]} : vector<2x128xf32> to vector<2x32xf32>
    %19 = arith.negf %18 : vector<2x32xf32>
    %20 = math.exp %19 : vector<2x32xf32>
    %cst_15 = arith.constant 1.000000e+00 : f32
    %21 = vector.broadcast %cst_15 : f32 to vector<2x32xf32>
    %22 = arith.addf %21, %20 : vector<2x32xf32>
    %23 = arith.divf %21, %22 : vector<2x32xf32>
    %24 = vector.extract_strided_slice %15 {offsets = [0, 32], sizes = [2, 32], strides = [1, 1]} : vector<2x128xf32> to vector<2x32xf32>
    %25 = arith.negf %24 : vector<2x32xf32>
    %26 = math.exp %25 : vector<2x32xf32>
    %cst_16 = arith.constant 1.000000e+00 : f32
    %27 = vector.broadcast %cst_16 : f32 to vector<2x32xf32>
    %28 = arith.addf %27, %26 : vector<2x32xf32>
    %29 = arith.divf %27, %28 : vector<2x32xf32>
    %30 = vector.extract_strided_slice %15 {offsets = [0, 64], sizes = [2, 32], strides = [1, 1]} : vector<2x128xf32> to vector<2x32xf32>
    %31 = math.tanh %30 : vector<2x32xf32>
    %32 = vector.extract_strided_slice %15 {offsets = [0, 96], sizes = [2, 32], strides = [1, 1]} : vector<2x128xf32> to vector<2x32xf32>
    %33 = arith.negf %32 : vector<2x32xf32>
    %34 = math.exp %33 : vector<2x32xf32>
    %cst_17 = arith.constant 1.000000e+00 : f32
    %35 = vector.broadcast %cst_17 : f32 to vector<2x32xf32>
    %36 = arith.addf %35, %34 : vector<2x32xf32>
    %37 = arith.divf %35, %36 : vector<2x32xf32>
    %38 = arith.mulf %29, %9 : vector<2x32xf32>
    %39 = arith.mulf %23, %31 : vector<2x32xf32>
    %40 = arith.addf %38, %39 : vector<2x32xf32>
    %41 = math.tanh %40 : vector<2x32xf32>
    %42 = arith.mulf %37, %41 : vector<2x32xf32>
    %43 = vector.extract_strided_slice %17 {offsets = [0, 0], sizes = [2, 32], strides = [1, 1]} : vector<2x128xf32> to vector<2x32xf32>
    %44 = arith.negf %43 : vector<2x32xf32>
    %45 = math.exp %44 : vector<2x32xf32>
    %cst_18 = arith.constant 1.000000e+00 : f32
    %46 = vector.broadcast %cst_18 : f32 to vector<2x32xf32>
    %47 = arith.addf %46, %45 : vector<2x32xf32>
    %48 = arith.divf %46, %47 : vector<2x32xf32>
    %49 = vector.extract_strided_slice %17 {offsets = [0, 32], sizes = [2, 32], strides = [1, 1]} : vector<2x128xf32> to vector<2x32xf32>
    %50 = arith.negf %49 : vector<2x32xf32>
    %51 = math.exp %50 : vector<2x32xf32>
    %cst_19 = arith.constant 1.000000e+00 : f32
    %52 = vector.broadcast %cst_19 : f32 to vector<2x32xf32>
    %53 = arith.addf %52, %51 : vector<2x32xf32>
    %54 = arith.divf %52, %53 : vector<2x32xf32>
    %55 = vector.extract_strided_slice %17 {offsets = [0, 64], sizes = [2, 32], strides = [1, 1]} : vector<2x128xf32> to vector<2x32xf32>
    %56 = math.tanh %55 : vector<2x32xf32>
    %57 = vector.extract_strided_slice %17 {offsets = [0, 96], sizes = [2, 32], strides = [1, 1]} : vector<2x128xf32> to vector<2x32xf32>
    %58 = arith.negf %57 : vector<2x32xf32>
    %59 = math.exp %58 : vector<2x32xf32>
    %cst_20 = arith.constant 1.000000e+00 : f32
    %60 = vector.broadcast %cst_20 : f32 to vector<2x32xf32>
    %61 = arith.addf %60, %59 : vector<2x32xf32>
    %62 = arith.divf %60, %61 : vector<2x32xf32>
    %63 = arith.mulf %54, %11 : vector<2x32xf32>
    %64 = arith.mulf %48, %56 : vector<2x32xf32>
    %65 = arith.addf %63, %64 : vector<2x32xf32>
    %66 = math.tanh %65 : vector<2x32xf32>
    %67 = arith.mulf %62, %66 : vector<2x32xf32>
    %cst_21 = arith.constant dense<0.000000e+00> : vector<2x128xf32>
    %68 = tpu.matmul %42, %6, %cst_21 {dimension_numbers = #tpu.dot_dimension_numbers<[1], [0], [0], [1], [0, 0, 1, 1], [], []>} : vector<2x32xf32>, vector<32x128xf32>, vector<2x128xf32> -> vector<2x128xf32>
    %cst_22 = arith.constant dense<0.000000e+00> : vector<2x128xf32>
    %69 = tpu.matmul %67, %7, %cst_22 {dimension_numbers = #tpu.dot_dimension_numbers<[1], [0], [0], [1], [0, 0, 1, 1], [], []>} : vector<2x32xf32>, vector<32x128xf32>, vector<2x128xf32> -> vector<2x128xf32>
    %70 = vector.extract_strided_slice %5 {offsets = [2, 0], sizes = [2, 128], strides = [1, 1]} : vector<16x256xf32> to vector<2x128xf32>
    %71 = arith.addf %70, %68 : vector<2x128xf32>
    %72 = vector.extract_strided_slice %5 {offsets = [12, 128], sizes = [2, 128], strides = [1, 1]} : vector<16x256xf32> to vector<2x128xf32>
    %73 = arith.addf %72, %69 : vector<2x128xf32>
    %74 = vector.extract_strided_slice %71 {offsets = [0, 0], sizes = [2, 32], strides = [1, 1]} : vector<2x128xf32> to vector<2x32xf32>
    %75 = arith.negf %74 : vector<2x32xf32>
    %76 = math.exp %75 : vector<2x32xf32>
    %cst_23 = arith.constant 1.000000e+00 : f32
    %77 = vector.broadcast %cst_23 : f32 to vector<2x32xf32>
    %78 = arith.addf %77, %76 : vector<2x32xf32>
    %79 = arith.divf %77, %78 : vector<2x32xf32>
    %80 = vector.extract_strided_slice %71 {offsets = [0, 32], sizes = [2, 32], strides = [1, 1]} : vector<2x128xf32> to vector<2x32xf32>
    %81 = arith.negf %80 : vector<2x32xf32>
    %82 = math.exp %81 : vector<2x32xf32>
    %cst_24 = arith.constant 1.000000e+00 : f32
    %83 = vector.broadcast %cst_24 : f32 to vector<2x32xf32>
    %84 = arith.addf %83, %82 : vector<2x32xf32>
    %85 = arith.divf %83, %84 : vector<2x32xf32>
    %86 = vector.extract_strided_slice %71 {offsets = [0, 64], sizes = [2, 32], strides = [1, 1]} : vector<2x128xf32> to vector<2x32xf32>
    %87 = math.tanh %86 : vector<2x32xf32>
    %88 = vector.extract_strided_slice %71 {offsets = [0, 96], sizes = [2, 32], strides = [1, 1]} : vector<2x128xf32> to vector<2x32xf32>
    %89 = arith.negf %88 : vector<2x32xf32>
    %90 = math.exp %89 : vector<2x32xf32>
    %cst_25 = arith.constant 1.000000e+00 : f32
    %91 = vector.broadcast %cst_25 : f32 to vector<2x32xf32>
    %92 = arith.addf %91, %90 : vector<2x32xf32>
    %93 = arith.divf %91, %92 : vector<2x32xf32>
    %94 = arith.mulf %85, %40 : vector<2x32xf32>
    %95 = arith.mulf %79, %87 : vector<2x32xf32>
    %96 = arith.addf %94, %95 : vector<2x32xf32>
    %97 = math.tanh %96 : vector<2x32xf32>
    %98 = arith.mulf %93, %97 : vector<2x32xf32>
    %99 = vector.extract_strided_slice %73 {offsets = [0, 0], sizes = [2, 32], strides = [1, 1]} : vector<2x128xf32> to vector<2x32xf32>
    %100 = arith.negf %99 : vector<2x32xf32>
    %101 = math.exp %100 : vector<2x32xf32>
    %cst_26 = arith.constant 1.000000e+00 : f32
    %102 = vector.broadcast %cst_26 : f32 to vector<2x32xf32>
    %103 = arith.addf %102, %101 : vector<2x32xf32>
    %104 = arith.divf %102, %103 : vector<2x32xf32>
    %105 = vector.extract_strided_slice %73 {offsets = [0, 32], sizes = [2, 32], strides = [1, 1]} : vector<2x128xf32> to vector<2x32xf32>
    %106 = arith.negf %105 : vector<2x32xf32>
    %107 = math.exp %106 : vector<2x32xf32>
    %cst_27 = arith.constant 1.000000e+00 : f32
    %108 = vector.broadcast %cst_27 : f32 to vector<2x32xf32>
    %109 = arith.addf %108, %107 : vector<2x32xf32>
    %110 = arith.divf %108, %109 : vector<2x32xf32>
    %111 = vector.extract_strided_slice %73 {offsets = [0, 64], sizes = [2, 32], strides = [1, 1]} : vector<2x128xf32> to vector<2x32xf32>
    %112 = math.tanh %111 : vector<2x32xf32>
    %113 = vector.extract_strided_slice %73 {offsets = [0, 96], sizes = [2, 32], strides = [1, 1]} : vector<2x128xf32> to vector<2x32xf32>
    %114 = arith.negf %113 : vector<2x32xf32>
    %115 = math.exp %114 : vector<2x32xf32>
    %cst_28 = arith.constant 1.000000e+00 : f32
    %116 = vector.broadcast %cst_28 : f32 to vector<2x32xf32>
    %117 = arith.addf %116, %115 : vector<2x32xf32>
    %118 = arith.divf %116, %117 : vector<2x32xf32>
    %119 = arith.mulf %110, %65 : vector<2x32xf32>
    %120 = arith.mulf %104, %112 : vector<2x32xf32>
    %121 = arith.addf %119, %120 : vector<2x32xf32>
    %122 = math.tanh %121 : vector<2x32xf32>
    %123 = arith.mulf %118, %122 : vector<2x32xf32>
    %cst_29 = arith.constant dense<0.000000e+00> : vector<2x128xf32>
    %124 = tpu.matmul %98, %6, %cst_29 {dimension_numbers = #tpu.dot_dimension_numbers<[1], [0], [0], [1], [0, 0, 1, 1], [], []>} : vector<2x32xf32>, vector<32x128xf32>, vector<2x128xf32> -> vector<2x128xf32>
    %cst_30 = arith.constant dense<0.000000e+00> : vector<2x128xf32>
    %125 = tpu.matmul %123, %7, %cst_30 {dimension_numbers = #tpu.dot_dimension_numbers<[1], [0], [0], [1], [0, 0, 1, 1], [], []>} : vector<2x32xf32>, vector<32x128xf32>, vector<2x128xf32> -> vector<2x128xf32>
    %126 = vector.extract_strided_slice %5 {offsets = [4, 0], sizes = [2, 128], strides = [1, 1]} : vector<16x256xf32> to vector<2x128xf32>
    %127 = arith.addf %126, %124 : vector<2x128xf32>
    %128 = vector.extract_strided_slice %5 {offsets = [10, 128], sizes = [2, 128], strides = [1, 1]} : vector<16x256xf32> to vector<2x128xf32>
    %129 = arith.addf %128, %125 : vector<2x128xf32>
    %130 = vector.extract_strided_slice %127 {offsets = [0, 0], sizes = [2, 32], strides = [1, 1]} : vector<2x128xf32> to vector<2x32xf32>
    %131 = arith.negf %130 : vector<2x32xf32>
    %132 = math.exp %131 : vector<2x32xf32>
    %cst_31 = arith.constant 1.000000e+00 : f32
    %133 = vector.broadcast %cst_31 : f32 to vector<2x32xf32>
    %134 = arith.addf %133, %132 : vector<2x32xf32>
    %135 = arith.divf %133, %134 : vector<2x32xf32>
    %136 = vector.extract_strided_slice %127 {offsets = [0, 32], sizes = [2, 32], strides = [1, 1]} : vector<2x128xf32> to vector<2x32xf32>
    %137 = arith.negf %136 : vector<2x32xf32>
    %138 = math.exp %137 : vector<2x32xf32>
    %cst_32 = arith.constant 1.000000e+00 : f32
    %139 = vector.broadcast %cst_32 : f32 to vector<2x32xf32>
    %140 = arith.addf %139, %138 : vector<2x32xf32>
    %141 = arith.divf %139, %140 : vector<2x32xf32>
    %142 = vector.extract_strided_slice %127 {offsets = [0, 64], sizes = [2, 32], strides = [1, 1]} : vector<2x128xf32> to vector<2x32xf32>
    %143 = math.tanh %142 : vector<2x32xf32>
    %144 = vector.extract_strided_slice %127 {offsets = [0, 96], sizes = [2, 32], strides = [1, 1]} : vector<2x128xf32> to vector<2x32xf32>
    %145 = arith.negf %144 : vector<2x32xf32>
    %146 = math.exp %145 : vector<2x32xf32>
    %cst_33 = arith.constant 1.000000e+00 : f32
    %147 = vector.broadcast %cst_33 : f32 to vector<2x32xf32>
    %148 = arith.addf %147, %146 : vector<2x32xf32>
    %149 = arith.divf %147, %148 : vector<2x32xf32>
    %150 = arith.mulf %141, %96 : vector<2x32xf32>
    %151 = arith.mulf %135, %143 : vector<2x32xf32>
    %152 = arith.addf %150, %151 : vector<2x32xf32>
    %153 = math.tanh %152 : vector<2x32xf32>
    %154 = arith.mulf %149, %153 : vector<2x32xf32>
    %155 = vector.extract_strided_slice %129 {offsets = [0, 0], sizes = [2, 32], strides = [1, 1]} : vector<2x128xf32> to vector<2x32xf32>
    %156 = arith.negf %155 : vector<2x32xf32>
    %157 = math.exp %156 : vector<2x32xf32>
    %cst_34 = arith.constant 1.000000e+00 : f32
    %158 = vector.broadcast %cst_34 : f32 to vector<2x32xf32>
    %159 = arith.addf %158, %157 : vector<2x32xf32>
    %160 = arith.divf %158, %159 : vector<2x32xf32>
    %161 = vector.extract_strided_slice %129 {offsets = [0, 32], sizes = [2, 32], strides = [1, 1]} : vector<2x128xf32> to vector<2x32xf32>
    %162 = arith.negf %161 : vector<2x32xf32>
    %163 = math.exp %162 : vector<2x32xf32>
    %cst_35 = arith.constant 1.000000e+00 : f32
    %164 = vector.broadcast %cst_35 : f32 to vector<2x32xf32>
    %165 = arith.addf %164, %163 : vector<2x32xf32>
    %166 = arith.divf %164, %165 : vector<2x32xf32>
    %167 = vector.extract_strided_slice %129 {offsets = [0, 64], sizes = [2, 32], strides = [1, 1]} : vector<2x128xf32> to vector<2x32xf32>
    %168 = math.tanh %167 : vector<2x32xf32>
    %169 = vector.extract_strided_slice %129 {offsets = [0, 96], sizes = [2, 32], strides = [1, 1]} : vector<2x128xf32> to vector<2x32xf32>
    %170 = arith.negf %169 : vector<2x32xf32>
    %171 = math.exp %170 : vector<2x32xf32>
    %cst_36 = arith.constant 1.000000e+00 : f32
    %172 = vector.broadcast %cst_36 : f32 to vector<2x32xf32>
    %173 = arith.addf %172, %171 : vector<2x32xf32>
    %174 = arith.divf %172, %173 : vector<2x32xf32>
    %175 = arith.mulf %166, %121 : vector<2x32xf32>
    %176 = arith.mulf %160, %168 : vector<2x32xf32>
    %177 = arith.addf %175, %176 : vector<2x32xf32>
    %178 = math.tanh %177 : vector<2x32xf32>
    %179 = arith.mulf %174, %178 : vector<2x32xf32>
    %cst_37 = arith.constant dense<0.000000e+00> : vector<2x128xf32>
    %180 = tpu.matmul %154, %6, %cst_37 {dimension_numbers = #tpu.dot_dimension_numbers<[1], [0], [0], [1], [0, 0, 1, 1], [], []>} : vector<2x32xf32>, vector<32x128xf32>, vector<2x128xf32> -> vector<2x128xf32>
    %cst_38 = arith.constant dense<0.000000e+00> : vector<2x128xf32>
    %181 = tpu.matmul %179, %7, %cst_38 {dimension_numbers = #tpu.dot_dimension_numbers<[1], [0], [0], [1], [0, 0, 1, 1], [], []>} : vector<2x32xf32>, vector<32x128xf32>, vector<2x128xf32> -> vector<2x128xf32>
    %182 = vector.extract_strided_slice %5 {offsets = [6, 0], sizes = [2, 128], strides = [1, 1]} : vector<16x256xf32> to vector<2x128xf32>
    %183 = arith.addf %182, %180 : vector<2x128xf32>
    %184 = vector.extract_strided_slice %5 {offsets = [8, 128], sizes = [2, 128], strides = [1, 1]} : vector<16x256xf32> to vector<2x128xf32>
    %185 = arith.addf %184, %181 : vector<2x128xf32>
    %186 = vector.extract_strided_slice %183 {offsets = [0, 0], sizes = [2, 32], strides = [1, 1]} : vector<2x128xf32> to vector<2x32xf32>
    %187 = arith.negf %186 : vector<2x32xf32>
    %188 = math.exp %187 : vector<2x32xf32>
    %cst_39 = arith.constant 1.000000e+00 : f32
    %189 = vector.broadcast %cst_39 : f32 to vector<2x32xf32>
    %190 = arith.addf %189, %188 : vector<2x32xf32>
    %191 = arith.divf %189, %190 : vector<2x32xf32>
    %192 = vector.extract_strided_slice %183 {offsets = [0, 32], sizes = [2, 32], strides = [1, 1]} : vector<2x128xf32> to vector<2x32xf32>
    %193 = arith.negf %192 : vector<2x32xf32>
    %194 = math.exp %193 : vector<2x32xf32>
    %cst_40 = arith.constant 1.000000e+00 : f32
    %195 = vector.broadcast %cst_40 : f32 to vector<2x32xf32>
    %196 = arith.addf %195, %194 : vector<2x32xf32>
    %197 = arith.divf %195, %196 : vector<2x32xf32>
    %198 = vector.extract_strided_slice %183 {offsets = [0, 64], sizes = [2, 32], strides = [1, 1]} : vector<2x128xf32> to vector<2x32xf32>
    %199 = math.tanh %198 : vector<2x32xf32>
    %200 = vector.extract_strided_slice %183 {offsets = [0, 96], sizes = [2, 32], strides = [1, 1]} : vector<2x128xf32> to vector<2x32xf32>
    %201 = arith.negf %200 : vector<2x32xf32>
    %202 = math.exp %201 : vector<2x32xf32>
    %cst_41 = arith.constant 1.000000e+00 : f32
    %203 = vector.broadcast %cst_41 : f32 to vector<2x32xf32>
    %204 = arith.addf %203, %202 : vector<2x32xf32>
    %205 = arith.divf %203, %204 : vector<2x32xf32>
    %206 = arith.mulf %197, %152 : vector<2x32xf32>
    %207 = arith.mulf %191, %199 : vector<2x32xf32>
    %208 = arith.addf %206, %207 : vector<2x32xf32>
    %209 = math.tanh %208 : vector<2x32xf32>
    %210 = arith.mulf %205, %209 : vector<2x32xf32>
    %211 = vector.extract_strided_slice %185 {offsets = [0, 0], sizes = [2, 32], strides = [1, 1]} : vector<2x128xf32> to vector<2x32xf32>
    %212 = arith.negf %211 : vector<2x32xf32>
    %213 = math.exp %212 : vector<2x32xf32>
    %cst_42 = arith.constant 1.000000e+00 : f32
    %214 = vector.broadcast %cst_42 : f32 to vector<2x32xf32>
    %215 = arith.addf %214, %213 : vector<2x32xf32>
    %216 = arith.divf %214, %215 : vector<2x32xf32>
    %217 = vector.extract_strided_slice %185 {offsets = [0, 32], sizes = [2, 32], strides = [1, 1]} : vector<2x128xf32> to vector<2x32xf32>
    %218 = arith.negf %217 : vector<2x32xf32>
    %219 = math.exp %218 : vector<2x32xf32>
    %cst_43 = arith.constant 1.000000e+00 : f32
    %220 = vector.broadcast %cst_43 : f32 to vector<2x32xf32>
    %221 = arith.addf %220, %219 : vector<2x32xf32>
    %222 = arith.divf %220, %221 : vector<2x32xf32>
    %223 = vector.extract_strided_slice %185 {offsets = [0, 64], sizes = [2, 32], strides = [1, 1]} : vector<2x128xf32> to vector<2x32xf32>
    %224 = math.tanh %223 : vector<2x32xf32>
    %225 = vector.extract_strided_slice %185 {offsets = [0, 96], sizes = [2, 32], strides = [1, 1]} : vector<2x128xf32> to vector<2x32xf32>
    %226 = arith.negf %225 : vector<2x32xf32>
    %227 = math.exp %226 : vector<2x32xf32>
    %cst_44 = arith.constant 1.000000e+00 : f32
    %228 = vector.broadcast %cst_44 : f32 to vector<2x32xf32>
    %229 = arith.addf %228, %227 : vector<2x32xf32>
    %230 = arith.divf %228, %229 : vector<2x32xf32>
    %231 = arith.mulf %222, %177 : vector<2x32xf32>
    %232 = arith.mulf %216, %224 : vector<2x32xf32>
    %233 = arith.addf %231, %232 : vector<2x32xf32>
    %234 = math.tanh %233 : vector<2x32xf32>
    %235 = arith.mulf %230, %234 : vector<2x32xf32>
    %cst_45 = arith.constant dense<0.000000e+00> : vector<2x128xf32>
    %236 = tpu.matmul %210, %6, %cst_45 {dimension_numbers = #tpu.dot_dimension_numbers<[1], [0], [0], [1], [0, 0, 1, 1], [], []>} : vector<2x32xf32>, vector<32x128xf32>, vector<2x128xf32> -> vector<2x128xf32>
    %cst_46 = arith.constant dense<0.000000e+00> : vector<2x128xf32>
    %237 = tpu.matmul %235, %7, %cst_46 {dimension_numbers = #tpu.dot_dimension_numbers<[1], [0], [0], [1], [0, 0, 1, 1], [], []>} : vector<2x32xf32>, vector<32x128xf32>, vector<2x128xf32> -> vector<2x128xf32>
    %238 = vector.extract_strided_slice %5 {offsets = [8, 0], sizes = [2, 128], strides = [1, 1]} : vector<16x256xf32> to vector<2x128xf32>
    %239 = arith.addf %238, %236 : vector<2x128xf32>
    %240 = vector.extract_strided_slice %5 {offsets = [6, 128], sizes = [2, 128], strides = [1, 1]} : vector<16x256xf32> to vector<2x128xf32>
    %241 = arith.addf %240, %237 : vector<2x128xf32>
    %242 = vector.extract_strided_slice %239 {offsets = [0, 0], sizes = [2, 32], strides = [1, 1]} : vector<2x128xf32> to vector<2x32xf32>
    %243 = arith.negf %242 : vector<2x32xf32>
    %244 = math.exp %243 : vector<2x32xf32>
    %cst_47 = arith.constant 1.000000e+00 : f32
    %245 = vector.broadcast %cst_47 : f32 to vector<2x32xf32>
    %246 = arith.addf %245, %244 : vector<2x32xf32>
    %247 = arith.divf %245, %246 : vector<2x32xf32>
    %248 = vector.extract_strided_slice %239 {offsets = [0, 32], sizes = [2, 32], strides = [1, 1]} : vector<2x128xf32> to vector<2x32xf32>
    %249 = arith.negf %248 : vector<2x32xf32>
    %250 = math.exp %249 : vector<2x32xf32>
    %cst_48 = arith.constant 1.000000e+00 : f32
    %251 = vector.broadcast %cst_48 : f32 to vector<2x32xf32>
    %252 = arith.addf %251, %250 : vector<2x32xf32>
    %253 = arith.divf %251, %252 : vector<2x32xf32>
    %254 = vector.extract_strided_slice %239 {offsets = [0, 64], sizes = [2, 32], strides = [1, 1]} : vector<2x128xf32> to vector<2x32xf32>
    %255 = math.tanh %254 : vector<2x32xf32>
    %256 = vector.extract_strided_slice %239 {offsets = [0, 96], sizes = [2, 32], strides = [1, 1]} : vector<2x128xf32> to vector<2x32xf32>
    %257 = arith.negf %256 : vector<2x32xf32>
    %258 = math.exp %257 : vector<2x32xf32>
    %cst_49 = arith.constant 1.000000e+00 : f32
    %259 = vector.broadcast %cst_49 : f32 to vector<2x32xf32>
    %260 = arith.addf %259, %258 : vector<2x32xf32>
    %261 = arith.divf %259, %260 : vector<2x32xf32>
    %262 = arith.mulf %253, %208 : vector<2x32xf32>
    %263 = arith.mulf %247, %255 : vector<2x32xf32>
    %264 = arith.addf %262, %263 : vector<2x32xf32>
    %265 = math.tanh %264 : vector<2x32xf32>
    %266 = arith.mulf %261, %265 : vector<2x32xf32>
    %267 = vector.extract_strided_slice %241 {offsets = [0, 0], sizes = [2, 32], strides = [1, 1]} : vector<2x128xf32> to vector<2x32xf32>
    %268 = arith.negf %267 : vector<2x32xf32>
    %269 = math.exp %268 : vector<2x32xf32>
    %cst_50 = arith.constant 1.000000e+00 : f32
    %270 = vector.broadcast %cst_50 : f32 to vector<2x32xf32>
    %271 = arith.addf %270, %269 : vector<2x32xf32>
    %272 = arith.divf %270, %271 : vector<2x32xf32>
    %273 = vector.extract_strided_slice %241 {offsets = [0, 32], sizes = [2, 32], strides = [1, 1]} : vector<2x128xf32> to vector<2x32xf32>
    %274 = arith.negf %273 : vector<2x32xf32>
    %275 = math.exp %274 : vector<2x32xf32>
    %cst_51 = arith.constant 1.000000e+00 : f32
    %276 = vector.broadcast %cst_51 : f32 to vector<2x32xf32>
    %277 = arith.addf %276, %275 : vector<2x32xf32>
    %278 = arith.divf %276, %277 : vector<2x32xf32>
    %279 = vector.extract_strided_slice %241 {offsets = [0, 64], sizes = [2, 32], strides = [1, 1]} : vector<2x128xf32> to vector<2x32xf32>
    %280 = math.tanh %279 : vector<2x32xf32>
    %281 = vector.extract_strided_slice %241 {offsets = [0, 96], sizes = [2, 32], strides = [1, 1]} : vector<2x128xf32> to vector<2x32xf32>
    %282 = arith.negf %281 : vector<2x32xf32>
    %283 = math.exp %282 : vector<2x32xf32>
    %cst_52 = arith.constant 1.000000e+00 : f32
    %284 = vector.broadcast %cst_52 : f32 to vector<2x32xf32>
    %285 = arith.addf %284, %283 : vector<2x32xf32>
    %286 = arith.divf %284, %285 : vector<2x32xf32>
    %287 = arith.mulf %278, %233 : vector<2x32xf32>
    %288 = arith.mulf %272, %280 : vector<2x32xf32>
    %289 = arith.addf %287, %288 : vector<2x32xf32>
    %290 = math.tanh %289 : vector<2x32xf32>
    %291 = arith.mulf %286, %290 : vector<2x32xf32>
    %cst_53 = arith.constant dense<0.000000e+00> : vector<2x128xf32>
    %292 = tpu.matmul %266, %6, %cst_53 {dimension_numbers = #tpu.dot_dimension_numbers<[1], [0], [0], [1], [0, 0, 1, 1], [], []>} : vector<2x32xf32>, vector<32x128xf32>, vector<2x128xf32> -> vector<2x128xf32>
    %cst_54 = arith.constant dense<0.000000e+00> : vector<2x128xf32>
    %293 = tpu.matmul %291, %7, %cst_54 {dimension_numbers = #tpu.dot_dimension_numbers<[1], [0], [0], [1], [0, 0, 1, 1], [], []>} : vector<2x32xf32>, vector<32x128xf32>, vector<2x128xf32> -> vector<2x128xf32>
    %294 = vector.extract_strided_slice %5 {offsets = [10, 0], sizes = [2, 128], strides = [1, 1]} : vector<16x256xf32> to vector<2x128xf32>
    %295 = arith.addf %294, %292 : vector<2x128xf32>
    %296 = vector.extract_strided_slice %5 {offsets = [4, 128], sizes = [2, 128], strides = [1, 1]} : vector<16x256xf32> to vector<2x128xf32>
    %297 = arith.addf %296, %293 : vector<2x128xf32>
    %298 = vector.extract_strided_slice %295 {offsets = [0, 0], sizes = [2, 32], strides = [1, 1]} : vector<2x128xf32> to vector<2x32xf32>
    %299 = arith.negf %298 : vector<2x32xf32>
    %300 = math.exp %299 : vector<2x32xf32>
    %cst_55 = arith.constant 1.000000e+00 : f32
    %301 = vector.broadcast %cst_55 : f32 to vector<2x32xf32>
    %302 = arith.addf %301, %300 : vector<2x32xf32>
    %303 = arith.divf %301, %302 : vector<2x32xf32>
    %304 = vector.extract_strided_slice %295 {offsets = [0, 32], sizes = [2, 32], strides = [1, 1]} : vector<2x128xf32> to vector<2x32xf32>
    %305 = arith.negf %304 : vector<2x32xf32>
    %306 = math.exp %305 : vector<2x32xf32>
    %cst_56 = arith.constant 1.000000e+00 : f32
    %307 = vector.broadcast %cst_56 : f32 to vector<2x32xf32>
    %308 = arith.addf %307, %306 : vector<2x32xf32>
    %309 = arith.divf %307, %308 : vector<2x32xf32>
    %310 = vector.extract_strided_slice %295 {offsets = [0, 64], sizes = [2, 32], strides = [1, 1]} : vector<2x128xf32> to vector<2x32xf32>
    %311 = math.tanh %310 : vector<2x32xf32>
    %312 = vector.extract_strided_slice %295 {offsets = [0, 96], sizes = [2, 32], strides = [1, 1]} : vector<2x128xf32> to vector<2x32xf32>
    %313 = arith.negf %312 : vector<2x32xf32>
    %314 = math.exp %313 : vector<2x32xf32>
    %cst_57 = arith.constant 1.000000e+00 : f32
    %315 = vector.broadcast %cst_57 : f32 to vector<2x32xf32>
    %316 = arith.addf %315, %314 : vector<2x32xf32>
    %317 = arith.divf %315, %316 : vector<2x32xf32>
    %318 = arith.mulf %309, %264 : vector<2x32xf32>
    %319 = arith.mulf %303, %311 : vector<2x32xf32>
    %320 = arith.addf %318, %319 : vector<2x32xf32>
    %321 = math.tanh %320 : vector<2x32xf32>
    %322 = arith.mulf %317, %321 : vector<2x32xf32>
    %323 = vector.extract_strided_slice %297 {offsets = [0, 0], sizes = [2, 32], strides = [1, 1]} : vector<2x128xf32> to vector<2x32xf32>
    %324 = arith.negf %323 : vector<2x32xf32>
    %325 = math.exp %324 : vector<2x32xf32>
    %cst_58 = arith.constant 1.000000e+00 : f32
    %326 = vector.broadcast %cst_58 : f32 to vector<2x32xf32>
    %327 = arith.addf %326, %325 : vector<2x32xf32>
    %328 = arith.divf %326, %327 : vector<2x32xf32>
    %329 = vector.extract_strided_slice %297 {offsets = [0, 32], sizes = [2, 32], strides = [1, 1]} : vector<2x128xf32> to vector<2x32xf32>
    %330 = arith.negf %329 : vector<2x32xf32>
    %331 = math.exp %330 : vector<2x32xf32>
    %cst_59 = arith.constant 1.000000e+00 : f32
    %332 = vector.broadcast %cst_59 : f32 to vector<2x32xf32>
    %333 = arith.addf %332, %331 : vector<2x32xf32>
    %334 = arith.divf %332, %333 : vector<2x32xf32>
    %335 = vector.extract_strided_slice %297 {offsets = [0, 64], sizes = [2, 32], strides = [1, 1]} : vector<2x128xf32> to vector<2x32xf32>
    %336 = math.tanh %335 : vector<2x32xf32>
    %337 = vector.extract_strided_slice %297 {offsets = [0, 96], sizes = [2, 32], strides = [1, 1]} : vector<2x128xf32> to vector<2x32xf32>
    %338 = arith.negf %337 : vector<2x32xf32>
    %339 = math.exp %338 : vector<2x32xf32>
    %cst_60 = arith.constant 1.000000e+00 : f32
    %340 = vector.broadcast %cst_60 : f32 to vector<2x32xf32>
    %341 = arith.addf %340, %339 : vector<2x32xf32>
    %342 = arith.divf %340, %341 : vector<2x32xf32>
    %343 = arith.mulf %334, %289 : vector<2x32xf32>
    %344 = arith.mulf %328, %336 : vector<2x32xf32>
    %345 = arith.addf %343, %344 : vector<2x32xf32>
    %346 = math.tanh %345 : vector<2x32xf32>
    %347 = arith.mulf %342, %346 : vector<2x32xf32>
    %cst_61 = arith.constant dense<0.000000e+00> : vector<2x128xf32>
    %348 = tpu.matmul %322, %6, %cst_61 {dimension_numbers = #tpu.dot_dimension_numbers<[1], [0], [0], [1], [0, 0, 1, 1], [], []>} : vector<2x32xf32>, vector<32x128xf32>, vector<2x128xf32> -> vector<2x128xf32>
    %cst_62 = arith.constant dense<0.000000e+00> : vector<2x128xf32>
    %349 = tpu.matmul %347, %7, %cst_62 {dimension_numbers = #tpu.dot_dimension_numbers<[1], [0], [0], [1], [0, 0, 1, 1], [], []>} : vector<2x32xf32>, vector<32x128xf32>, vector<2x128xf32> -> vector<2x128xf32>
    %350 = vector.extract_strided_slice %5 {offsets = [12, 0], sizes = [2, 128], strides = [1, 1]} : vector<16x256xf32> to vector<2x128xf32>
    %351 = arith.addf %350, %348 : vector<2x128xf32>
    %352 = vector.extract_strided_slice %5 {offsets = [2, 128], sizes = [2, 128], strides = [1, 1]} : vector<16x256xf32> to vector<2x128xf32>
    %353 = arith.addf %352, %349 : vector<2x128xf32>
    %354 = vector.extract_strided_slice %351 {offsets = [0, 0], sizes = [2, 32], strides = [1, 1]} : vector<2x128xf32> to vector<2x32xf32>
    %355 = arith.negf %354 : vector<2x32xf32>
    %356 = math.exp %355 : vector<2x32xf32>
    %cst_63 = arith.constant 1.000000e+00 : f32
    %357 = vector.broadcast %cst_63 : f32 to vector<2x32xf32>
    %358 = arith.addf %357, %356 : vector<2x32xf32>
    %359 = arith.divf %357, %358 : vector<2x32xf32>
    %360 = vector.extract_strided_slice %351 {offsets = [0, 32], sizes = [2, 32], strides = [1, 1]} : vector<2x128xf32> to vector<2x32xf32>
    %361 = arith.negf %360 : vector<2x32xf32>
    %362 = math.exp %361 : vector<2x32xf32>
    %cst_64 = arith.constant 1.000000e+00 : f32
    %363 = vector.broadcast %cst_64 : f32 to vector<2x32xf32>
    %364 = arith.addf %363, %362 : vector<2x32xf32>
    %365 = arith.divf %363, %364 : vector<2x32xf32>
    %366 = vector.extract_strided_slice %351 {offsets = [0, 64], sizes = [2, 32], strides = [1, 1]} : vector<2x128xf32> to vector<2x32xf32>
    %367 = math.tanh %366 : vector<2x32xf32>
    %368 = vector.extract_strided_slice %351 {offsets = [0, 96], sizes = [2, 32], strides = [1, 1]} : vector<2x128xf32> to vector<2x32xf32>
    %369 = arith.negf %368 : vector<2x32xf32>
    %370 = math.exp %369 : vector<2x32xf32>
    %cst_65 = arith.constant 1.000000e+00 : f32
    %371 = vector.broadcast %cst_65 : f32 to vector<2x32xf32>
    %372 = arith.addf %371, %370 : vector<2x32xf32>
    %373 = arith.divf %371, %372 : vector<2x32xf32>
    %374 = arith.mulf %365, %320 : vector<2x32xf32>
    %375 = arith.mulf %359, %367 : vector<2x32xf32>
    %376 = arith.addf %374, %375 : vector<2x32xf32>
    %377 = math.tanh %376 : vector<2x32xf32>
    %378 = arith.mulf %373, %377 : vector<2x32xf32>
    %379 = vector.extract_strided_slice %353 {offsets = [0, 0], sizes = [2, 32], strides = [1, 1]} : vector<2x128xf32> to vector<2x32xf32>
    %380 = arith.negf %379 : vector<2x32xf32>
    %381 = math.exp %380 : vector<2x32xf32>
    %cst_66 = arith.constant 1.000000e+00 : f32
    %382 = vector.broadcast %cst_66 : f32 to vector<2x32xf32>
    %383 = arith.addf %382, %381 : vector<2x32xf32>
    %384 = arith.divf %382, %383 : vector<2x32xf32>
    %385 = vector.extract_strided_slice %353 {offsets = [0, 32], sizes = [2, 32], strides = [1, 1]} : vector<2x128xf32> to vector<2x32xf32>
    %386 = arith.negf %385 : vector<2x32xf32>
    %387 = math.exp %386 : vector<2x32xf32>
    %cst_67 = arith.constant 1.000000e+00 : f32
    %388 = vector.broadcast %cst_67 : f32 to vector<2x32xf32>
    %389 = arith.addf %388, %387 : vector<2x32xf32>
    %390 = arith.divf %388, %389 : vector<2x32xf32>
    %391 = vector.extract_strided_slice %353 {offsets = [0, 64], sizes = [2, 32], strides = [1, 1]} : vector<2x128xf32> to vector<2x32xf32>
    %392 = math.tanh %391 : vector<2x32xf32>
    %393 = vector.extract_strided_slice %353 {offsets = [0, 96], sizes = [2, 32], strides = [1, 1]} : vector<2x128xf32> to vector<2x32xf32>
    %394 = arith.negf %393 : vector<2x32xf32>
    %395 = math.exp %394 : vector<2x32xf32>
    %cst_68 = arith.constant 1.000000e+00 : f32
    %396 = vector.broadcast %cst_68 : f32 to vector<2x32xf32>
    %397 = arith.addf %396, %395 : vector<2x32xf32>
    %398 = arith.divf %396, %397 : vector<2x32xf32>
    %399 = arith.mulf %390, %345 : vector<2x32xf32>
    %400 = arith.mulf %384, %392 : vector<2x32xf32>
    %401 = arith.addf %399, %400 : vector<2x32xf32>
    %402 = math.tanh %401 : vector<2x32xf32>
    %403 = arith.mulf %398, %402 : vector<2x32xf32>
    %cst_69 = arith.constant dense<0.000000e+00> : vector<2x128xf32>
    %404 = tpu.matmul %378, %6, %cst_69 {dimension_numbers = #tpu.dot_dimension_numbers<[1], [0], [0], [1], [0, 0, 1, 1], [], []>} : vector<2x32xf32>, vector<32x128xf32>, vector<2x128xf32> -> vector<2x128xf32>
    %cst_70 = arith.constant dense<0.000000e+00> : vector<2x128xf32>
    %405 = tpu.matmul %403, %7, %cst_70 {dimension_numbers = #tpu.dot_dimension_numbers<[1], [0], [0], [1], [0, 0, 1, 1], [], []>} : vector<2x32xf32>, vector<32x128xf32>, vector<2x128xf32> -> vector<2x128xf32>
    %406 = vector.extract_strided_slice %5 {offsets = [14, 0], sizes = [2, 128], strides = [1, 1]} : vector<16x256xf32> to vector<2x128xf32>
    %407 = arith.addf %406, %404 : vector<2x128xf32>
    %408 = vector.extract_strided_slice %5 {offsets = [0, 128], sizes = [2, 128], strides = [1, 1]} : vector<16x256xf32> to vector<2x128xf32>
    %409 = arith.addf %408, %405 : vector<2x128xf32>
    %410 = vector.extract_strided_slice %407 {offsets = [0, 0], sizes = [2, 32], strides = [1, 1]} : vector<2x128xf32> to vector<2x32xf32>
    %411 = arith.negf %410 : vector<2x32xf32>
    %412 = math.exp %411 : vector<2x32xf32>
    %cst_71 = arith.constant 1.000000e+00 : f32
    %413 = vector.broadcast %cst_71 : f32 to vector<2x32xf32>
    %414 = arith.addf %413, %412 : vector<2x32xf32>
    %415 = arith.divf %413, %414 : vector<2x32xf32>
    %416 = vector.extract_strided_slice %407 {offsets = [0, 32], sizes = [2, 32], strides = [1, 1]} : vector<2x128xf32> to vector<2x32xf32>
    %417 = arith.negf %416 : vector<2x32xf32>
    %418 = math.exp %417 : vector<2x32xf32>
    %cst_72 = arith.constant 1.000000e+00 : f32
    %419 = vector.broadcast %cst_72 : f32 to vector<2x32xf32>
    %420 = arith.addf %419, %418 : vector<2x32xf32>
    %421 = arith.divf %419, %420 : vector<2x32xf32>
    %422 = vector.extract_strided_slice %407 {offsets = [0, 64], sizes = [2, 32], strides = [1, 1]} : vector<2x128xf32> to vector<2x32xf32>
    %423 = math.tanh %422 : vector<2x32xf32>
    %424 = vector.extract_strided_slice %407 {offsets = [0, 96], sizes = [2, 32], strides = [1, 1]} : vector<2x128xf32> to vector<2x32xf32>
    %425 = arith.negf %424 : vector<2x32xf32>
    %426 = math.exp %425 : vector<2x32xf32>
    %cst_73 = arith.constant 1.000000e+00 : f32
    %427 = vector.broadcast %cst_73 : f32 to vector<2x32xf32>
    %428 = arith.addf %427, %426 : vector<2x32xf32>
    %429 = arith.divf %427, %428 : vector<2x32xf32>
    %430 = arith.mulf %421, %376 : vector<2x32xf32>
    %431 = arith.mulf %415, %423 : vector<2x32xf32>
    %432 = arith.addf %430, %431 : vector<2x32xf32>
    %433 = math.tanh %432 : vector<2x32xf32>
    %434 = arith.mulf %429, %433 : vector<2x32xf32>
    %435 = vector.extract_strided_slice %409 {offsets = [0, 0], sizes = [2, 32], strides = [1, 1]} : vector<2x128xf32> to vector<2x32xf32>
    %436 = arith.negf %435 : vector<2x32xf32>
    %437 = math.exp %436 : vector<2x32xf32>
    %cst_74 = arith.constant 1.000000e+00 : f32
    %438 = vector.broadcast %cst_74 : f32 to vector<2x32xf32>
    %439 = arith.addf %438, %437 : vector<2x32xf32>
    %440 = arith.divf %438, %439 : vector<2x32xf32>
    %441 = vector.extract_strided_slice %409 {offsets = [0, 32], sizes = [2, 32], strides = [1, 1]} : vector<2x128xf32> to vector<2x32xf32>
    %442 = arith.negf %441 : vector<2x32xf32>
    %443 = math.exp %442 : vector<2x32xf32>
    %cst_75 = arith.constant 1.000000e+00 : f32
    %444 = vector.broadcast %cst_75 : f32 to vector<2x32xf32>
    %445 = arith.addf %444, %443 : vector<2x32xf32>
    %446 = arith.divf %444, %445 : vector<2x32xf32>
    %447 = vector.extract_strided_slice %409 {offsets = [0, 64], sizes = [2, 32], strides = [1, 1]} : vector<2x128xf32> to vector<2x32xf32>
    %448 = math.tanh %447 : vector<2x32xf32>
    %449 = vector.extract_strided_slice %409 {offsets = [0, 96], sizes = [2, 32], strides = [1, 1]} : vector<2x128xf32> to vector<2x32xf32>
    %450 = arith.negf %449 : vector<2x32xf32>
    %451 = math.exp %450 : vector<2x32xf32>
    %cst_76 = arith.constant 1.000000e+00 : f32
    %452 = vector.broadcast %cst_76 : f32 to vector<2x32xf32>
    %453 = arith.addf %452, %451 : vector<2x32xf32>
    %454 = arith.divf %452, %453 : vector<2x32xf32>
    %455 = arith.mulf %446, %401 : vector<2x32xf32>
    %456 = arith.mulf %440, %448 : vector<2x32xf32>
    %457 = arith.addf %455, %456 : vector<2x32xf32>
    %458 = math.tanh %457 : vector<2x32xf32>
    %459 = arith.mulf %454, %458 : vector<2x32xf32>
    %460 = tpu.concatenate %434, %459 in 0 : vector<2x32xf32>, vector<2x32xf32> -> vector<4x32xf32>
    %c0_77 = arith.constant 0 : index
    %c0_78 = arith.constant 0 : index
    %461 = vector.load %arg6[%c0_77, %c0_78] : memref<32x128xf32, #tpu.memory_space<vmem>>, vector<32x128xf32>
    %cst_79 = arith.constant dense<0.000000e+00> : vector<4x128xf32>
    %462 = tpu.matmul %460, %461, %cst_79 {dimension_numbers = #tpu.dot_dimension_numbers<[1], [0], [0], [1], [0, 0, 1, 1], [], []>} : vector<4x32xf32>, vector<32x128xf32>, vector<4x128xf32> -> vector<4x128xf32>
    %c0_80 = arith.constant 0 : index
    %c0_81 = arith.constant 0 : index
    %463 = vector.load %arg7[%c0_80, %c0_81] : memref<1x128xf32, #tpu.memory_space<vmem>>, vector<1x128xf32>
    %464 = vector.broadcast %463 : vector<1x128xf32> to vector<4x128xf32>
    %465 = arith.addf %462, %464 : vector<4x128xf32>
    %c0_82 = arith.constant 0 : index
    %c0_83 = arith.constant 0 : index
    %466 = vector.load %arg8[%c0_82, %c0_83] : memref<4x128xf32, #tpu.memory_space<vmem>>, vector<4x128xf32>
    tpu.vector_store %arg8[%c0_82, %c0_83], %465 {strides = array<i32>} : memref<4x128xf32, #tpu.memory_space<vmem>>, vector<4x128xf32>,
    return
  }
  func.func @transform_0(%arg0: i32) -> (i32, i32) {
    %c0_i32 = arith.constant 0 : i32
    %c0_i32_0 = arith.constant 0 : i32
    %c0_i32_1 = arith.constant 0 : i32
    return %c0_i32, %c0_i32_0 : i32, i32
  }
  func.func @transform_1(%arg0: i32) -> (i32, i32) {
    %c0_i32 = arith.constant 0 : i32
    %c0_i32_0 = arith.constant 0 : i32
    %c0_i32_1 = arith.constant 0 : i32
    return %c0_i32, %c0_i32_0 : i32, i32
  }
  func.func @transform_2(%arg0: i32) -> (i32, i32) {
    %c0_i32 = arith.constant 0 : i32
    %c0_i32_0 = arith.constant 0 : i32
    %c0_i32_1 = arith.constant 0 : i32
    return %c0_i32, %c0_i32_0 : i32, i32
  }
  func.func @transform_3(%arg0: i32) -> (i32, i32) {
    %c0_i32 = arith.constant 0 : i32
    %c0_i32_0 = arith.constant 0 : i32
    %c0_i32_1 = arith.constant 0 : i32
    return %c0_i32, %c0_i32_0 : i32, i32
  }
  func.func @transform_4(%arg0: i32) -> (i32, i32) {
    %c0_i32 = arith.constant 0 : i32
    %c0_i32_0 = arith.constant 0 : i32
    %c0_i32_1 = arith.constant 0 : i32
    return %c0_i32, %c0_i32_0 : i32, i32
  }
  func.func @transform_5(%arg0: i32) -> (i32, i32) {
    %c0_i32 = arith.constant 0 : i32
    %c0_i32_0 = arith.constant 0 : i32
    %c0_i32_1 = arith.constant 0 : i32
    return %c0_i32, %c0_i32_0 : i32, i32
  }
  func.func @transform_6(%arg0: i32) -> (i32, i32) {
    %c0_i32 = arith.constant 0 : i32
    %c0_i32_0 = arith.constant 0 : i32
    %c0_i32_1 = arith.constant 0 : i32
    return %c0_i32, %c0_i32_0 : i32, i32
  }
  func.func @transform_7(%arg0: i32) -> (i32, i32) {
    %c0_i32 = arith.constant 0 : i32
    %c0_i32_0 = arith.constant 0 : i32
    %c0_i32_1 = arith.constant 0 : i32
    return %c0_i32, %c0_i32_0 : i32, i32
  }
}

</mosaic_0001>

<llo_original>
// kernel: tpu_custom_call.1
$region0: #{tpu_custom_call.1}
  #allocation0 [shape = 'u32[]', space=smem, size = 0x4, offset = 0x4, fixed_abs, tag = 'smem constant byte address 0x4 - core index']
  #allocation1 [shape = 'u32[144,128]{1,0:T(1,128)}', space=vmem, size = 0x12000, scoped, tag = 'internal scratch']
  %s0 = inlined_call_operand.hbm [shape: f32[16,1024], index: 0, kind: input, shape index: {}]
  %s1 = inlined_call_operand.hbm [shape: f32[1024,256], index: 1, kind: input, shape index: {}]
  %s2 = inlined_call_operand.vmem [shape: f32[1,256], index: 2, kind: input, shape index: {}]
  %s3 = inlined_call_operand.hbm [shape: f32[32,128], index: 3, kind: input, shape index: {}]
  %s4 = inlined_call_operand.hbm [shape: f32[32,128], index: 4, kind: input, shape index: {}]
  %s5 = inlined_call_operand.hbm [shape: f32[32,128], index: 5, kind: input, shape index: {}]
  %s6 = inlined_call_operand.vmem [shape: f32[1,128], index: 6, kind: input, shape index: {}]
  %s7 = inlined_call_operand.hbm [shape: f32[4,128], index: 7, kind: output, shape index: {}]
  %s8 = sld [smem:[#allocation0]]
  $region58: #{tpu_custom_call.1} parent=0
    _
  %s10 = ssub.s32 1, %s8
  %s11 = scalar_select 0, %s10, %s8
  $region1: #{tpu_custom_call.1} parent=0
    #allocation2 [shape = 'u8[65536]{0}', space=vmem, size = 0x10000, scoped, tag = 'input window, operand 0, single buffered']
    #allocation3 [shape = 's32[1]{0}', space=sflag, size = 0x4, scoped, tag = 'scoped memory for tpu_custom_call.1']
    #allocation4 [shape = 's32[1]{0}', space=sflag, size = 0x4, scoped, tag = 'scoped memory for tpu_custom_call.1']
    #allocation5 [shape = 'u8[1048576]{0}', space=vmem, size = 0x100000, scoped, tag = 'input window, operand 1, single buffered']
    #allocation6 [shape = 's32[1]{0}', space=sflag, size = 0x4, scoped, tag = 'scoped memory for tpu_custom_call.1']
    #allocation7 [shape = 'u8[16384]{0}', space=vmem, size = 0x4000, scoped, tag = 'input window, operand 3, single buffered']
    #allocation8 [shape = 'u8[16384]{0}', space=vmem, size = 0x4000, scoped, tag = 'input window, operand 4, single buffered']
    #allocation9 [shape = 's32[1]{0}', space=sflag, size = 0x4, scoped, tag = 'scoped memory for tpu_custom_call.1']
    #allocation10 [shape = 'u8[16384]{0}', space=vmem, size = 0x4000, scoped, tag = 'input window, operand 5, single buffered']
    #allocation11 [shape = 'u8[2048]{0}', space=vmem, size = 0x800, scoped, tag = 'output window, operand 0, single buffered']
    %12 = vsyncpa [#allocation3], 0
    %13 = vsyncpa [#allocation6], 0
    %14 = vsyncpa [#allocation9], 0
    %15 = vsyncpa [#allocation4], 0
    // Predicated region
    $region2: #{tpu_custom_call.1} parent=1 // pred_check
      _
    $region3: #{tpu_custom_call.1} parent=1 // pred_check_branch
      %17 = sbr.rel (0) target = $region5
    $region4: #{tpu_custom_call.1} parent=1 // pred_region
      %s19 = ssub.s32 2048, 2048
      %20 = vsyncadd [#allocation3], %s19
      %s21 = sshll.u32 [#allocation2], 4
      %s22 = int_to_ptr.vmem [resolvable:$true] %s21
      %27 = dma.hbm_to_vmem [thread:$0]  %s0, 2048, %s22, [#allocation3], 1024, 1024, 64
    $region5: #{tpu_custom_call.1} parent=1 // pred_fallthru
      _
    // Predicated region
    $region6: #{tpu_custom_call.1} parent=1 // pred_check
      _
    $region7: #{tpu_custom_call.1} parent=1 // pred_check_branch
      %29 = sbr.rel (0) target = $region9
    $region8: #{tpu_custom_call.1} parent=1 // pred_region
      %s31 = ssub.s32 32768, 32768
      %32 = vsyncadd [#allocation6], %s31
      %s33 = sshll.u32 [#allocation5], 4
      %s34 = int_to_ptr.vmem [resolvable:$true] %s33
      %39 = dma.hbm_to_vmem [thread:$0]  %s1, 32768, %s34, [#allocation6], 256, 256, 16
    $region9: #{tpu_custom_call.1} parent=1 // pred_fallthru
      _
    // Predicated region
    $region10: #{tpu_custom_call.1} parent=1 // pred_check
      _
    $region11: #{tpu_custom_call.1} parent=1 // pred_check_branch
      %41 = sbr.rel (0) target = $region13
    $region12: #{tpu_custom_call.1} parent=1 // pred_region
      _
    $region13: #{tpu_custom_call.1} parent=1 // pred_fallthru
      _
    // Predicated region
    $region14: #{tpu_custom_call.1} parent=1 // pred_check
      _
    $region15: #{tpu_custom_call.1} parent=1 // pred_check_branch
      %43 = sbr.rel (0) target = $region17
    $region16: #{tpu_custom_call.1} parent=1 // pred_region
      %s45 = ssub.s32 512, 512
      %46 = vsyncadd [#allocation6], %s45
      %s47 = sshll.u32 [#allocation7], 4
      %s48 = int_to_ptr.vmem [resolvable:$true] %s47
      %53 = dma.hbm_to_vmem [thread:$0]  %s3, 512, %s48, [#allocation6], 128, 128, 8
    $region17: #{tpu_custom_call.1} parent=1 // pred_fallthru
      _
    // Predicated region
    $region18: #{tpu_custom_call.1} parent=1 // pred_check
      _
    $region19: #{tpu_custom_call.1} parent=1 // pred_check_branch
      %55 = sbr.rel (0) target = $region21
    $region20: #{tpu_custom_call.1} parent=1 // pred_region
      %s57 = ssub.s32 512, 512
      %58 = vsyncadd [#allocation9], %s57
      %s59 = sshll.u32 [#allocation8], 4
      %s60 = int_to_ptr.vmem [resolvable:$true] %s59
      %65 = dma.hbm_to_vmem [thread:$0]  %s4, 512, %s60, [#allocation9], 128, 128, 8
    $region21: #{tpu_custom_call.1} parent=1 // pred_fallthru
      _
    // Predicated region
    $region22: #{tpu_custom_call.1} parent=1 // pred_check
      _
    $region23: #{tpu_custom_call.1} parent=1 // pred_check_branch
      %67 = sbr.rel (0) target = $region25
    $region24: #{tpu_custom_call.1} parent=1 // pred_region
      %s69 = ssub.s32 512, 512
      %70 = vsyncadd [#allocation9], %s69
      %s71 = sshll.u32 [#allocation10], 4
      %s72 = int_to_ptr.vmem [resolvable:$true] %s71
      %77 = dma.hbm_to_vmem [thread:$0]  %s5, 512, %s72, [#allocation9], 128, 128, 8
    $region25: #{tpu_custom_call.1} parent=1 // pred_fallthru
      _
    // Predicated region
    $region26: #{tpu_custom_call.1} parent=1 // pred_check
      _
    $region27: #{tpu_custom_call.1} parent=1 // pred_check_branch
      %79 = sbr.rel (0) target = $region29
    $region28: #{tpu_custom_call.1} parent=1 // pred_region
      _
    $region29: #{tpu_custom_call.1} parent=1 // pred_fallthru
      _
    // Predicated region
    $region30: #{tpu_custom_call.1} parent=1 // pred_check
      _
    $region31: #{tpu_custom_call.1} parent=1 // pred_check_branch
      %81 = sbr.rel (0) target = $region33
    $region32: #{tpu_custom_call.1} parent=1 // pred_region
      %82 = dma.done [#allocation3], 2048
    $region33: #{tpu_custom_call.1} parent=1 // pred_fallthru
      _
    // Predicated region
    $region34: #{tpu_custom_call.1} parent=1 // pred_check
      _
    $region35: #{tpu_custom_call.1} parent=1 // pred_check_branch
      %84 = sbr.rel (0) target = $region37
    $region36: #{tpu_custom_call.1} parent=1 // pred_region
      %85 = dma.done [#allocation6], 32768
    $region37: #{tpu_custom_call.1} parent=1 // pred_fallthru
      _
    // Predicated region
    $region38: #{tpu_custom_call.1} parent=1 // pred_check
      _
    $region39: #{tpu_custom_call.1} parent=1 // pred_check_branch
      %87 = sbr.rel (0) target = $region41
    $region40: #{tpu_custom_call.1} parent=1 // pred_region
      %88 = dma.done [#allocation6], 512
    $region41: #{tpu_custom_call.1} parent=1 // pred_fallthru
      _
    // Predicated region
    $region42: #{tpu_custom_call.1} parent=1 // pred_check
      _
    $region43: #{tpu_custom_call.1} parent=1 // pred_check_branch
      %90 = sbr.rel (0) target = $region45
    $region44: #{tpu_custom_call.1} parent=1 // pred_region
      %91 = dma.done [#allocation9], 512
    $region45: #{tpu_custom_call.1} parent=1 // pred_fallthru
      _
    // Predicated region
    $region46: #{tpu_custom_call.1} parent=1 // pred_check
      _
    $region47: #{tpu_custom_call.1} parent=1 // pred_check_branch
      %93 = sbr.rel (0) target = $region49
    $region48: #{tpu_custom_call.1} parent=1 // pred_region
      %94 = dma.done [#allocation9], 512
    $region49: #{tpu_custom_call.1} parent=1 // pred_fallthru
      _
    %v95 = vld [vmem:[#allocation2] sm:$0xff]
    %v96 = vld [vmem:[#allocation2 + $0x8] sm:$0xff]
    %v97 = vld [vmem:[#allocation2 + $0x10] sm:$0xff]
    %v98 = vld [vmem:[#allocation2 + $0x18] sm:$0xff]
    %v99 = vld [vmem:[#allocation2 + $0x20] sm:$0xff]
    %v100 = vld [vmem:[#allocation2 + $0x28] sm:$0xff]
    %v101 = vld [vmem:[#allocation2 + $0x30] sm:$0xff]
    %v102 = vld [vmem:[#allocation2 + $0x38] sm:$0xff]
    %v103 = vld [vmem:[#allocation2 + $0x40] sm:$0xff]
    %v104 = vld [vmem:[#allocation2 + $0x48] sm:$0xff]
    %v105 = vld [vmem:[#allocation2 + $0x50] sm:$0xff]
    %v106 = vld [vmem:[#allocation2 + $0x58] sm:$0xff]
    %v107 = vld [vmem:[#allocation2 + $0x60] sm:$0xff]
    %v108 = vld [vmem:[#allocation2 + $0x68] sm:$0xff]
    %v109 = vld [vmem:[#allocation2 + $0x70] sm:$0xff]
    %v110 = vld [vmem:[#allocation2 + $0x78] sm:$0xff]
    %v111 = vld [vmem:[#allocation5] sm:$0xff]
    %v112 = vld [vmem:[#allocation5 + $0x8] sm:$0xff]
    %v113 = vld [vmem:[#allocation5 + $0x10] sm:$0xff]
    %v114 = vld [vmem:[#allocation5 + $0x18] sm:$0xff]
    %v115 = vld [vmem:[#allocation5 + $0x20] sm:$0xff]
    %v116 = vld [vmem:[#allocation5 + $0x28] sm:$0xff]
    %v117 = vld [vmem:[#allocation5 + $0x30] sm:$0xff]
    %v118 = vld [vmem:[#allocation5 + $0x38] sm:$0xff]
    %v119 = vld [vmem:[#allocation5 + $0x40] sm:$0xff]
    %v120 = vld [vmem:[#allocation5 + $0x48] sm:$0xff]
    %v121 = vld [vmem:[#allocation5 + $0x50] sm:$0xff]
    %v122 = vld [vmem:[#allocation5 + $0x58] sm:$0xff]
    %v123 = vld [vmem:[#allocation5 + $0x60] sm:$0xff]
    %v124 = vld [vmem:[#allocation5 + $0x68] sm:$0xff]
    %v125 = vld [vmem:[#allocation5 + $0x70] sm:$0xff]
    %v126 = vld [vmem:[#allocation5 + $0x78] sm:$0xff]
    %v127 = vld [vmem:[#allocation5 + $0x80] sm:$0xff]
    %v128 = vld [vmem:[#allocation5 + $0x88] sm:$0xff]
    %v129 = vld [vmem:[#allocation5 + $0x90] sm:$0xff]
    %v130 = vld [vmem:[#allocation5 + $0x98] sm:$0xff]
    %v131 = vld [vmem:[#allocation5 + $0xa0] sm:$0xff]
    %v132 = vld [vmem:[#allocation5 + $0xa8] sm:$0xff]
    %v133 = vld [vmem:[#allocation5 + $0xb0] sm:$0xff]
    %v134 = vld [vmem:[#allocation5 + $0xb8] sm:$0xff]
    %v135 = vld [vmem:[#allocation5 + $0xc0] sm:$0xff]
    %v136 = vld [vmem:[#allocation5 + $0xc8] sm:$0xff]
    %v137 = vld [vmem:[#allocation5 + $0xd0] sm:$0xff]
    %v138 = vld [vmem:[#allocation5 + $0xd8] sm:$0xff]
    %v139 = vld [vmem:[#allocation5 + $0xe0] sm:$0xff]
    %v140 = vld [vmem:[#allocation5 + $0xe8] sm:$0xff]
    %v141 = vld [vmem:[#allocation5 + $0xf0] sm:$0xff]
    %v142 = vld [vmem:[#allocation5 + $0xf8] sm:$0xff]
    %v143 = vld [vmem:[#allocation5 + $0x100] sm:$0xff]
    %v144 = vld [vmem:[#allocation5 + $0x108] sm:$0xff]
    %v145 = vld [vmem:[#allocation5 + $0x110] sm:$0xff]
    %v146 = vld [vmem:[#allocation5 + $0x118] sm:$0xff]
    %v147 = vld [vmem:[#allocation5 + $0x120] sm:$0xff]
    %v148 = vld [vmem:[#allocation5 + $0x128] sm:$0xff]
    %v149 = vld [vmem:[#allocation5 + $0x130] sm:$0xff]
    %v150 = vld [vmem:[#allocation5 + $0x138] sm:$0xff]
    %v151 = vld [vmem:[#allocation5 + $0x140] sm:$0xff]
    %v152 = vld [vmem:[#allocation5 + $0x148] sm:$0xff]
    %v153 = vld [vmem:[#allocation5 + $0x150] sm:$0xff]
    %v154 = vld [vmem:[#allocation5 + $0x158] sm:$0xff]
    %v155 = vld [vmem:[#allocation5 + $0x160] sm:$0xff]
    %v156 = vld [vmem:[#allocation5 + $0x168] sm:$0xff]
    %v157 = vld [vmem:[#allocation5 + $0x170] sm:$0xff]
    %v158 = vld [vmem:[#allocation5 + $0x178] sm:$0xff]
    %v159 = vld [vmem:[#allocation5 + $0x180] sm:$0xff]
    %v160 = vld [vmem:[#allocation5 + $0x188] sm:$0xff]
    %v161 = vld [vmem:[#allocation5 + $0x190] sm:$0xff]
    %v162 = vld [vmem:[#allocation5 + $0x198] sm:$0xff]
    %v163 = vld [vmem:[#allocation5 + $0x1a0] sm:$0xff]
    %v164 = vld [vmem:[#allocation5 + $0x1a8] sm:$0xff]
    %v165 = vld [vmem:[#allocation5 + $0x1b0] sm:$0xff]
    %v166 = vld [vmem:[#allocation5 + $0x1b8] sm:$0xff]
    %v167 = vld [vmem:[#allocation5 + $0x1c0] sm:$0xff]
    %v168 = vld [vmem:[#allocation5 + $0x1c8] sm:$0xff]
    %v169 = vld [vmem:[#allocation5 + $0x1d0] sm:$0xff]
    %v170 = vld [vmem:[#allocation5 + $0x1d8] sm:$0xff]
    %v171 = vld [vmem:[#allocation5 + $0x1e0] sm:$0xff]
    %v172 = vld [vmem:[#allocation5 + $0x1e8] sm:$0xff]
    %v173 = vld [vmem:[#allocation5 + $0x1f0] sm:$0xff]
    %v174 = vld [vmem:[#allocation5 + $0x1f8] sm:$0xff]
    %v175 = vld [vmem:[#allocation5 + $0x200] sm:$0xff]
    %v176 = vld [vmem:[#allocation5 + $0x208] sm:$0xff]
    %v177 = vld [vmem:[#allocation5 + $0x210] sm:$0xff]
    %v178 = vld [vmem:[#allocation5 + $0x218] sm:$0xff]
    %v179 = vld [vmem:[#allocation5 + $0x220] sm:$0xff]
    %v180 = vld [vmem:[#allocation5 + $0x228] sm:$0xff]
    %v181 = vld [vmem:[#allocation5 + $0x230] sm:$0xff]
    %v182 = vld [vmem:[#allocation5 + $0x238] sm:$0xff]
    %v183 = vld [vmem:[#allocation5 + $0x240] sm:$0xff]
    %v184 = vld [vmem:[#allocation5 + $0x248] sm:$0xff]
    %v185 = vld [vmem:[#allocation5 + $0x250] sm:$0xff]
    %v186 = vld [vmem:[#allocation5 + $0x258] sm:$0xff]
    %v187 = vld [vmem:[#allocation5 + $0x260] sm:$0xff]
    %v188 = vld [vmem:[#allocation5 + $0x268] sm:$0xff]
    %v189 = vld [vmem:[#allocation5 + $0x270] sm:$0xff]
    %v190 = vld [vmem:[#allocation5 + $0x278] sm:$0xff]
    %v191 = vld [vmem:[#allocation5 + $0x280] sm:$0xff]
    %v192 = vld [vmem:[#allocation5 + $0x288] sm:$0xff]
    %v193 = vld [vmem:[#allocation5 + $0x290] sm:$0xff]
    %v194 = vld [vmem:[#allocation5 + $0x298] sm:$0xff]
    %v195 = vld [vmem:[#allocation5 + $0x2a0] sm:$0xff]
    %v196 = vld [vmem:[#allocation5 + $0x2a8] sm:$0xff]
    %v197 = vld [vmem:[#allocation5 + $0x2b0] sm:$0xff]
    %v198 = vld [vmem:[#allocation5 + $0x2b8] sm:$0xff]
    %v199 = vld [vmem:[#allocation5 + $0x2c0] sm:$0xff]
    %v200 = vld [vmem:[#allocation5 + $0x2c8] sm:$0xff]
    %v201 = vld [vmem:[#allocation5 + $0x2d0] sm:$0xff]
    %v202 = vld [vmem:[#allocation5 + $0x2d8] sm:$0xff]
    %v203 = vld [vmem:[#allocation5 + $0x2e0] sm:$0xff]
    %v204 = vld [vmem:[#allocation5 + $0x2e8] sm:$0xff]
    %v205 = vld [vmem:[#allocation5 + $0x2f0] sm:$0xff]
    %v206 = vld [vmem:[#allocation5 + $0x2f8] sm:$0xff]
    %v207 = vld [vmem:[#allocation5 + $0x300] sm:$0xff]
    %v208 = vld [vmem:[#allocation5 + $0x308] sm:$0xff]
    %v209 = vld [vmem:[#allocation5 + $0x310] sm:$0xff]
    %v210 = vld [vmem:[#allocation5 + $0x318] sm:$0xff]
    %v211 = vld [vmem:[#allocation5 + $0x320] sm:$0xff]
    %v212 = vld [vmem:[#allocation5 + $0x328] sm:$0xff]
    %v213 = vld [vmem:[#allocation5 + $0x330] sm:$0xff]
    %v214 = vld [vmem:[#allocation5 + $0x338] sm:$0xff]
    %v215 = vld [vmem:[#allocation5 + $0x340] sm:$0xff]
    %v216 = vld [vmem:[#allocation5 + $0x348] sm:$0xff]
    %v217 = vld [vmem:[#allocation5 + $0x350] sm:$0xff]
    %v218 = vld [vmem:[#allocation5 + $0x358] sm:$0xff]
    %v219 = vld [vmem:[#allocation5 + $0x360] sm:$0xff]
    %v220 = vld [vmem:[#allocation5 + $0x368] sm:$0xff]
    %v221 = vld [vmem:[#allocation5 + $0x370] sm:$0xff]
    %v222 = vld [vmem:[#allocation5 + $0x378] sm:$0xff]
    %v223 = vld [vmem:[#allocation5 + $0x380] sm:$0xff]
    %v224 = vld [vmem:[#allocation5 + $0x388] sm:$0xff]
    %v225 = vld [vmem:[#allocation5 + $0x390] sm:$0xff]
    %v226 = vld [vmem:[#allocation5 + $0x398] sm:$0xff]
    %v227 = vld [vmem:[#allocation5 + $0x3a0] sm:$0xff]
    %v228 = vld [vmem:[#allocation5 + $0x3a8] sm:$0xff]
    %v229 = vld [vmem:[#allocation5 + $0x3b0] sm:$0xff]
    %v230 = vld [vmem:[#allocation5 + $0x3b8] sm:$0xff]
    %v231 = vld [vmem:[#allocation5 + $0x3c0] sm:$0xff]
    %v232 = vld [vmem:[#allocation5 + $0x3c8] sm:$0xff]
    %v233 = vld [vmem:[#allocation5 + $0x3d0] sm:$0xff]
    %v234 = vld [vmem:[#allocation5 + $0x3d8] sm:$0xff]
    %v235 = vld [vmem:[#allocation5 + $0x3e0] sm:$0xff]
    %v236 = vld [vmem:[#allocation5 + $0x3e8] sm:$0xff]
    %v237 = vld [vmem:[#allocation5 + $0x3f0] sm:$0xff]
    %v238 = vld [vmem:[#allocation5 + $0x3f8] sm:$0xff]
    %v239 = vld [vmem:[#allocation5 + $0x400] sm:$0xff]
    %v240 = vld [vmem:[#allocation5 + $0x408] sm:$0xff]
    %v241 = vld [vmem:[#allocation5 + $0x410] sm:$0xff]
    %v242 = vld [vmem:[#allocation5 + $0x418] sm:$0xff]
    %v243 = vld [vmem:[#allocation5 + $0x420] sm:$0xff]
    %v244 = vld [vmem:[#allocation5 + $0x428] sm:$0xff]
    %v245 = vld [vmem:[#allocation5 + $0x430] sm:$0xff]
    %v246 = vld [vmem:[#allocation5 + $0x438] sm:$0xff]
    %v247 = vld [vmem:[#allocation5 + $0x440] sm:$0xff]
    %v248 = vld [vmem:[#allocation5 + $0x448] sm:$0xff]
    %v249 = vld [vmem:[#allocation5 + $0x450] sm:$0xff]
    %v250 = vld [vmem:[#allocation5 + $0x458] sm:$0xff]
    %v251 = vld [vmem:[#allocation5 + $0x460] sm:$0xff]
    %v252 = vld [vmem:[#allocation5 + $0x468] sm:$0xff]
    %v253 = vld [vmem:[#allocation5 + $0x470] sm:$0xff]
    %v254 = vld [vmem:[#allocation5 + $0x478] sm:$0xff]
    %v255 = vld [vmem:[#allocation5 + $0x480] sm:$0xff]
    %v256 = vld [vmem:[#allocation5 + $0x488] sm:$0xff]
    %v257 = vld [vmem:[#allocation5 + $0x490] sm:$0xff]
    %v258 = vld [vmem:[#allocation5 + $0x498] sm:$0xff]
    %v259 = vld [vmem:[#allocation5 + $0x4a0] sm:$0xff]
    %v260 = vld [vmem:[#allocation5 + $0x4a8] sm:$0xff]
    %v261 = vld [vmem:[#allocation5 + $0x4b0] sm:$0xff]
    %v262 = vld [vmem:[#allocation5 + $0x4b8] sm:$0xff]
    %v263 = vld [vmem:[#allocation5 + $0x4c0] sm:$0xff]
    %v264 = vld [vmem:[#allocation5 + $0x4c8] sm:$0xff]
    %v265 = vld [vmem:[#allocation5 + $0x4d0] sm:$0xff]
    %v266 = vld [vmem:[#allocation5 + $0x4d8] sm:$0xff]
    %v267 = vld [vmem:[#allocation5 + $0x4e0] sm:$0xff]
    %v268 = vld [vmem:[#allocation5 + $0x4e8] sm:$0xff]
    %v269 = vld [vmem:[#allocation5 + $0x4f0] sm:$0xff]
    %v270 = vld [vmem:[#allocation5 + $0x4f8] sm:$0xff]
    %v271 = vld [vmem:[#allocation5 + $0x500] sm:$0xff]
    %v272 = vld [vmem:[#allocation5 + $0x508] sm:$0xff]
    %v273 = vld [vmem:[#allocation5 + $0x510] sm:$0xff]
    %v274 = vld [vmem:[#allocation5 + $0x518] sm:$0xff]
    %v275 = vld [vmem:[#allocation5 + $0x520] sm:$0xff]
    %v276 = vld [vmem:[#allocation5 + $0x528] sm:$0xff]
    %v277 = vld [vmem:[#allocation5 + $0x530] sm:$0xff]
    %v278 = vld [vmem:[#allocation5 + $0x538] sm:$0xff]
    %v279 = vld [vmem:[#allocation5 + $0x540] sm:$0xff]
    %v280 = vld [vmem:[#allocation5 + $0x548] sm:$0xff]
    %v281 = vld [vmem:[#allocation5 + $0x550] sm:$0xff]
    %v282 = vld [vmem:[#allocation5 + $0x558] sm:$0xff]
    %v283 = vld [vmem:[#allocation5 + $0x560] sm:$0xff]
    %v284 = vld [vmem:[#allocation5 + $0x568] sm:$0xff]
    %v285 = vld [vmem:[#allocation5 + $0x570] sm:$0xff]
    %v286 = vld [vmem:[#allocation5 + $0x578] sm:$0xff]
    %v287 = vld [vmem:[#allocation5 + $0x580] sm:$0xff]
    %v288 = vld [vmem:[#allocation5 + $0x588] sm:$0xff]
    %v289 = vld [vmem:[#allocation5 + $0x590] sm:$0xff]
    %v290 = vld [vmem:[#allocation5 + $0x598] sm:$0xff]
    %v291 = vld [vmem:[#allocation5 + $0x5a0] sm:$0xff]
    %v292 = vld [vmem:[#allocation5 + $0x5a8] sm:$0xff]
    %v293 = vld [vmem:[#allocation5 + $0x5b0] sm:$0xff]
    %v294 = vld [vmem:[#allocation5 + $0x5b8] sm:$0xff]
    %v295 = vld [vmem:[#allocation5 + $0x5c0] sm:$0xff]
    %v296 = vld [vmem:[#allocation5 + $0x5c8] sm:$0xff]
    %v297 = vld [vmem:[#allocation5 + $0x5d0] sm:$0xff]
    %v298 = vld [vmem:[#allocation5 + $0x5d8] sm:$0xff]
    %v299 = vld [vmem:[#allocation5 + $0x5e0] sm:$0xff]
    %v300 = vld [vmem:[#allocation5 + $0x5e8] sm:$0xff]
    %v301 = vld [vmem:[#allocation5 + $0x5f0] sm:$0xff]
    %v302 = vld [vmem:[#allocation5 + $0x5f8] sm:$0xff]
    %v303 = vld [vmem:[#allocation5 + $0x600] sm:$0xff]
    %v304 = vld [vmem:[#allocation5 + $0x608] sm:$0xff]
    %v305 = vld [vmem:[#allocation5 + $0x610] sm:$0xff]
    %v306 = vld [vmem:[#allocation5 + $0x618] sm:$0xff]
    %v307 = vld [vmem:[#allocation5 + $0x620] sm:$0xff]
    %v308 = vld [vmem:[#allocation5 + $0x628] sm:$0xff]
    %v309 = vld [vmem:[#allocation5 + $0x630] sm:$0xff]
    %v310 = vld [vmem:[#allocation5 + $0x638] sm:$0xff]
    %v311 = vld [vmem:[#allocation5 + $0x640] sm:$0xff]
    %v312 = vld [vmem:[#allocation5 + $0x648] sm:$0xff]
    %v313 = vld [vmem:[#allocation5 + $0x650] sm:$0xff]
    %v314 = vld [vmem:[#allocation5 + $0x658] sm:$0xff]
    %v315 = vld [vmem:[#allocation5 + $0x660] sm:$0xff]
    %v316 = vld [vmem:[#allocation5 + $0x668] sm:$0xff]
    %v317 = vld [vmem:[#allocation5 + $0x670] sm:$0xff]
    %v318 = vld [vmem:[#allocation5 + $0x678] sm:$0xff]
    %v319 = vld [vmem:[#allocation5 + $0x680] sm:$0xff]
    %v320 = vld [vmem:[#allocation5 + $0x688] sm:$0xff]
    %v321 = vld [vmem:[#allocation5 + $0x690] sm:$0xff]
    %v322 = vld [vmem:[#allocation5 + $0x698] sm:$0xff]
    %v323 = vld [vmem:[#allocation5 + $0x6a0] sm:$0xff]
    %v324 = vld [vmem:[#allocation5 + $0x6a8] sm:$0xff]
    %v325 = vld [vmem:[#allocation5 + $0x6b0] sm:$0xff]
    %v326 = vld [vmem:[#allocation5 + $0x6b8] sm:$0xff]
    %v327 = vld [vmem:[#allocation5 + $0x6c0] sm:$0xff]
    %v328 = vld [vmem:[#allocation5 + $0x6c8] sm:$0xff]
    %v329 = vld [vmem:[#allocation5 + $0x6d0] sm:$0xff]
    %v330 = vld [vmem:[#allocation5 + $0x6d8] sm:$0xff]
    %v331 = vld [vmem:[#allocation5 + $0x6e0] sm:$0xff]
    %v332 = vld [vmem:[#allocation5 + $0x6e8] sm:$0xff]
    %v333 = vld [vmem:[#allocation5 + $0x6f0] sm:$0xff]
    %v334 = vld [vmem:[#allocation5 + $0x6f8] sm:$0xff]
    %v335 = vld [vmem:[#allocation5 + $0x700] sm:$0xff]
    %v336 = vld [vmem:[#allocation5 + $0x708] sm:$0xff]
    %v337 = vld [vmem:[#allocation5 + $0x710] sm:$0xff]
    %v338 = vld [vmem:[#allocation5 + $0x718] sm:$0xff]
    %v339 = vld [vmem:[#allocation5 + $0x720] sm:$0xff]
    %v340 = vld [vmem:[#allocation5 + $0x728] sm:$0xff]
    %v341 = vld [vmem:[#allocation5 + $0x730] sm:$0xff]
    %v342 = vld [vmem:[#allocation5 + $0x738] sm:$0xff]
    %v343 = vld [vmem:[#allocation5 + $0x740] sm:$0xff]
    %v344 = vld [vmem:[#allocation5 + $0x748] sm:$0xff]
    %v345 = vld [vmem:[#allocation5 + $0x750] sm:$0xff]
    %v346 = vld [vmem:[#allocation5 + $0x758] sm:$0xff]
    %v347 = vld [vmem:[#allocation5 + $0x760] sm:$0xff]
    %v348 = vld [vmem:[#allocation5 + $0x768] sm:$0xff]
    %v349 = vld [vmem:[#allocation5 + $0x770] sm:$0xff]
    %v350 = vld [vmem:[#allocation5 + $0x778] sm:$0xff]
    %v351 = vld [vmem:[#allocation5 + $0x780] sm:$0xff]
    %v352 = vld [vmem:[#allocation5 + $0x788] sm:$0xff]
    %v353 = vld [vmem:[#allocation5 + $0x790] sm:$0xff]
    %v354 = vld [vmem:[#allocation5 + $0x798] sm:$0xff]
    %v355 = vld [vmem:[#allocation5 + $0x7a0] sm:$0xff]
    %v356 = vld [vmem:[#allocation5 + $0x7a8] sm:$0xff]
    %v357 = vld [vmem:[#allocation5 + $0x7b0] sm:$0xff]
    %v358 = vld [vmem:[#allocation5 + $0x7b8] sm:$0xff]
    %v359 = vld [vmem:[#allocation5 + $0x7c0] sm:$0xff]
    %v360 = vld [vmem:[#allocation5 + $0x7c8] sm:$0xff]
    %v361 = vld [vmem:[#allocation5 + $0x7d0] sm:$0xff]
    %v362 = vld [vmem:[#allocation5 + $0x7d8] sm:$0xff]
    %v363 = vld [vmem:[#allocation5 + $0x7e0] sm:$0xff]
    %v364 = vld [vmem:[#allocation5 + $0x7e8] sm:$0xff]
    %v365 = vld [vmem:[#allocation5 + $0x7f0] sm:$0xff]
    %v366 = vld [vmem:[#allocation5 + $0x7f8] sm:$0xff]
    %v367 = vld [vmem:[%s2] sm:$0x3]
    %v369 = vlaneseq
    %v370 = vshrl.u32 %v369, 7
    %v371 = vsub.s32 0, %v370
    %v372 = vrot.slane %v367, %v371
    %v373 = vlaneseq
    %v374 = vshrl.u32 %v373, 7
    %v375 = vsub.s32 1, %v374
    %v376 = vrot.slane %v367, %v375
    %379 = vmatprep.subr.mxu0 %v112
    %380 = vmatpush1.msra.mxu0 %v111
    %381 = vmatprep.subr.mxu0 %v114
    %382 = vmatpush1.msra.mxu0 %v113
    %383 = vmatprep.subr.mxu0 %v116
    %384 = vmatpush1.msra.mxu0 %v115
    %385 = vmatprep.subr.mxu0 %v118
    %386 = vmatpush1.msra.mxu0 %v117
    %387 = vmatprep.subr.mxu0 %v120
    %388 = vmatpush1.msra.mxu0 %v119
    %389 = vmatprep.subr.mxu0 %v122
    %390 = vmatpush1.msra.mxu0 %v121
    %391 = vmatprep.subr.mxu0 %v124
    %392 = vmatpush1.msra.mxu0 %v123
    %393 = vmatprep.subr.mxu0 %v126
    %394 = vmatpush1.msra.mxu0 %v125
    %395 = vmatprep.subr.mxu0 %v128
    %396 = vmatpush1.msra.mxu0 %v127
    %397 = vmatprep.subr.mxu0 %v130
    %398 = vmatpush1.msra.mxu0 %v129
    %399 = vmatprep.subr.mxu0 %v132
    %400 = vmatpush1.msra.mxu0 %v131
    %401 = vmatprep.subr.mxu0 %v134
    %402 = vmatpush1.msra.mxu0 %v133
    %403 = vmatprep.subr.mxu0 %v136
    %404 = vmatpush1.msra.mxu0 %v135
    %405 = vmatprep.subr.mxu0 %v138
    %406 = vmatpush1.msra.mxu0 %v137
    %407 = vmatprep.subr.mxu0 %v140
    %408 = vmatpush1.msra.mxu0 %v139
    %409 = vmatprep.subr.mxu0 %v142
    %410 = vmatpush1.msra.mxu0 %v141
    %411 = vmatprep.subr.mxu0 %v144
    %412 = vmatpush1.msra.mxu0 %v143
    %413 = vmatprep.subr.mxu0 %v146
    %414 = vmatpush1.msra.mxu0 %v145
    %415 = vmatprep.subr.mxu0 %v148
    %416 = vmatpush1.msra.mxu0 %v147
    %417 = vmatprep.subr.mxu0 %v150
    %418 = vmatpush1.msra.mxu0 %v149
    %419 = vmatprep.subr.mxu0 %v152
    %420 = vmatpush1.msra.mxu0 %v151
    %421 = vmatprep.subr.mxu0 %v154
    %422 = vmatpush1.msra.mxu0 %v153
    %423 = vmatprep.subr.mxu0 %v156
    %424 = vmatpush1.msra.mxu0 %v155
    %425 = vmatprep.subr.mxu0 %v158
    %426 = vmatpush1.msra.mxu0 %v157
    %427 = vmatprep.subr.mxu0 %v160
    %428 = vmatpush1.msra.mxu0 %v159
    %429 = vmatprep.subr.mxu0 %v162
    %430 = vmatpush1.msra.mxu0 %v161
    %431 = vmatprep.subr.mxu0 %v164
    %432 = vmatpush1.msra.mxu0 %v163
    %433 = vmatprep.subr.mxu0 %v166
    %434 = vmatpush1.msra.mxu0 %v165
    %435 = vmatprep.subr.mxu0 %v168
    %436 = vmatpush1.msra.mxu0 %v167
    %437 = vmatprep.subr.mxu0 %v170
    %438 = vmatpush1.msra.mxu0 %v169
    %439 = vmatprep.subr.mxu0 %v172
    %440 = vmatpush1.msra.mxu0 %v171
    %441 = vmatprep.subr.mxu0 %v174
    %442 = vmatpush1.msra.mxu0 %v173
    %443 = vmatprep.mubr.f32.mxu0 %v96
    %444 = vmatmul.mubr.f32.gmra.mrb[0].mxu0 %v95
    %v445 = vpop.f32.mrb[0].mxu0
    %v446 = vadd.f32 %v372, %v445
    %v447 = vpop.f32.mrb[0].mxu0
    %v448 = vadd.f32 %v376, %v447
    %449 = vmatprep.mubr.f32.mxu0 %v104
    %450 = vmatmul.mubr.f32.gmra.mrb[0].mxu0 %v103
    %v451 = vpop.f32.mrb[0].mxu0
    %v452 = vadd.f32 %v372, %v451
    %v453 = vpop.f32.mrb[0].mxu0
    %v454 = vadd.f32 %v376, %v453
    %455 = vdwg.mxu0
    %456 = vmatprep.subr.mxu0 %v176
    %457 = vmatpush1.msra.mxu0 %v175
    %458 = vmatprep.subr.mxu0 %v178
    %459 = vmatpush1.msra.mxu0 %v177
    %460 = vmatprep.subr.mxu0 %v180
    %461 = vmatpush1.msra.mxu0 %v179
    %462 = vmatprep.subr.mxu0 %v182
    %463 = vmatpush1.msra.mxu0 %v181
    %464 = vmatprep.subr.mxu0 %v184
    %465 = vmatpush1.msra.mxu0 %v183
    %466 = vmatprep.subr.mxu0 %v186
    %467 = vmatpush1.msra.mxu0 %v185
    %468 = vmatprep.subr.mxu0 %v188
    %469 = vmatpush1.msra.mxu0 %v187
    %470 = vmatprep.subr.mxu0 %v190
    %471 = vmatpush1.msra.mxu0 %v189
    %472 = vmatprep.subr.mxu0 %v192
    %473 = vmatpush1.msra.mxu0 %v191
    %474 = vmatprep.subr.mxu0 %v194
    %475 = vmatpush1.msra.mxu0 %v193
    %476 = vmatprep.subr.mxu0 %v196
    %477 = vmatpush1.msra.mxu0 %v195
    %478 = vmatprep.subr.mxu0 %v198
    %479 = vmatpush1.msra.mxu0 %v197
    %480 = vmatprep.subr.mxu0 %v200
    %481 = vmatpush1.msra.mxu0 %v199
    %482 = vmatprep.subr.mxu0 %v202
    %483 = vmatpush1.msra.mxu0 %v201
    %484 = vmatprep.subr.mxu0 %v204
    %485 = vmatpush1.msra.mxu0 %v203
    %486 = vmatprep.subr.mxu0 %v206
    %487 = vmatpush1.msra.mxu0 %v205
    %488 = vmatprep.subr.mxu0 %v208
    %489 = vmatpush1.msra.mxu0 %v207
    %490 = vmatprep.subr.mxu0 %v210
    %491 = vmatpush1.msra.mxu0 %v209
    %492 = vmatprep.subr.mxu0 %v212
    %493 = vmatpush1.msra.mxu0 %v211
    %494 = vmatprep.subr.mxu0 %v214
    %495 = vmatpush1.msra.mxu0 %v213
    %496 = vmatprep.subr.mxu0 %v216
    %497 = vmatpush1.msra.mxu0 %v215
    %498 = vmatprep.subr.mxu0 %v218
    %499 = vmatpush1.msra.mxu0 %v217
    %500 = vmatprep.subr.mxu0 %v220
    %501 = vmatpush1.msra.mxu0 %v219
    %502 = vmatprep.subr.mxu0 %v222
    %503 = vmatpush1.msra.mxu0 %v221
    %504 = vmatprep.subr.mxu0 %v224
    %505 = vmatpush1.msra.mxu0 %v223
    %506 = vmatprep.subr.mxu0 %v226
    %507 = vmatpush1.msra.mxu0 %v225
    %508 = vmatprep.subr.mxu0 %v228
    %509 = vmatpush1.msra.mxu0 %v227
    %510 = vmatprep.subr.mxu0 %v230
    %511 = vmatpush1.msra.mxu0 %v229
    %512 = vmatprep.subr.mxu0 %v232
    %513 = vmatpush1.msra.mxu0 %v231
    %514 = vmatprep.subr.mxu0 %v234
    %515 = vmatpush1.msra.mxu0 %v233
    %516 = vmatprep.subr.mxu0 %v236
    %517 = vmatpush1.msra.mxu0 %v235
    %518 = vmatprep.subr.mxu0 %v238
    %519 = vmatpush1.msra.mxu0 %v237
    %520 = vmatprep.mubr.f32.mxu0 %v98
    %521 = vmatmul.mubr.f32.gmra.mrb[0].mxu0 %v97
    %v522 = vpop.f32.mrb[0].mxu0
    %v523 = vadd.f32 %v446, %v522
    %v524 = vpop.f32.mrb[0].mxu0
    %v525 = vadd.f32 %v448, %v524
    %526 = vmatprep.mubr.f32.mxu0 %v106
    %527 = vmatmul.mubr.f32.gmra.mrb[0].mxu0 %v105
    %v528 = vpop.f32.mrb[0].mxu0
    %v529 = vadd.f32 %v452, %v528
    %v530 = vpop.f32.mrb[0].mxu0
    %v531 = vadd.f32 %v454, %v530
    %532 = vdwg.mxu0
    %533 = vmatprep.subr.mxu0 %v240
    %534 = vmatpush1.msra.mxu0 %v239
    %535 = vmatprep.subr.mxu0 %v242
    %536 = vmatpush1.msra.mxu0 %v241
    %537 = vmatprep.subr.mxu0 %v244
    %538 = vmatpush1.msra.mxu0 %v243
    %539 = vmatprep.subr.mxu0 %v246
    %540 = vmatpush1.msra.mxu0 %v245
    %541 = vmatprep.subr.mxu0 %v248
    %542 = vmatpush1.msra.mxu0 %v247
    %543 = vmatprep.subr.mxu0 %v250
    %544 = vmatpush1.msra.mxu0 %v249
    %545 = vmatprep.subr.mxu0 %v252
    %546 = vmatpush1.msra.mxu0 %v251
    %547 = vmatprep.subr.mxu0 %v254
    %548 = vmatpush1.msra.mxu0 %v253
    %549 = vmatprep.subr.mxu0 %v256
    %550 = vmatpush1.msra.mxu0 %v255
    %551 = vmatprep.subr.mxu0 %v258
    %552 = vmatpush1.msra.mxu0 %v257
    %553 = vmatprep.subr.mxu0 %v260
    %554 = vmatpush1.msra.mxu0 %v259
    %555 = vmatprep.subr.mxu0 %v262
    %556 = vmatpush1.msra.mxu0 %v261
    %557 = vmatprep.subr.mxu0 %v264
    %558 = vmatpush1.msra.mxu0 %v263
    %559 = vmatprep.subr.mxu0 %v266
    %560 = vmatpush1.msra.mxu0 %v265
    %561 = vmatprep.subr.mxu0 %v268
    %562 = vmatpush1.msra.mxu0 %v267
    %563 = vmatprep.subr.mxu0 %v270
    %564 = vmatpush1.msra.mxu0 %v269
    %565 = vmatprep.subr.mxu0 %v272
    %566 = vmatpush1.msra.mxu0 %v271
    %567 = vmatprep.subr.mxu0 %v274
    %568 = vmatpush1.msra.mxu0 %v273
    %569 = vmatprep.subr.mxu0 %v276
    %570 = vmatpush1.msra.mxu0 %v275
    %571 = vmatprep.subr.mxu0 %v278
    %572 = vmatpush1.msra.mxu0 %v277
    %573 = vmatprep.subr.mxu0 %v280
    %574 = vmatpush1.msra.mxu0 %v279
    %575 = vmatprep.subr.mxu0 %v282
    %576 = vmatpush1.msra.mxu0 %v281
    %577 = vmatprep.subr.mxu0 %v284
    %578 = vmatpush1.msra.mxu0 %v283
    %579 = vmatprep.subr.mxu0 %v286
    %580 = vmatpush1.msra.mxu0 %v285
    %581 = vmatprep.subr.mxu0 %v288
    %582 = vmatpush1.msra.mxu0 %v287
    %583 = vmatprep.subr.mxu0 %v290
    %584 = vmatpush1.msra.mxu0 %v289
    %585 = vmatprep.subr.mxu0 %v292
    %586 = vmatpush1.msra.mxu0 %v291
    %587 = vmatprep.subr.mxu0 %v294
    %588 = vmatpush1.msra.mxu0 %v293
    %589 = vmatprep.subr.mxu0 %v296
    %590 = vmatpush1.msra.mxu0 %v295
    %591 = vmatprep.subr.mxu0 %v298
    %592 = vmatpush1.msra.mxu0 %v297
    %593 = vmatprep.subr.mxu0 %v300
    %594 = vmatpush1.msra.mxu0 %v299
    %595 = vmatprep.subr.mxu0 %v302
    %596 = vmatpush1.msra.mxu0 %v301
    %597 = vmatprep.mubr.f32.mxu0 %v100
    %598 = vmatmul.mubr.f32.gmra.mrb[0].mxu0 %v99
    %v599 = vpop.f32.mrb[0].mxu0
    %v600 = vadd.f32 %v523, %v599
    %v601 = vpop.f32.mrb[0].mxu0
    %v602 = vadd.f32 %v525, %v601
    %603 = vmatprep.mubr.f32.mxu0 %v108
    %604 = vmatmul.mubr.f32.gmra.mrb[0].mxu0 %v107
    %v605 = vpop.f32.mrb[0].mxu0
    %v606 = vadd.f32 %v529, %v605
    %v607 = vpop.f32.mrb[0].mxu0
    %v608 = vadd.f32 %v531, %v607
    %609 = vdwg.mxu0
    %610 = vmatprep.subr.mxu0 %v304
    %611 = vmatpush1.msra.mxu0 %v303
    %612 = vmatprep.subr.mxu0 %v306
    %613 = vmatpush1.msra.mxu0 %v305
    %614 = vmatprep.subr.mxu0 %v308
    %615 = vmatpush1.msra.mxu0 %v307
    %616 = vmatprep.subr.mxu0 %v310
    %617 = vmatpush1.msra.mxu0 %v309
    %618 = vmatprep.subr.mxu0 %v312
    %619 = vmatpush1.msra.mxu0 %v311
    %620 = vmatprep.subr.mxu0 %v314
    %621 = vmatpush1.msra.mxu0 %v313
    %622 = vmatprep.subr.mxu0 %v316
    %623 = vmatpush1.msra.mxu0 %v315
    %624 = vmatprep.subr.mxu0 %v318
    %625 = vmatpush1.msra.mxu0 %v317
    %626 = vmatprep.subr.mxu0 %v320
    %627 = vmatpush1.msra.mxu0 %v319
    %628 = vmatprep.subr.mxu0 %v322
    %629 = vmatpush1.msra.mxu0 %v321
    %630 = vmatprep.subr.mxu0 %v324
    %631 = vmatpush1.msra.mxu0 %v323
    %632 = vmatprep.subr.mxu0 %v326
    %633 = vmatpush1.msra.mxu0 %v325
    %634 = vmatprep.subr.mxu0 %v328
    %635 = vmatpush1.msra.mxu0 %v327
    %636 = vmatprep.subr.mxu0 %v330
    %637 = vmatpush1.msra.mxu0 %v329
    %638 = vmatprep.subr.mxu0 %v332
    %639 = vmatpush1.msra.mxu0 %v331
    %640 = vmatprep.subr.mxu0 %v334
    %641 = vmatpush1.msra.mxu0 %v333
    %642 = vmatprep.subr.mxu0 %v336
    %643 = vmatpush1.msra.mxu0 %v335
    %644 = vmatprep.subr.mxu0 %v338
    %645 = vmatpush1.msra.mxu0 %v337
    %646 = vmatprep.subr.mxu0 %v340
    %647 = vmatpush1.msra.mxu0 %v339
    %648 = vmatprep.subr.mxu0 %v342
    %649 = vmatpush1.msra.mxu0 %v341
    %650 = vmatprep.subr.mxu0 %v344
    %651 = vmatpush1.msra.mxu0 %v343
    %652 = vmatprep.subr.mxu0 %v346
    %653 = vmatpush1.msra.mxu0 %v345
    %654 = vmatprep.subr.mxu0 %v348
    %655 = vmatpush1.msra.mxu0 %v347
    %656 = vmatprep.subr.mxu0 %v350
    %657 = vmatpush1.msra.mxu0 %v349
    %658 = vmatprep.subr.mxu0 %v352
    %659 = vmatpush1.msra.mxu0 %v351
    %660 = vmatprep.subr.mxu0 %v354
    %661 = vmatpush1.msra.mxu0 %v353
    %662 = vmatprep.subr.mxu0 %v356
    %663 = vmatpush1.msra.mxu0 %v355
    %664 = vmatprep.subr.mxu0 %v358
    %665 = vmatpush1.msra.mxu0 %v357
    %666 = vmatprep.subr.mxu0 %v360
    %667 = vmatpush1.msra.mxu0 %v359
    %668 = vmatprep.subr.mxu0 %v362
    %669 = vmatpush1.msra.mxu0 %v361
    %670 = vmatprep.subr.mxu0 %v364
    %671 = vmatpush1.msra.mxu0 %v363
    %672 = vmatprep.subr.mxu0 %v366
    %673 = vmatpush1.msra.mxu0 %v365
    %674 = vmatprep.mubr.f32.mxu0 %v102
    %675 = vmatmul.mubr.f32.gmra.mrb[0].mxu0 %v101
    %v676 = vpop.f32.mrb[0].mxu0
    %v677 = vadd.f32 %v600, %v676
    %v678 = vpop.f32.mrb[0].mxu0
    %v679 = vadd.f32 %v602, %v678
    %680 = vmatprep.mubr.f32.mxu0 %v110
    %681 = vmatmul.mubr.f32.gmra.mrb[0].mxu0 %v109
    %v682 = vpop.f32.mrb[0].mxu0
    %v683 = vadd.f32 %v606, %v682
    %v684 = vpop.f32.mrb[0].mxu0
    %v685 = vadd.f32 %v608, %v684
    %686 = vdwg.mxu0
    %v687 = vld [vmem:[#allocation7] sm:$0xff]
    %v688 = vld [vmem:[#allocation7 + $0x8] sm:$0xff]
    %v689 = vld [vmem:[#allocation7 + $0x10] sm:$0xff]
    %v690 = vld [vmem:[#allocation7 + $0x18] sm:$0xff]
    %v691 = vld [vmem:[#allocation8] sm:$0xff]
    %v692 = vld [vmem:[#allocation8 + $0x8] sm:$0xff]
    %v693 = vld [vmem:[#allocation8 + $0x10] sm:$0xff]
    %v694 = vld [vmem:[#allocation8 + $0x18] sm:$0xff]
    %vm695 = vcmask 261120
    %v697 = vsel %vm695, 0.0, 0
    %699 = vmatprep.subr.mxu0 0.0
    %700 = vmatpush1.msra.mxu0 %v687
    %701 = vmatprep.subr.mxu0 0.0
    %702 = vmatpush1.msra.mxu0 %v688
    %703 = vmatprep.subr.mxu0 0.0
    %704 = vmatpush1.msra.mxu0 %v689
    %705 = vmatprep.subr.mxu0 0.0
    %706 = vmatpush1.msra.mxu0 %v690
    %707 = vmatprep.subr.mxu0 0.0
    %708 = vmatpush1.msra.mxu0 0.0
    %709 = vmatprep.subr.mxu0 0.0
    %710 = vmatpush1.msra.mxu0 0.0
    %711 = vmatprep.subr.mxu0 0.0
    %712 = vmatpush1.msra.mxu0 0.0
    %713 = vmatprep.subr.mxu0 0.0
    %714 = vmatpush1.msra.mxu0 0.0
    %715 = vmatprep.subr.mxu0 0.0
    %716 = vmatpush1.msra.mxu0 0.0
    %717 = vmatprep.subr.mxu0 0.0
    %718 = vmatpush1.msra.mxu0 0.0
    %719 = vmatprep.subr.mxu0 0.0
    %720 = vmatpush1.msra.mxu0 0.0
    %721 = vmatprep.subr.mxu0 0.0
    %722 = vmatpush1.msra.mxu0 0.0
    %723 = vmatprep.subr.mxu0 0.0
    %724 = vmatpush1.msra.mxu0 0.0
    %725 = vmatprep.subr.mxu0 0.0
    %726 = vmatpush1.msra.mxu0 0.0
    %727 = vmatprep.subr.mxu0 0.0
    %728 = vmatpush1.msra.mxu0 0.0
    %729 = vmatprep.subr.mxu0 0.0
    %730 = vmatpush1.msra.mxu0 0.0
    %731 = vmatprep.subr.mxu0 0.0
    %732 = vmatpush1.msra.mxu0 0.0
    %733 = vmatprep.subr.mxu0 0.0
    %734 = vmatpush1.msra.mxu0 0.0
    %735 = vmatprep.subr.mxu0 0.0
    %736 = vmatpush1.msra.mxu0 0.0
    %737 = vmatprep.subr.mxu0 0.0
    %738 = vmatpush1.msra.mxu0 0.0
    %739 = vmatprep.subr.mxu0 0.0
    %740 = vmatpush1.msra.mxu0 0.0
    %741 = vmatprep.subr.mxu0 0.0
    %742 = vmatpush1.msra.mxu0 0.0
    %743 = vmatprep.subr.mxu0 0.0
    %744 = vmatpush1.msra.mxu0 0.0
    %745 = vmatprep.subr.mxu0 0.0
    %746 = vmatpush1.msra.mxu0 0.0
    %747 = vmatprep.subr.mxu0 0.0
    %748 = vmatpush1.msra.mxu0 0.0
    %749 = vmatprep.subr.mxu0 0.0
    %750 = vmatpush1.msra.mxu0 0.0
    %751 = vmatprep.subr.mxu0 0.0
    %752 = vmatpush1.msra.mxu0 0.0
    %753 = vmatprep.subr.mxu0 0.0
    %754 = vmatpush1.msra.mxu0 0.0
    %755 = vmatprep.subr.mxu0 0.0
    %756 = vmatpush1.msra.mxu0 0.0
    %757 = vmatprep.subr.mxu0 0.0
    %758 = vmatpush1.msra.mxu0 0.0
    %759 = vmatprep.subr.mxu0 0.0
    %760 = vmatpush1.msra.mxu0 0.0
    %761 = vmatprep.subr.mxu0 0.0
    %762 = vmatpush1.msra.mxu0 0.0
    %763 = vmatprep.mubr.f32.mxu0 0.0
    %764 = vmatmul.mubr.f32.gmra.mrb[0].mxu0 %v697
    %v765 = vpop.f32.mrb[0].mxu0
    %v766 = vadd.f32 0.0, %v765
    %v767 = vpop.f32.mrb[0].mxu0
    %768 = vdwg.mxu0
    %769 = vmatprep.subr.mxu0 0.0
    %770 = vmatpush1.msra.mxu0 %v691
    %771 = vmatprep.subr.mxu0 0.0
    %772 = vmatpush1.msra.mxu0 %v692
    %773 = vmatprep.subr.mxu0 0.0
    %774 = vmatpush1.msra.mxu0 %v693
    %775 = vmatprep.subr.mxu0 0.0
    %776 = vmatpush1.msra.mxu0 %v694
    %777 = vmatprep.subr.mxu0 0.0
    %778 = vmatpush1.msra.mxu0 0.0
    %779 = vmatprep.subr.mxu0 0.0
    %780 = vmatpush1.msra.mxu0 0.0
    %781 = vmatprep.subr.mxu0 0.0
    %782 = vmatpush1.msra.mxu0 0.0
    %783 = vmatprep.subr.mxu0 0.0
    %784 = vmatpush1.msra.mxu0 0.0
    %785 = vmatprep.subr.mxu0 0.0
    %786 = vmatpush1.msra.mxu0 0.0
    %787 = vmatprep.subr.mxu0 0.0
    %788 = vmatpush1.msra.mxu0 0.0
    %789 = vmatprep.subr.mxu0 0.0
    %790 = vmatpush1.msra.mxu0 0.0
    %791 = vmatprep.subr.mxu0 0.0
    %792 = vmatpush1.msra.mxu0 0.0
    %793 = vmatprep.subr.mxu0 0.0
    %794 = vmatpush1.msra.mxu0 0.0
    %795 = vmatprep.subr.mxu0 0.0
    %796 = vmatpush1.msra.mxu0 0.0
    %797 = vmatprep.subr.mxu0 0.0
    %798 = vmatpush1.msra.mxu0 0.0
    %799 = vmatprep.subr.mxu0 0.0
    %800 = vmatpush1.msra.mxu0 0.0
    %801 = vmatprep.subr.mxu0 0.0
    %802 = vmatpush1.msra.mxu0 0.0
    %803 = vmatprep.subr.mxu0 0.0
    %804 = vmatpush1.msra.mxu0 0.0
    %805 = vmatprep.subr.mxu0 0.0
    %806 = vmatpush1.msra.mxu0 0.0
    %807 = vmatprep.subr.mxu0 0.0
    %808 = vmatpush1.msra.mxu0 0.0
    %809 = vmatprep.subr.mxu0 0.0
    %810 = vmatpush1.msra.mxu0 0.0
    %811 = vmatprep.subr.mxu0 0.0
    %812 = vmatpush1.msra.mxu0 0.0
    %813 = vmatprep.subr.mxu0 0.0
    %814 = vmatpush1.msra.mxu0 0.0
    %815 = vmatprep.subr.mxu0 0.0
    %816 = vmatpush1.msra.mxu0 0.0
    %817 = vmatprep.subr.mxu0 0.0
    %818 = vmatpush1.msra.mxu0 0.0
    %819 = vmatprep.subr.mxu0 0.0
    %820 = vmatpush1.msra.mxu0 0.0
    %821 = vmatprep.subr.mxu0 0.0
    %822 = vmatpush1.msra.mxu0 0.0
    %823 = vmatprep.subr.mxu0 0.0
    %824 = vmatpush1.msra.mxu0 0.0
    %825 = vmatprep.subr.mxu0 0.0
    %826 = vmatpush1.msra.mxu0 0.0
    %827 = vmatprep.subr.mxu0 0.0
    %828 = vmatpush1.msra.mxu0 0.0
    %829 = vmatprep.subr.mxu0 0.0
    %830 = vmatpush1.msra.mxu0 0.0
    %831 = vmatprep.subr.mxu0 0.0
    %832 = vmatpush1.msra.mxu0 0.0
    %833 = vmatprep.mubr.f32.mxu0 0.0
    %834 = vmatmul.mubr.f32.gmra.mrb[0].mxu0 %v697
    %v835 = vpop.f32.mrb[0].mxu0
    %v836 = vadd.f32 0.0, %v835
    %v837 = vpop.f32.mrb[0].mxu0
    %838 = vdwg.mxu0
    %v839 = vadd.f32 %v677, %v766
    %v841 = vrot.slane %v836, 2
    %v843 = vadd.f32 %v685, %v841
    %v844 = vxor.u32 %v839, 2147483648
    %v845 = vmul.f32 %v844, 1.442695
    %v846 = vpow.pop %v845
    %v847 = vadd.f32 %v846, 1.0
    %v848 = vrcp.pop %v847
    %v849 = vmul.f32 1.0, %v848
    %v850 = vtanh.pop %v839
    %v851 = vmul.f32 %v849, 0.0
    %853 = vrot.lane.b32.xlu0 %v850, 64
    %v854 = vpop.permute.xlu0 %853
    %v856 = vmul.f32 %v849, %v854
    %858 = vrot.lane.b32.xlu0 %v856, 32
    %v859 = vpop.permute.xlu0 %858
    %v861 = vadd.f32 %v851, %v859
    %v862 = vtanh.pop %v861
    %864 = vrot.lane.b32.xlu0 %v862, 64
    %v865 = vpop.permute.xlu0 %864
    %v867 = vmul.f32 %v849, %v865
    %v868 = vxor.u32 %v843, 2147483648
    %v869 = vmul.f32 %v868, 1.442695
    %v870 = vpow.pop %v869
    %v871 = vadd.f32 %v870, 1.0
    %v872 = vrcp.pop %v871
    %v873 = vmul.f32 1.0, %v872
    %v874 = vtanh.pop %v843
    %v875 = vmul.f32 %v873, 0.0
    %877 = vrot.lane.b32.xlu0 %v874, 64
    %v878 = vpop.permute.xlu0 %877
    %v880 = vmul.f32 %v873, %v878
    %882 = vrot.lane.b32.xlu0 %v880, 32
    %v883 = vpop.permute.xlu0 %882
    %v885 = vadd.f32 %v875, %v883
    %v886 = vtanh.pop %v885
    %888 = vrot.lane.b32.xlu0 %v886, 64
    %v889 = vpop.permute.xlu0 %888
    %v891 = vmul.f32 %v873, %v889
    %893 = vrot.lane.b32.xlu0 %v867, 32
    %v894 = vpop.permute.xlu0 %893
    %v895 = vsel %vm695, %v894, 0
    %897 = vmatprep.subr.mxu0 0.0
    %898 = vmatpush1.msra.mxu0 %v687
    %899 = vmatprep.subr.mxu0 0.0
    %900 = vmatpush1.msra.mxu0 %v688
    %901 = vmatprep.subr.mxu0 0.0
    %902 = vmatpush1.msra.mxu0 %v689
    %903 = vmatprep.subr.mxu0 0.0
    %904 = vmatpush1.msra.mxu0 %v690
    %905 = vmatprep.subr.mxu0 0.0
    %906 = vmatpush1.msra.mxu0 0.0
    %907 = vmatprep.subr.mxu0 0.0
    %908 = vmatpush1.msra.mxu0 0.0
    %909 = vmatprep.subr.mxu0 0.0
    %910 = vmatpush1.msra.mxu0 0.0
    %911 = vmatprep.subr.mxu0 0.0
    %912 = vmatpush1.msra.mxu0 0.0
    %913 = vmatprep.subr.mxu0 0.0
    %914 = vmatpush1.msra.mxu0 0.0
    %915 = vmatprep.subr.mxu0 0.0
    %916 = vmatpush1.msra.mxu0 0.0
    %917 = vmatprep.subr.mxu0 0.0
    %918 = vmatpush1.msra.mxu0 0.0
    %919 = vmatprep.subr.mxu0 0.0
    %920 = vmatpush1.msra.mxu0 0.0
    %921 = vmatprep.subr.mxu0 0.0
    %922 = vmatpush1.msra.mxu0 0.0
    %923 = vmatprep.subr.mxu0 0.0
    %924 = vmatpush1.msra.mxu0 0.0
    %925 = vmatprep.subr.mxu0 0.0
    %926 = vmatpush1.msra.mxu0 0.0
    %927 = vmatprep.subr.mxu0 0.0
    %928 = vmatpush1.msra.mxu0 0.0
    %929 = vmatprep.subr.mxu0 0.0
    %930 = vmatpush1.msra.mxu0 0.0
    %931 = vmatprep.subr.mxu0 0.0
    %932 = vmatpush1.msra.mxu0 0.0
    %933 = vmatprep.subr.mxu0 0.0
    %934 = vmatpush1.msra.mxu0 0.0
    %935 = vmatprep.subr.mxu0 0.0
    %936 = vmatpush1.msra.mxu0 0.0
    %937 = vmatprep.subr.mxu0 0.0
    %938 = vmatpush1.msra.mxu0 0.0
    %939 = vmatprep.subr.mxu0 0.0
    %940 = vmatpush1.msra.mxu0 0.0
    %941 = vmatprep.subr.mxu0 0.0
    %942 = vmatpush1.msra.mxu0 0.0
    %943 = vmatprep.subr.mxu0 0.0
    %944 = vmatpush1.msra.mxu0 0.0
    %945 = vmatprep.subr.mxu0 0.0
    %946 = vmatpush1.msra.mxu0 0.0
    %947 = vmatprep.subr.mxu0 0.0
    %948 = vmatpush1.msra.mxu0 0.0
    %949 = vmatprep.subr.mxu0 0.0
    %950 = vmatpush1.msra.mxu0 0.0
    %951 = vmatprep.subr.mxu0 0.0
    %952 = vmatpush1.msra.mxu0 0.0
    %953 = vmatprep.subr.mxu0 0.0
    %954 = vmatpush1.msra.mxu0 0.0
    %955 = vmatprep.subr.mxu0 0.0
    %956 = vmatpush1.msra.mxu0 0.0
    %957 = vmatprep.subr.mxu0 0.0
    %958 = vmatpush1.msra.mxu0 0.0
    %959 = vmatprep.subr.mxu0 0.0
    %960 = vmatpush1.msra.mxu0 0.0
    %961 = vmatprep.mubr.f32.mxu0 0.0
    %962 = vmatmul.mubr.f32.gmra.mrb[0].mxu0 %v895
    %v963 = vpop.f32.mrb[0].mxu0
    %v964 = vadd.f32 0.0, %v963
    %v965 = vpop.f32.mrb[0].mxu0
    %966 = vdwg.mxu0
    %v968 = vrot.slane %v891, 6
    %969 = vrot.lane.b32.xlu0 %v968, 32
    %v970 = vpop.permute.xlu0 %969
    %v971 = vsel %vm695, %v970, 0
    %973 = vmatprep.subr.mxu0 0.0
    %974 = vmatpush1.msra.mxu0 %v691
    %975 = vmatprep.subr.mxu0 0.0
    %976 = vmatpush1.msra.mxu0 %v692
    %977 = vmatprep.subr.mxu0 0.0
    %978 = vmatpush1.msra.mxu0 %v693
    %979 = vmatprep.subr.mxu0 0.0
    %980 = vmatpush1.msra.mxu0 %v694
    %981 = vmatprep.subr.mxu0 0.0
    %982 = vmatpush1.msra.mxu0 0.0
    %983 = vmatprep.subr.mxu0 0.0
    %984 = vmatpush1.msra.mxu0 0.0
    %985 = vmatprep.subr.mxu0 0.0
    %986 = vmatpush1.msra.mxu0 0.0
    %987 = vmatprep.subr.mxu0 0.0
    %988 = vmatpush1.msra.mxu0 0.0
    %989 = vmatprep.subr.mxu0 0.0
    %990 = vmatpush1.msra.mxu0 0.0
    %991 = vmatprep.subr.mxu0 0.0
    %992 = vmatpush1.msra.mxu0 0.0
    %993 = vmatprep.subr.mxu0 0.0
    %994 = vmatpush1.msra.mxu0 0.0
    %995 = vmatprep.subr.mxu0 0.0
    %996 = vmatpush1.msra.mxu0 0.0
    %997 = vmatprep.subr.mxu0 0.0
    %998 = vmatpush1.msra.mxu0 0.0
    %999 = vmatprep.subr.mxu0 0.0
    %1000 = vmatpush1.msra.mxu0 0.0
    %1001 = vmatprep.subr.mxu0 0.0
    %1002 = vmatpush1.msra.mxu0 0.0
    %1003 = vmatprep.subr.mxu0 0.0
    %1004 = vmatpush1.msra.mxu0 0.0
    %1005 = vmatprep.subr.mxu0 0.0
    %1006 = vmatpush1.msra.mxu0 0.0
    %1007 = vmatprep.subr.mxu0 0.0
    %1008 = vmatpush1.msra.mxu0 0.0
    %1009 = vmatprep.subr.mxu0 0.0
    %1010 = vmatpush1.msra.mxu0 0.0
    %1011 = vmatprep.subr.mxu0 0.0
    %1012 = vmatpush1.msra.mxu0 0.0
    %1013 = vmatprep.subr.mxu0 0.0
    %1014 = vmatpush1.msra.mxu0 0.0
    %1015 = vmatprep.subr.mxu0 0.0
    %1016 = vmatpush1.msra.mxu0 0.0
    %1017 = vmatprep.subr.mxu0 0.0
    %1018 = vmatpush1.msra.mxu0 0.0
    %1019 = vmatprep.subr.mxu0 0.0
    %1020 = vmatpush1.msra.mxu0 0.0
    %1021 = vmatprep.subr.mxu0 0.0
    %1022 = vmatpush1.msra.mxu0 0.0
    %1023 = vmatprep.subr.mxu0 0.0
    %1024 = vmatpush1.msra.mxu0 0.0
    %1025 = vmatprep.subr.mxu0 0.0
    %1026 = vmatpush1.msra.mxu0 0.0
    %1027 = vmatprep.subr.mxu0 0.0
    %1028 = vmatpush1.msra.mxu0 0.0
    %1029 = vmatprep.subr.mxu0 0.0
    %1030 = vmatpush1.msra.mxu0 0.0
    %1031 = vmatprep.subr.mxu0 0.0
    %1032 = vmatpush1.msra.mxu0 0.0
    %1033 = vmatprep.subr.mxu0 0.0
    %1034 = vmatpush1.msra.mxu0 0.0
    %1035 = vmatprep.subr.mxu0 0.0
    %1036 = vmatpush1.msra.mxu0 0.0
    %1037 = vmatprep.mubr.f32.mxu0 0.0
    %1038 = vmatmul.mubr.f32.gmra.mrb[0].mxu0 %v971
    %v1039 = vpop.f32.mrb[0].mxu0
    %v1040 = vadd.f32 0.0, %v1039
    %v1041 = vpop.f32.mrb[0].mxu0
    %1042 = vdwg.mxu0
    %v1044 = vrot.slane %v964, 6
    %v1046 = vadd.f32 %v677, %v1044
    %v1048 = vrot.slane %v1040, 4
    %v1050 = vadd.f32 %v685, %v1048
    %v1051 = vxor.u32 %v1046, 2147483648
    %v1052 = vmul.f32 %v1051, 1.442695
    %v1053 = vpow.pop %v1052
    %v1054 = vadd.f32 %v1053, 1.0
    %v1055 = vrcp.pop %v1054
    %v1056 = vmul.f32 1.0, %v1055
    %v1057 = vtanh.pop %v1046
    %v1059 = vrot.slane %v861, 6
    %v1061 = vmul.f32 %v1056, %v1059
    %1063 = vrot.lane.b32.xlu0 %v1057, 64
    %v1064 = vpop.permute.xlu0 %1063
    %v1066 = vmul.f32 %v1056, %v1064
    %1068 = vrot.lane.b32.xlu0 %v1066, 32
    %v1069 = vpop.permute.xlu0 %1068
    %v1071 = vadd.f32 %v1061, %v1069
    %v1072 = vtanh.pop %v1071
    %1074 = vrot.lane.b32.xlu0 %v1072, 64
    %v1075 = vpop.permute.xlu0 %1074
    %v1077 = vmul.f32 %v1056, %v1075
    %v1078 = vxor.u32 %v1050, 2147483648
    %v1079 = vmul.f32 %v1078, 1.442695
    %v1080 = vpow.pop %v1079
    %v1081 = vadd.f32 %v1080, 1.0
    %v1082 = vrcp.pop %v1081
    %v1083 = vmul.f32 1.0, %v1082
    %v1084 = vtanh.pop %v1050
    %v1086 = vrot.slane %v885, 2
    %v1088 = vmul.f32 %v1083, %v1086
    %1090 = vrot.lane.b32.xlu0 %v1084, 64
    %v1091 = vpop.permute.xlu0 %1090
    %v1093 = vmul.f32 %v1083, %v1091
    %1095 = vrot.lane.b32.xlu0 %v1093, 32
    %v1096 = vpop.permute.xlu0 %1095
    %v1098 = vadd.f32 %v1088, %v1096
    %v1099 = vtanh.pop %v1098
    %1101 = vrot.lane.b32.xlu0 %v1099, 64
    %v1102 = vpop.permute.xlu0 %1101
    %v1104 = vmul.f32 %v1083, %v1102
    %v1106 = vrot.slane %v1077, 2
    %1107 = vrot.lane.b32.xlu0 %v1106, 32
    %v1108 = vpop.permute.xlu0 %1107
    %v1109 = vsel %vm695, %v1108, 0
    %1111 = vmatprep.subr.mxu0 0.0
    %1112 = vmatpush1.msra.mxu0 %v687
    %1113 = vmatprep.subr.mxu0 0.0
    %1114 = vmatpush1.msra.mxu0 %v688
    %1115 = vmatprep.subr.mxu0 0.0
    %1116 = vmatpush1.msra.mxu0 %v689
    %1117 = vmatprep.subr.mxu0 0.0
    %1118 = vmatpush1.msra.mxu0 %v690
    %1119 = vmatprep.subr.mxu0 0.0
    %1120 = vmatpush1.msra.mxu0 0.0
    %1121 = vmatprep.subr.mxu0 0.0
    %1122 = vmatpush1.msra.mxu0 0.0
    %1123 = vmatprep.subr.mxu0 0.0
    %1124 = vmatpush1.msra.mxu0 0.0
    %1125 = vmatprep.subr.mxu0 0.0
    %1126 = vmatpush1.msra.mxu0 0.0
    %1127 = vmatprep.subr.mxu0 0.0
    %1128 = vmatpush1.msra.mxu0 0.0
    %1129 = vmatprep.subr.mxu0 0.0
    %1130 = vmatpush1.msra.mxu0 0.0
    %1131 = vmatprep.subr.mxu0 0.0
    %1132 = vmatpush1.msra.mxu0 0.0
    %1133 = vmatprep.subr.mxu0 0.0
    %1134 = vmatpush1.msra.mxu0 0.0
    %1135 = vmatprep.subr.mxu0 0.0
    %1136 = vmatpush1.msra.mxu0 0.0
    %1137 = vmatprep.subr.mxu0 0.0
    %1138 = vmatpush1.msra.mxu0 0.0
    %1139 = vmatprep.subr.mxu0 0.0
    %1140 = vmatpush1.msra.mxu0 0.0
    %1141 = vmatprep.subr.mxu0 0.0
    %1142 = vmatpush1.msra.mxu0 0.0
    %1143 = vmatprep.subr.mxu0 0.0
    %1144 = vmatpush1.msra.mxu0 0.0
    %1145 = vmatprep.subr.mxu0 0.0
    %1146 = vmatpush1.msra.mxu0 0.0
    %1147 = vmatprep.subr.mxu0 0.0
    %1148 = vmatpush1.msra.mxu0 0.0
    %1149 = vmatprep.subr.mxu0 0.0
    %1150 = vmatpush1.msra.mxu0 0.0
    %1151 = vmatprep.subr.mxu0 0.0
    %1152 = vmatpush1.msra.mxu0 0.0
    %1153 = vmatprep.subr.mxu0 0.0
    %1154 = vmatpush1.msra.mxu0 0.0
    %1155 = vmatprep.subr.mxu0 0.0
    %1156 = vmatpush1.msra.mxu0 0.0
    %1157 = vmatprep.subr.mxu0 0.0
    %1158 = vmatpush1.msra.mxu0 0.0
    %1159 = vmatprep.subr.mxu0 0.0
    %1160 = vmatpush1.msra.mxu0 0.0
    %1161 = vmatprep.subr.mxu0 0.0
    %1162 = vmatpush1.msra.mxu0 0.0
    %1163 = vmatprep.subr.mxu0 0.0
    %1164 = vmatpush1.msra.mxu0 0.0
    %1165 = vmatprep.subr.mxu0 0.0
    %1166 = vmatpush1.msra.mxu0 0.0
    %1167 = vmatprep.subr.mxu0 0.0
    %1168 = vmatpush1.msra.mxu0 0.0
    %1169 = vmatprep.subr.mxu0 0.0
    %1170 = vmatpush1.msra.mxu0 0.0
    %1171 = vmatprep.subr.mxu0 0.0
    %1172 = vmatpush1.msra.mxu0 0.0
    %1173 = vmatprep.subr.mxu0 0.0
    %1174 = vmatpush1.msra.mxu0 0.0
    %1175 = vmatprep.mubr.f32.mxu0 0.0
    %1176 = vmatmul.mubr.f32.gmra.mrb[0].mxu0 %v1109
    %v1177 = vpop.f32.mrb[0].mxu0
    %v1178 = vadd.f32 0.0, %v1177
    %v1179 = vpop.f32.mrb[0].mxu0
    %1180 = vdwg.mxu0
    %v1182 = vrot.slane %v1104, 4
    %1183 = vrot.lane.b32.xlu0 %v1182, 32
    %v1184 = vpop.permute.xlu0 %1183
    %v1185 = vsel %vm695, %v1184, 0
    %1187 = vmatprep.subr.mxu0 0.0
    %1188 = vmatpush1.msra.mxu0 %v691
    %1189 = vmatprep.subr.mxu0 0.0
    %1190 = vmatpush1.msra.mxu0 %v692
    %1191 = vmatprep.subr.mxu0 0.0
    %1192 = vmatpush1.msra.mxu0 %v693
    %1193 = vmatprep.subr.mxu0 0.0
    %1194 = vmatpush1.msra.mxu0 %v694
    %1195 = vmatprep.subr.mxu0 0.0
    %1196 = vmatpush1.msra.mxu0 0.0
    %1197 = vmatprep.subr.mxu0 0.0
    %1198 = vmatpush1.msra.mxu0 0.0
    %1199 = vmatprep.subr.mxu0 0.0
    %1200 = vmatpush1.msra.mxu0 0.0
    %1201 = vmatprep.subr.mxu0 0.0
    %1202 = vmatpush1.msra.mxu0 0.0
    %1203 = vmatprep.subr.mxu0 0.0
    %1204 = vmatpush1.msra.mxu0 0.0
    %1205 = vmatprep.subr.mxu0 0.0
    %1206 = vmatpush1.msra.mxu0 0.0
    %1207 = vmatprep.subr.mxu0 0.0
    %1208 = vmatpush1.msra.mxu0 0.0
    %1209 = vmatprep.subr.mxu0 0.0
    %1210 = vmatpush1.msra.mxu0 0.0
    %1211 = vmatprep.subr.mxu0 0.0
    %1212 = vmatpush1.msra.mxu0 0.0
    %1213 = vmatprep.subr.mxu0 0.0
    %1214 = vmatpush1.msra.mxu0 0.0
    %1215 = vmatprep.subr.mxu0 0.0
    %1216 = vmatpush1.msra.mxu0 0.0
    %1217 = vmatprep.subr.mxu0 0.0
    %1218 = vmatpush1.msra.mxu0 0.0
    %1219 = vmatprep.subr.mxu0 0.0
    %1220 = vmatpush1.msra.mxu0 0.0
    %1221 = vmatprep.subr.mxu0 0.0
    %1222 = vmatpush1.msra.mxu0 0.0
    %1223 = vmatprep.subr.mxu0 0.0
    %1224 = vmatpush1.msra.mxu0 0.0
    %1225 = vmatprep.subr.mxu0 0.0
    %1226 = vmatpush1.msra.mxu0 0.0
    %1227 = vmatprep.subr.mxu0 0.0
    %1228 = vmatpush1.msra.mxu0 0.0
    %1229 = vmatprep.subr.mxu0 0.0
    %1230 = vmatpush1.msra.mxu0 0.0
    %1231 = vmatprep.subr.mxu0 0.0
    %1232 = vmatpush1.msra.mxu0 0.0
    %1233 = vmatprep.subr.mxu0 0.0
    %1234 = vmatpush1.msra.mxu0 0.0
    %1235 = vmatprep.subr.mxu0 0.0
    %1236 = vmatpush1.msra.mxu0 0.0
    %1237 = vmatprep.subr.mxu0 0.0
    %1238 = vmatpush1.msra.mxu0 0.0
    %1239 = vmatprep.subr.mxu0 0.0
    %1240 = vmatpush1.msra.mxu0 0.0
    %1241 = vmatprep.subr.mxu0 0.0
    %1242 = vmatpush1.msra.mxu0 0.0
    %1243 = vmatprep.subr.mxu0 0.0
    %1244 = vmatpush1.msra.mxu0 0.0
    %1245 = vmatprep.subr.mxu0 0.0
    %1246 = vmatpush1.msra.mxu0 0.0
    %1247 = vmatprep.subr.mxu0 0.0
    %1248 = vmatpush1.msra.mxu0 0.0
    %1249 = vmatprep.subr.mxu0 0.0
    %1250 = vmatpush1.msra.mxu0 0.0
    %1251 = vmatprep.mubr.f32.mxu0 0.0
    %1252 = vmatmul.mubr.f32.gmra.mrb[0].mxu0 %v1185
    %v1253 = vpop.f32.mrb[0].mxu0
    %v1254 = vadd.f32 0.0, %v1253
    %v1255 = vpop.f32.mrb[0].mxu0
    %1256 = vdwg.mxu0
    %v1258 = vrot.slane %v1178, 4
    %v1260 = vadd.f32 %v677, %v1258
    %v1262 = vrot.slane %v1254, 6
    %v1264 = vadd.f32 %v685, %v1262
    %v1265 = vxor.u32 %v1260, 2147483648
    %v1266 = vmul.f32 %v1265, 1.442695
    %v1267 = vpow.pop %v1266
    %v1268 = vadd.f32 %v1267, 1.0
    %v1269 = vrcp.pop %v1268
    %v1270 = vmul.f32 1.0, %v1269
    %v1271 = vtanh.pop %v1260
    %v1273 = vrot.slane %v1071, 6
    %v1275 = vmul.f32 %v1270, %v1273
    %1277 = vrot.lane.b32.xlu0 %v1271, 64
    %v1278 = vpop.permute.xlu0 %1277
    %v1280 = vmul.f32 %v1270, %v1278
    %1282 = vrot.lane.b32.xlu0 %v1280, 32
    %v1283 = vpop.permute.xlu0 %1282
    %v1285 = vadd.f32 %v1275, %v1283
    %v1286 = vtanh.pop %v1285
    %1288 = vrot.lane.b32.xlu0 %v1286, 64
    %v1289 = vpop.permute.xlu0 %1288
    %v1291 = vmul.f32 %v1270, %v1289
    %v1292 = vxor.u32 %v1264, 2147483648
    %v1293 = vmul.f32 %v1292, 1.442695
    %v1294 = vpow.pop %v1293
    %v1295 = vadd.f32 %v1294, 1.0
    %v1296 = vrcp.pop %v1295
    %v1297 = vmul.f32 1.0, %v1296
    %v1298 = vtanh.pop %v1264
    %v1300 = vrot.slane %v1098, 2
    %v1302 = vmul.f32 %v1297, %v1300
    %1304 = vrot.lane.b32.xlu0 %v1298, 64
    %v1305 = vpop.permute.xlu0 %1304
    %v1307 = vmul.f32 %v1297, %v1305
    %1309 = vrot.lane.b32.xlu0 %v1307, 32
    %v1310 = vpop.permute.xlu0 %1309
    %v1312 = vadd.f32 %v1302, %v1310
    %v1313 = vtanh.pop %v1312
    %1315 = vrot.lane.b32.xlu0 %v1313, 64
    %v1316 = vpop.permute.xlu0 %1315
    %v1318 = vmul.f32 %v1297, %v1316
    %v1320 = vrot.slane %v1291, 4
    %1321 = vrot.lane.b32.xlu0 %v1320, 32
    %v1322 = vpop.permute.xlu0 %1321
    %v1323 = vsel %vm695, %v1322, 0
    %1325 = vmatprep.subr.mxu0 0.0
    %1326 = vmatpush1.msra.mxu0 %v687
    %1327 = vmatprep.subr.mxu0 0.0
    %1328 = vmatpush1.msra.mxu0 %v688
    %1329 = vmatprep.subr.mxu0 0.0
    %1330 = vmatpush1.msra.mxu0 %v689
    %1331 = vmatprep.subr.mxu0 0.0
    %1332 = vmatpush1.msra.mxu0 %v690
    %1333 = vmatprep.subr.mxu0 0.0
    %1334 = vmatpush1.msra.mxu0 0.0
    %1335 = vmatprep.subr.mxu0 0.0
    %1336 = vmatpush1.msra.mxu0 0.0
    %1337 = vmatprep.subr.mxu0 0.0
    %1338 = vmatpush1.msra.mxu0 0.0
    %1339 = vmatprep.subr.mxu0 0.0
    %1340 = vmatpush1.msra.mxu0 0.0
    %1341 = vmatprep.subr.mxu0 0.0
    %1342 = vmatpush1.msra.mxu0 0.0
    %1343 = vmatprep.subr.mxu0 0.0
    %1344 = vmatpush1.msra.mxu0 0.0
    %1345 = vmatprep.subr.mxu0 0.0
    %1346 = vmatpush1.msra.mxu0 0.0
    %1347 = vmatprep.subr.mxu0 0.0
    %1348 = vmatpush1.msra.mxu0 0.0
    %1349 = vmatprep.subr.mxu0 0.0
    %1350 = vmatpush1.msra.mxu0 0.0
    %1351 = vmatprep.subr.mxu0 0.0
    %1352 = vmatpush1.msra.mxu0 0.0
    %1353 = vmatprep.subr.mxu0 0.0
    %1354 = vmatpush1.msra.mxu0 0.0
    %1355 = vmatprep.subr.mxu0 0.0
    %1356 = vmatpush1.msra.mxu0 0.0
    %1357 = vmatprep.subr.mxu0 0.0
    %1358 = vmatpush1.msra.mxu0 0.0
    %1359 = vmatprep.subr.mxu0 0.0
    %1360 = vmatpush1.msra.mxu0 0.0
    %1361 = vmatprep.subr.mxu0 0.0
    %1362 = vmatpush1.msra.mxu0 0.0
    %1363 = vmatprep.subr.mxu0 0.0
    %1364 = vmatpush1.msra.mxu0 0.0
    %1365 = vmatprep.subr.mxu0 0.0
    %1366 = vmatpush1.msra.mxu0 0.0
    %1367 = vmatprep.subr.mxu0 0.0
    %1368 = vmatpush1.msra.mxu0 0.0
    %1369 = vmatprep.subr.mxu0 0.0
    %1370 = vmatpush1.msra.mxu0 0.0
    %1371 = vmatprep.subr.mxu0 0.0
    %1372 = vmatpush1.msra.mxu0 0.0
    %1373 = vmatprep.subr.mxu0 0.0
    %1374 = vmatpush1.msra.mxu0 0.0
    %1375 = vmatprep.subr.mxu0 0.0
    %1376 = vmatpush1.msra.mxu0 0.0
    %1377 = vmatprep.subr.mxu0 0.0
    %1378 = vmatpush1.msra.mxu0 0.0
    %1379 = vmatprep.subr.mxu0 0.0
    %1380 = vmatpush1.msra.mxu0 0.0
    %1381 = vmatprep.subr.mxu0 0.0
    %1382 = vmatpush1.msra.mxu0 0.0
    %1383 = vmatprep.subr.mxu0 0.0
    %1384 = vmatpush1.msra.mxu0 0.0
    %1385 = vmatprep.subr.mxu0 0.0
    %1386 = vmatpush1.msra.mxu0 0.0
    %1387 = vmatprep.subr.mxu0 0.0
    %1388 = vmatpush1.msra.mxu0 0.0
    %1389 = vmatprep.mubr.f32.mxu0 0.0
    %1390 = vmatmul.mubr.f32.gmra.mrb[0].mxu0 %v1323
    %v1391 = vpop.f32.mrb[0].mxu0
    %v1392 = vadd.f32 0.0, %v1391
    %v1393 = vpop.f32.mrb[0].mxu0
    %1394 = vdwg.mxu0
    %v1396 = vrot.slane %v1318, 2
    %1397 = vrot.lane.b32.xlu0 %v1396, 32
    %v1398 = vpop.permute.xlu0 %1397
    %v1399 = vsel %vm695, %v1398, 0
    %1401 = vmatprep.subr.mxu0 0.0
    %1402 = vmatpush1.msra.mxu0 %v691
    %1403 = vmatprep.subr.mxu0 0.0
    %1404 = vmatpush1.msra.mxu0 %v692
    %1405 = vmatprep.subr.mxu0 0.0
    %1406 = vmatpush1.msra.mxu0 %v693
    %1407 = vmatprep.subr.mxu0 0.0
    %1408 = vmatpush1.msra.mxu0 %v694
    %1409 = vmatprep.subr.mxu0 0.0
    %1410 = vmatpush1.msra.mxu0 0.0
    %1411 = vmatprep.subr.mxu0 0.0
    %1412 = vmatpush1.msra.mxu0 0.0
    %1413 = vmatprep.subr.mxu0 0.0
    %1414 = vmatpush1.msra.mxu0 0.0
    %1415 = vmatprep.subr.mxu0 0.0
    %1416 = vmatpush1.msra.mxu0 0.0
    %1417 = vmatprep.subr.mxu0 0.0
    %1418 = vmatpush1.msra.mxu0 0.0
    %1419 = vmatprep.subr.mxu0 0.0
    %1420 = vmatpush1.msra.mxu0 0.0
    %1421 = vmatprep.subr.mxu0 0.0
    %1422 = vmatpush1.msra.mxu0 0.0
    %1423 = vmatprep.subr.mxu0 0.0
    %1424 = vmatpush1.msra.mxu0 0.0
    %1425 = vmatprep.subr.mxu0 0.0
    %1426 = vmatpush1.msra.mxu0 0.0
    %1427 = vmatprep.subr.mxu0 0.0
    %1428 = vmatpush1.msra.mxu0 0.0
    %1429 = vmatprep.subr.mxu0 0.0
    %1430 = vmatpush1.msra.mxu0 0.0
    %1431 = vmatprep.subr.mxu0 0.0
    %1432 = vmatpush1.msra.mxu0 0.0
    %1433 = vmatprep.subr.mxu0 0.0
    %1434 = vmatpush1.msra.mxu0 0.0
    %1435 = vmatprep.subr.mxu0 0.0
    %1436 = vmatpush1.msra.mxu0 0.0
    %1437 = vmatprep.subr.mxu0 0.0
    %1438 = vmatpush1.msra.mxu0 0.0
    %1439 = vmatprep.subr.mxu0 0.0
    %1440 = vmatpush1.msra.mxu0 0.0
    %1441 = vmatprep.subr.mxu0 0.0
    %1442 = vmatpush1.msra.mxu0 0.0
    %1443 = vmatprep.subr.mxu0 0.0
    %1444 = vmatpush1.msra.mxu0 0.0
    %1445 = vmatprep.subr.mxu0 0.0
    %1446 = vmatpush1.msra.mxu0 0.0
    %1447 = vmatprep.subr.mxu0 0.0
    %1448 = vmatpush1.msra.mxu0 0.0
    %1449 = vmatprep.subr.mxu0 0.0
    %1450 = vmatpush1.msra.mxu0 0.0
    %1451 = vmatprep.subr.mxu0 0.0
    %1452 = vmatpush1.msra.mxu0 0.0
    %1453 = vmatprep.subr.mxu0 0.0
    %1454 = vmatpush1.msra.mxu0 0.0
    %1455 = vmatprep.subr.mxu0 0.0
    %1456 = vmatpush1.msra.mxu0 0.0
    %1457 = vmatprep.subr.mxu0 0.0
    %1458 = vmatpush1.msra.mxu0 0.0
    %1459 = vmatprep.subr.mxu0 0.0
    %1460 = vmatpush1.msra.mxu0 0.0
    %1461 = vmatprep.subr.mxu0 0.0
    %1462 = vmatpush1.msra.mxu0 0.0
    %1463 = vmatprep.subr.mxu0 0.0
    %1464 = vmatpush1.msra.mxu0 0.0
    %1465 = vmatprep.mubr.f32.mxu0 0.0
    %1466 = vmatmul.mubr.f32.gmra.mrb[0].mxu0 %v1399
    %v1467 = vpop.f32.mrb[0].mxu0
    %v1468 = vadd.f32 0.0, %v1467
    %v1469 = vpop.f32.mrb[0].mxu0
    %1470 = vdwg.mxu0
    %v1472 = vrot.slane %v1392, 2
    %v1474 = vadd.f32 %v677, %v1472
    %v1475 = vadd.f32 %v685, %v1468
    %v1476 = vxor.u32 %v1474, 2147483648
    %v1477 = vmul.f32 %v1476, 1.442695
    %v1478 = vpow.pop %v1477
    %v1479 = vadd.f32 %v1478, 1.0
    %v1480 = vrcp.pop %v1479
    %v1481 = vmul.f32 1.0, %v1480
    %v1482 = vtanh.pop %v1474
    %v1484 = vrot.slane %v1285, 6
    %v1486 = vmul.f32 %v1481, %v1484
    %1488 = vrot.lane.b32.xlu0 %v1482, 64
    %v1489 = vpop.permute.xlu0 %1488
    %v1491 = vmul.f32 %v1481, %v1489
    %1493 = vrot.lane.b32.xlu0 %v1491, 32
    %v1494 = vpop.permute.xlu0 %1493
    %v1496 = vadd.f32 %v1486, %v1494
    %v1497 = vtanh.pop %v1496
    %1499 = vrot.lane.b32.xlu0 %v1497, 64
    %v1500 = vpop.permute.xlu0 %1499
    %v1502 = vmul.f32 %v1481, %v1500
    %v1503 = vxor.u32 %v1475, 2147483648
    %v1504 = vmul.f32 %v1503, 1.442695
    %v1505 = vpow.pop %v1504
    %v1506 = vadd.f32 %v1505, 1.0
    %v1507 = vrcp.pop %v1506
    %v1508 = vmul.f32 1.0, %v1507
    %v1509 = vtanh.pop %v1475
    %v1511 = vrot.slane %v1312, 2
    %v1513 = vmul.f32 %v1508, %v1511
    %1515 = vrot.lane.b32.xlu0 %v1509, 64
    %v1516 = vpop.permute.xlu0 %1515
    %v1518 = vmul.f32 %v1508, %v1516
    %1520 = vrot.lane.b32.xlu0 %v1518, 32
    %v1521 = vpop.permute.xlu0 %1520
    %v1523 = vadd.f32 %v1513, %v1521
    %v1524 = vtanh.pop %v1523
    %1526 = vrot.lane.b32.xlu0 %v1524, 64
    %v1527 = vpop.permute.xlu0 %1526
    %v1529 = vmul.f32 %v1508, %v1527
    %v1531 = vrot.slane %v1502, 6
    %1532 = vrot.lane.b32.xlu0 %v1531, 32
    %v1533 = vpop.permute.xlu0 %1532
    %v1534 = vsel %vm695, %v1533, 0
    %1536 = vmatprep.subr.mxu0 0.0
    %1537 = vmatpush1.msra.mxu0 %v687
    %1538 = vmatprep.subr.mxu0 0.0
    %1539 = vmatpush1.msra.mxu0 %v688
    %1540 = vmatprep.subr.mxu0 0.0
    %1541 = vmatpush1.msra.mxu0 %v689
    %1542 = vmatprep.subr.mxu0 0.0
    %1543 = vmatpush1.msra.mxu0 %v690
    %1544 = vmatprep.subr.mxu0 0.0
    %1545 = vmatpush1.msra.mxu0 0.0
    %1546 = vmatprep.subr.mxu0 0.0
    %1547 = vmatpush1.msra.mxu0 0.0
    %1548 = vmatprep.subr.mxu0 0.0
    %1549 = vmatpush1.msra.mxu0 0.0
    %1550 = vmatprep.subr.mxu0 0.0
    %1551 = vmatpush1.msra.mxu0 0.0
    %1552 = vmatprep.subr.mxu0 0.0
    %1553 = vmatpush1.msra.mxu0 0.0
    %1554 = vmatprep.subr.mxu0 0.0
    %1555 = vmatpush1.msra.mxu0 0.0
    %1556 = vmatprep.subr.mxu0 0.0
    %1557 = vmatpush1.msra.mxu0 0.0
    %1558 = vmatprep.subr.mxu0 0.0
    %1559 = vmatpush1.msra.mxu0 0.0
    %1560 = vmatprep.subr.mxu0 0.0
    %1561 = vmatpush1.msra.mxu0 0.0
    %1562 = vmatprep.subr.mxu0 0.0
    %1563 = vmatpush1.msra.mxu0 0.0
    %1564 = vmatprep.subr.mxu0 0.0
    %1565 = vmatpush1.msra.mxu0 0.0
    %1566 = vmatprep.subr.mxu0 0.0
    %1567 = vmatpush1.msra.mxu0 0.0
    %1568 = vmatprep.subr.mxu0 0.0
    %1569 = vmatpush1.msra.mxu0 0.0
    %1570 = vmatprep.subr.mxu0 0.0
    %1571 = vmatpush1.msra.mxu0 0.0
    %1572 = vmatprep.subr.mxu0 0.0
    %1573 = vmatpush1.msra.mxu0 0.0
    %1574 = vmatprep.subr.mxu0 0.0
    %1575 = vmatpush1.msra.mxu0 0.0
    %1576 = vmatprep.subr.mxu0 0.0
    %1577 = vmatpush1.msra.mxu0 0.0
    %1578 = vmatprep.subr.mxu0 0.0
    %1579 = vmatpush1.msra.mxu0 0.0
    %1580 = vmatprep.subr.mxu0 0.0
    %1581 = vmatpush1.msra.mxu0 0.0
    %1582 = vmatprep.subr.mxu0 0.0
    %1583 = vmatpush1.msra.mxu0 0.0
    %1584 = vmatprep.subr.mxu0 0.0
    %1585 = vmatpush1.msra.mxu0 0.0
    %1586 = vmatprep.subr.mxu0 0.0
    %1587 = vmatpush1.msra.mxu0 0.0
    %1588 = vmatprep.subr.mxu0 0.0
    %1589 = vmatpush1.msra.mxu0 0.0
    %1590 = vmatprep.subr.mxu0 0.0
    %1591 = vmatpush1.msra.mxu0 0.0
    %1592 = vmatprep.subr.mxu0 0.0
    %1593 = vmatpush1.msra.mxu0 0.0
    %1594 = vmatprep.subr.mxu0 0.0
    %1595 = vmatpush1.msra.mxu0 0.0
    %1596 = vmatprep.subr.mxu0 0.0
    %1597 = vmatpush1.msra.mxu0 0.0
    %1598 = vmatprep.subr.mxu0 0.0
    %1599 = vmatpush1.msra.mxu0 0.0
    %1600 = vmatprep.mubr.f32.mxu0 0.0
    %1601 = vmatmul.mubr.f32.gmra.mrb[0].mxu0 %v1534
    %v1602 = vpop.f32.mrb[0].mxu0
    %v1603 = vadd.f32 0.0, %v1602
    %v1604 = vpop.f32.mrb[0].mxu0
    %1605 = vdwg.mxu0
    %1607 = vrot.lane.b32.xlu0 %v1529, 32
    %v1608 = vpop.permute.xlu0 %1607
    %v1609 = vsel %vm695, %v1608, 0
    %1611 = vmatprep.subr.mxu0 0.0
    %1612 = vmatpush1.msra.mxu0 %v691
    %1613 = vmatprep.subr.mxu0 0.0
    %1614 = vmatpush1.msra.mxu0 %v692
    %1615 = vmatprep.subr.mxu0 0.0
    %1616 = vmatpush1.msra.mxu0 %v693
    %1617 = vmatprep.subr.mxu0 0.0
    %1618 = vmatpush1.msra.mxu0 %v694
    %1619 = vmatprep.subr.mxu0 0.0
    %1620 = vmatpush1.msra.mxu0 0.0
    %1621 = vmatprep.subr.mxu0 0.0
    %1622 = vmatpush1.msra.mxu0 0.0
    %1623 = vmatprep.subr.mxu0 0.0
    %1624 = vmatpush1.msra.mxu0 0.0
    %1625 = vmatprep.subr.mxu0 0.0
    %1626 = vmatpush1.msra.mxu0 0.0
    %1627 = vmatprep.subr.mxu0 0.0
    %1628 = vmatpush1.msra.mxu0 0.0
    %1629 = vmatprep.subr.mxu0 0.0
    %1630 = vmatpush1.msra.mxu0 0.0
    %1631 = vmatprep.subr.mxu0 0.0
    %1632 = vmatpush1.msra.mxu0 0.0
    %1633 = vmatprep.subr.mxu0 0.0
    %1634 = vmatpush1.msra.mxu0 0.0
    %1635 = vmatprep.subr.mxu0 0.0
    %1636 = vmatpush1.msra.mxu0 0.0
    %1637 = vmatprep.subr.mxu0 0.0
    %1638 = vmatpush1.msra.mxu0 0.0
    %1639 = vmatprep.subr.mxu0 0.0
    %1640 = vmatpush1.msra.mxu0 0.0
    %1641 = vmatprep.subr.mxu0 0.0
    %1642 = vmatpush1.msra.mxu0 0.0
    %1643 = vmatprep.subr.mxu0 0.0
    %1644 = vmatpush1.msra.mxu0 0.0
    %1645 = vmatprep.subr.mxu0 0.0
    %1646 = vmatpush1.msra.mxu0 0.0
    %1647 = vmatprep.subr.mxu0 0.0
    %1648 = vmatpush1.msra.mxu0 0.0
    %1649 = vmatprep.subr.mxu0 0.0
    %1650 = vmatpush1.msra.mxu0 0.0
    %1651 = vmatprep.subr.mxu0 0.0
    %1652 = vmatpush1.msra.mxu0 0.0
    %1653 = vmatprep.subr.mxu0 0.0
    %1654 = vmatpush1.msra.mxu0 0.0
    %1655 = vmatprep.subr.mxu0 0.0
    %1656 = vmatpush1.msra.mxu0 0.0
    %1657 = vmatprep.subr.mxu0 0.0
    %1658 = vmatpush1.msra.mxu0 0.0
    %1659 = vmatprep.subr.mxu0 0.0
    %1660 = vmatpush1.msra.mxu0 0.0
    %1661 = vmatprep.subr.mxu0 0.0
    %1662 = vmatpush1.msra.mxu0 0.0
    %1663 = vmatprep.subr.mxu0 0.0
    %1664 = vmatpush1.msra.mxu0 0.0
    %1665 = vmatprep.subr.mxu0 0.0
    %1666 = vmatpush1.msra.mxu0 0.0
    %1667 = vmatprep.subr.mxu0 0.0
    %1668 = vmatpush1.msra.mxu0 0.0
    %1669 = vmatprep.subr.mxu0 0.0
    %1670 = vmatpush1.msra.mxu0 0.0
    %1671 = vmatprep.subr.mxu0 0.0
    %1672 = vmatpush1.msra.mxu0 0.0
    %1673 = vmatprep.subr.mxu0 0.0
    %1674 = vmatpush1.msra.mxu0 0.0
    %1675 = vmatprep.mubr.f32.mxu0 0.0
    %1676 = vmatmul.mubr.f32.gmra.mrb[0].mxu0 %v1609
    %v1677 = vpop.f32.mrb[0].mxu0
    %v1678 = vadd.f32 0.0, %v1677
    %v1679 = vpop.f32.mrb[0].mxu0
    %1680 = vdwg.mxu0
    %v1681 = vadd.f32 %v683, %v1603
    %v1683 = vrot.slane %v1678, 2
    %v1685 = vadd.f32 %v679, %v1683
    %v1686 = vxor.u32 %v1681, 2147483648
    %v1687 = vmul.f32 %v1686, 1.442695
    %v1688 = vpow.pop %v1687
    %v1689 = vadd.f32 %v1688, 1.0
    %v1690 = vrcp.pop %v1689
    %v1691 = vmul.f32 1.0, %v1690
    %v1692 = vtanh.pop %v1681
    %v1694 = vrot.slane %v1496, 6
    %v1696 = vmul.f32 %v1691, %v1694
    %1698 = vrot.lane.b32.xlu0 %v1692, 64
    %v1699 = vpop.permute.xlu0 %1698
    %v1701 = vmul.f32 %v1691, %v1699
    %1703 = vrot.lane.b32.xlu0 %v1701, 32
    %v1704 = vpop.permute.xlu0 %1703
    %v1706 = vadd.f32 %v1696, %v1704
    %v1707 = vtanh.pop %v1706
    %1709 = vrot.lane.b32.xlu0 %v1707, 64
    %v1710 = vpop.permute.xlu0 %1709
    %v1712 = vmul.f32 %v1691, %v1710
    %v1713 = vxor.u32 %v1685, 2147483648
    %v1714 = vmul.f32 %v1713, 1.442695
    %v1715 = vpow.pop %v1714
    %v1716 = vadd.f32 %v1715, 1.0
    %v1717 = vrcp.pop %v1716
    %v1718 = vmul.f32 1.0, %v1717
    %v1719 = vtanh.pop %v1685
    %v1721 = vrot.slane %v1523, 2
    %v1723 = vmul.f32 %v1718, %v1721
    %1725 = vrot.lane.b32.xlu0 %v1719, 64
    %v1726 = vpop.permute.xlu0 %1725
    %v1728 = vmul.f32 %v1718, %v1726
    %1730 = vrot.lane.b32.xlu0 %v1728, 32
    %v1731 = vpop.permute.xlu0 %1730
    %v1733 = vadd.f32 %v1723, %v1731
    %v1734 = vtanh.pop %v1733
    %1736 = vrot.lane.b32.xlu0 %v1734, 64
    %v1737 = vpop.permute.xlu0 %1736
    %v1739 = vmul.f32 %v1718, %v1737
    %1741 = vrot.lane.b32.xlu0 %v1712, 32
    %v1742 = vpop.permute.xlu0 %1741
    %v1743 = vsel %vm695, %v1742, 0
    %1745 = vmatprep.subr.mxu0 0.0
    %1746 = vmatpush1.msra.mxu0 %v687
    %1747 = vmatprep.subr.mxu0 0.0
    %1748 = vmatpush1.msra.mxu0 %v688
    %1749 = vmatprep.subr.mxu0 0.0
    %1750 = vmatpush1.msra.mxu0 %v689
    %1751 = vmatprep.subr.mxu0 0.0
    %1752 = vmatpush1.msra.mxu0 %v690
    %1753 = vmatprep.subr.mxu0 0.0
    %1754 = vmatpush1.msra.mxu0 0.0
    %1755 = vmatprep.subr.mxu0 0.0
    %1756 = vmatpush1.msra.mxu0 0.0
    %1757 = vmatprep.subr.mxu0 0.0
    %1758 = vmatpush1.msra.mxu0 0.0
    %1759 = vmatprep.subr.mxu0 0.0
    %1760 = vmatpush1.msra.mxu0 0.0
    %1761 = vmatprep.subr.mxu0 0.0
    %1762 = vmatpush1.msra.mxu0 0.0
    %1763 = vmatprep.subr.mxu0 0.0
    %1764 = vmatpush1.msra.mxu0 0.0
    %1765 = vmatprep.subr.mxu0 0.0
    %1766 = vmatpush1.msra.mxu0 0.0
    %1767 = vmatprep.subr.mxu0 0.0
    %1768 = vmatpush1.msra.mxu0 0.0
    %1769 = vmatprep.subr.mxu0 0.0
    %1770 = vmatpush1.msra.mxu0 0.0
    %1771 = vmatprep.subr.mxu0 0.0
    %1772 = vmatpush1.msra.mxu0 0.0
    %1773 = vmatprep.subr.mxu0 0.0
    %1774 = vmatpush1.msra.mxu0 0.0
    %1775 = vmatprep.subr.mxu0 0.0
    %1776 = vmatpush1.msra.mxu0 0.0
    %1777 = vmatprep.subr.mxu0 0.0
    %1778 = vmatpush1.msra.mxu0 0.0
    %1779 = vmatprep.subr.mxu0 0.0
    %1780 = vmatpush1.msra.mxu0 0.0
    %1781 = vmatprep.subr.mxu0 0.0
    %1782 = vmatpush1.msra.mxu0 0.0
    %1783 = vmatprep.subr.mxu0 0.0
    %1784 = vmatpush1.msra.mxu0 0.0
    %1785 = vmatprep.subr.mxu0 0.0
    %1786 = vmatpush1.msra.mxu0 0.0
    %1787 = vmatprep.subr.mxu0 0.0
    %1788 = vmatpush1.msra.mxu0 0.0
    %1789 = vmatprep.subr.mxu0 0.0
    %1790 = vmatpush1.msra.mxu0 0.0
    %1791 = vmatprep.subr.mxu0 0.0
    %1792 = vmatpush1.msra.mxu0 0.0
    %1793 = vmatprep.subr.mxu0 0.0
    %1794 = vmatpush1.msra.mxu0 0.0
    %1795 = vmatprep.subr.mxu0 0.0
    %1796 = vmatpush1.msra.mxu0 0.0
    %1797 = vmatprep.subr.mxu0 0.0
    %1798 = vmatpush1.msra.mxu0 0.0
    %1799 = vmatprep.subr.mxu0 0.0
    %1800 = vmatpush1.msra.mxu0 0.0
    %1801 = vmatprep.subr.mxu0 0.0
    %1802 = vmatpush1.msra.mxu0 0.0
    %1803 = vmatprep.subr.mxu0 0.0
    %1804 = vmatpush1.msra.mxu0 0.0
    %1805 = vmatprep.subr.mxu0 0.0
    %1806 = vmatpush1.msra.mxu0 0.0
    %1807 = vmatprep.subr.mxu0 0.0
    %1808 = vmatpush1.msra.mxu0 0.0
    %1809 = vmatprep.mubr.f32.mxu0 0.0
    %1810 = vmatmul.mubr.f32.gmra.mrb[0].mxu0 %v1743
    %v1811 = vpop.f32.mrb[0].mxu0
    %v1812 = vadd.f32 0.0, %v1811
    %v1813 = vpop.f32.mrb[0].mxu0
    %1814 = vdwg.mxu0
    %v1816 = vrot.slane %v1739, 6
    %1817 = vrot.lane.b32.xlu0 %v1816, 32
    %v1818 = vpop.permute.xlu0 %1817
    %v1819 = vsel %vm695, %v1818, 0
    %1821 = vmatprep.subr.mxu0 0.0
    %1822 = vmatpush1.msra.mxu0 %v691
    %1823 = vmatprep.subr.mxu0 0.0
    %1824 = vmatpush1.msra.mxu0 %v692
    %1825 = vmatprep.subr.mxu0 0.0
    %1826 = vmatpush1.msra.mxu0 %v693
    %1827 = vmatprep.subr.mxu0 0.0
    %1828 = vmatpush1.msra.mxu0 %v694
    %1829 = vmatprep.subr.mxu0 0.0
    %1830 = vmatpush1.msra.mxu0 0.0
    %1831 = vmatprep.subr.mxu0 0.0
    %1832 = vmatpush1.msra.mxu0 0.0
    %1833 = vmatprep.subr.mxu0 0.0
    %1834 = vmatpush1.msra.mxu0 0.0
    %1835 = vmatprep.subr.mxu0 0.0
    %1836 = vmatpush1.msra.mxu0 0.0
    %1837 = vmatprep.subr.mxu0 0.0
    %1838 = vmatpush1.msra.mxu0 0.0
    %1839 = vmatprep.subr.mxu0 0.0
    %1840 = vmatpush1.msra.mxu0 0.0
    %1841 = vmatprep.subr.mxu0 0.0
    %1842 = vmatpush1.msra.mxu0 0.0
    %1843 = vmatprep.subr.mxu0 0.0
    %1844 = vmatpush1.msra.mxu0 0.0
    %1845 = vmatprep.subr.mxu0 0.0
    %1846 = vmatpush1.msra.mxu0 0.0
    %1847 = vmatprep.subr.mxu0 0.0
    %1848 = vmatpush1.msra.mxu0 0.0
    %1849 = vmatprep.subr.mxu0 0.0
    %1850 = vmatpush1.msra.mxu0 0.0
    %1851 = vmatprep.subr.mxu0 0.0
    %1852 = vmatpush1.msra.mxu0 0.0
    %1853 = vmatprep.subr.mxu0 0.0
    %1854 = vmatpush1.msra.mxu0 0.0
    %1855 = vmatprep.subr.mxu0 0.0
    %1856 = vmatpush1.msra.mxu0 0.0
    %1857 = vmatprep.subr.mxu0 0.0
    %1858 = vmatpush1.msra.mxu0 0.0
    %1859 = vmatprep.subr.mxu0 0.0
    %1860 = vmatpush1.msra.mxu0 0.0
    %1861 = vmatprep.subr.mxu0 0.0
    %1862 = vmatpush1.msra.mxu0 0.0
    %1863 = vmatprep.subr.mxu0 0.0
    %1864 = vmatpush1.msra.mxu0 0.0
    %1865 = vmatprep.subr.mxu0 0.0
    %1866 = vmatpush1.msra.mxu0 0.0
    %1867 = vmatprep.subr.mxu0 0.0
    %1868 = vmatpush1.msra.mxu0 0.0
    %1869 = vmatprep.subr.mxu0 0.0
    %1870 = vmatpush1.msra.mxu0 0.0
    %1871 = vmatprep.subr.mxu0 0.0
    %1872 = vmatpush1.msra.mxu0 0.0
    %1873 = vmatprep.subr.mxu0 0.0
    %1874 = vmatpush1.msra.mxu0 0.0
    %1875 = vmatprep.subr.mxu0 0.0
    %1876 = vmatpush1.msra.mxu0 0.0
    %1877 = vmatprep.subr.mxu0 0.0
    %1878 = vmatpush1.msra.mxu0 0.0
    %1879 = vmatprep.subr.mxu0 0.0
    %1880 = vmatpush1.msra.mxu0 0.0
    %1881 = vmatprep.subr.mxu0 0.0
    %1882 = vmatpush1.msra.mxu0 0.0
    %1883 = vmatprep.subr.mxu0 0.0
    %1884 = vmatpush1.msra.mxu0 0.0
    %1885 = vmatprep.mubr.f32.mxu0 0.0
    %1886 = vmatmul.mubr.f32.gmra.mrb[0].mxu0 %v1819
    %v1887 = vpop.f32.mrb[0].mxu0
    %v1888 = vadd.f32 0.0, %v1887
    %v1889 = vpop.f32.mrb[0].mxu0
    %1890 = vdwg.mxu0
    %v1892 = vrot.slane %v1812, 6
    %v1894 = vadd.f32 %v683, %v1892
    %v1896 = vrot.slane %v1888, 4
    %v1898 = vadd.f32 %v679, %v1896
    %v1899 = vxor.u32 %v1894, 2147483648
    %v1900 = vmul.f32 %v1899, 1.442695
    %v1901 = vpow.pop %v1900
    %v1902 = vadd.f32 %v1901, 1.0
    %v1903 = vrcp.pop %v1902
    %v1904 = vmul.f32 1.0, %v1903
    %v1905 = vtanh.pop %v1894
    %v1907 = vrot.slane %v1706, 6
    %v1909 = vmul.f32 %v1904, %v1907
    %1911 = vrot.lane.b32.xlu0 %v1905, 64
    %v1912 = vpop.permute.xlu0 %1911
    %v1914 = vmul.f32 %v1904, %v1912
    %1916 = vrot.lane.b32.xlu0 %v1914, 32
    %v1917 = vpop.permute.xlu0 %1916
    %v1919 = vadd.f32 %v1909, %v1917
    %v1920 = vtanh.pop %v1919
    %1922 = vrot.lane.b32.xlu0 %v1920, 64
    %v1923 = vpop.permute.xlu0 %1922
    %v1925 = vmul.f32 %v1904, %v1923
    %v1926 = vxor.u32 %v1898, 2147483648
    %v1927 = vmul.f32 %v1926, 1.442695
    %v1928 = vpow.pop %v1927
    %v1929 = vadd.f32 %v1928, 1.0
    %v1930 = vrcp.pop %v1929
    %v1931 = vmul.f32 1.0, %v1930
    %v1932 = vtanh.pop %v1898
    %v1934 = vrot.slane %v1733, 2
    %v1936 = vmul.f32 %v1931, %v1934
    %1938 = vrot.lane.b32.xlu0 %v1932, 64
    %v1939 = vpop.permute.xlu0 %1938
    %v1941 = vmul.f32 %v1931, %v1939
    %1943 = vrot.lane.b32.xlu0 %v1941, 32
    %v1944 = vpop.permute.xlu0 %1943
    %v1946 = vadd.f32 %v1936, %v1944
    %v1947 = vtanh.pop %v1946
    %1949 = vrot.lane.b32.xlu0 %v1947, 64
    %v1950 = vpop.permute.xlu0 %1949
    %v1952 = vmul.f32 %v1931, %v1950
    %v1954 = vrot.slane %v1925, 2
    %1955 = vrot.lane.b32.xlu0 %v1954, 32
    %v1956 = vpop.permute.xlu0 %1955
    %v1957 = vsel %vm695, %v1956, 0
    %1959 = vmatprep.subr.mxu0 0.0
    %1960 = vmatpush1.msra.mxu0 %v687
    %1961 = vmatprep.subr.mxu0 0.0
    %1962 = vmatpush1.msra.mxu0 %v688
    %1963 = vmatprep.subr.mxu0 0.0
    %1964 = vmatpush1.msra.mxu0 %v689
    %1965 = vmatprep.subr.mxu0 0.0
    %1966 = vmatpush1.msra.mxu0 %v690
    %1967 = vmatprep.subr.mxu0 0.0
    %1968 = vmatpush1.msra.mxu0 0.0
    %1969 = vmatprep.subr.mxu0 0.0
    %1970 = vmatpush1.msra.mxu0 0.0
    %1971 = vmatprep.subr.mxu0 0.0
    %1972 = vmatpush1.msra.mxu0 0.0
    %1973 = vmatprep.subr.mxu0 0.0
    %1974 = vmatpush1.msra.mxu0 0.0
    %1975 = vmatprep.subr.mxu0 0.0
    %1976 = vmatpush1.msra.mxu0 0.0
    %1977 = vmatprep.subr.mxu0 0.0
    %1978 = vmatpush1.msra.mxu0 0.0
    %1979 = vmatprep.subr.mxu0 0.0
    %1980 = vmatpush1.msra.mxu0 0.0
    %1981 = vmatprep.subr.mxu0 0.0
    %1982 = vmatpush1.msra.mxu0 0.0
    %1983 = vmatprep.subr.mxu0 0.0
    %1984 = vmatpush1.msra.mxu0 0.0
    %1985 = vmatprep.subr.mxu0 0.0
    %1986 = vmatpush1.msra.mxu0 0.0
    %1987 = vmatprep.subr.mxu0 0.0
    %1988 = vmatpush1.msra.mxu0 0.0
    %1989 = vmatprep.subr.mxu0 0.0
    %1990 = vmatpush1.msra.mxu0 0.0
    %1991 = vmatprep.subr.mxu0 0.0
    %1992 = vmatpush1.msra.mxu0 0.0
    %1993 = vmatprep.subr.mxu0 0.0
    %1994 = vmatpush1.msra.mxu0 0.0
    %1995 = vmatprep.subr.mxu0 0.0
    %1996 = vmatpush1.msra.mxu0 0.0
    %1997 = vmatprep.subr.mxu0 0.0
    %1998 = vmatpush1.msra.mxu0 0.0
    %1999 = vmatprep.subr.mxu0 0.0
    %2000 = vmatpush1.msra.mxu0 0.0
    %2001 = vmatprep.subr.mxu0 0.0
    %2002 = vmatpush1.msra.mxu0 0.0
    %2003 = vmatprep.subr.mxu0 0.0
    %2004 = vmatpush1.msra.mxu0 0.0
    %2005 = vmatprep.subr.mxu0 0.0
    %2006 = vmatpush1.msra.mxu0 0.0
    %2007 = vmatprep.subr.mxu0 0.0
    %2008 = vmatpush1.msra.mxu0 0.0
    %2009 = vmatprep.subr.mxu0 0.0
    %2010 = vmatpush1.msra.mxu0 0.0
    %2011 = vmatprep.subr.mxu0 0.0
    %2012 = vmatpush1.msra.mxu0 0.0
    %2013 = vmatprep.subr.mxu0 0.0
    %2014 = vmatpush1.msra.mxu0 0.0
    %2015 = vmatprep.subr.mxu0 0.0
    %2016 = vmatpush1.msra.mxu0 0.0
    %2017 = vmatprep.subr.mxu0 0.0
    %2018 = vmatpush1.msra.mxu0 0.0
    %2019 = vmatprep.subr.mxu0 0.0
    %2020 = vmatpush1.msra.mxu0 0.0
    %2021 = vmatprep.subr.mxu0 0.0
    %2022 = vmatpush1.msra.mxu0 0.0
    %2023 = vmatprep.mubr.f32.mxu0 0.0
    %2024 = vmatmul.mubr.f32.gmra.mrb[0].mxu0 %v1957
    %v2025 = vpop.f32.mrb[0].mxu0
    %v2026 = vadd.f32 0.0, %v2025
    %v2027 = vpop.f32.mrb[0].mxu0
    %2028 = vdwg.mxu0
    %v2030 = vrot.slane %v1952, 4
    %2031 = vrot.lane.b32.xlu0 %v2030, 32
    %v2032 = vpop.permute.xlu0 %2031
    %v2033 = vsel %vm695, %v2032, 0
    %2035 = vmatprep.subr.mxu0 0.0
    %2036 = vmatpush1.msra.mxu0 %v691
    %2037 = vmatprep.subr.mxu0 0.0
    %2038 = vmatpush1.msra.mxu0 %v692
    %2039 = vmatprep.subr.mxu0 0.0
    %2040 = vmatpush1.msra.mxu0 %v693
    %2041 = vmatprep.subr.mxu0 0.0
    %2042 = vmatpush1.msra.mxu0 %v694
    %2043 = vmatprep.subr.mxu0 0.0
    %2044 = vmatpush1.msra.mxu0 0.0
    %2045 = vmatprep.subr.mxu0 0.0
    %2046 = vmatpush1.msra.mxu0 0.0
    %2047 = vmatprep.subr.mxu0 0.0
    %2048 = vmatpush1.msra.mxu0 0.0
    %2049 = vmatprep.subr.mxu0 0.0
    %2050 = vmatpush1.msra.mxu0 0.0
    %2051 = vmatprep.subr.mxu0 0.0
    %2052 = vmatpush1.msra.mxu0 0.0
    %2053 = vmatprep.subr.mxu0 0.0
    %2054 = vmatpush1.msra.mxu0 0.0
    %2055 = vmatprep.subr.mxu0 0.0
    %2056 = vmatpush1.msra.mxu0 0.0
    %2057 = vmatprep.subr.mxu0 0.0
    %2058 = vmatpush1.msra.mxu0 0.0
    %2059 = vmatprep.subr.mxu0 0.0
    %2060 = vmatpush1.msra.mxu0 0.0
    %2061 = vmatprep.subr.mxu0 0.0
    %2062 = vmatpush1.msra.mxu0 0.0
    %2063 = vmatprep.subr.mxu0 0.0
    %2064 = vmatpush1.msra.mxu0 0.0
    %2065 = vmatprep.subr.mxu0 0.0
    %2066 = vmatpush1.msra.mxu0 0.0
    %2067 = vmatprep.subr.mxu0 0.0
    %2068 = vmatpush1.msra.mxu0 0.0
    %2069 = vmatprep.subr.mxu0 0.0
    %2070 = vmatpush1.msra.mxu0 0.0
    %2071 = vmatprep.subr.mxu0 0.0
    %2072 = vmatpush1.msra.mxu0 0.0
    %2073 = vmatprep.subr.mxu0 0.0
    %2074 = vmatpush1.msra.mxu0 0.0
    %2075 = vmatprep.subr.mxu0 0.0
    %2076 = vmatpush1.msra.mxu0 0.0
    %2077 = vmatprep.subr.mxu0 0.0
    %2078 = vmatpush1.msra.mxu0 0.0
    %2079 = vmatprep.subr.mxu0 0.0
    %2080 = vmatpush1.msra.mxu0 0.0
    %2081 = vmatprep.subr.mxu0 0.0
    %2082 = vmatpush1.msra.mxu0 0.0
    %2083 = vmatprep.subr.mxu0 0.0
    %2084 = vmatpush1.msra.mxu0 0.0
    %2085 = vmatprep.subr.mxu0 0.0
    %2086 = vmatpush1.msra.mxu0 0.0
    %2087 = vmatprep.subr.mxu0 0.0
    %2088 = vmatpush1.msra.mxu0 0.0
    %2089 = vmatprep.subr.mxu0 0.0
    %2090 = vmatpush1.msra.mxu0 0.0
    %2091 = vmatprep.subr.mxu0 0.0
    %2092 = vmatpush1.msra.mxu0 0.0
    %2093 = vmatprep.subr.mxu0 0.0
    %2094 = vmatpush1.msra.mxu0 0.0
    %2095 = vmatprep.subr.mxu0 0.0
    %2096 = vmatpush1.msra.mxu0 0.0
    %2097 = vmatprep.subr.mxu0 0.0
    %2098 = vmatpush1.msra.mxu0 0.0
    %2099 = vmatprep.mubr.f32.mxu0 0.0
    %2100 = vmatmul.mubr.f32.gmra.mrb[0].mxu0 %v2033
    %v2101 = vpop.f32.mrb[0].mxu0
    %v2102 = vadd.f32 0.0, %v2101
    %v2103 = vpop.f32.mrb[0].mxu0
    %2104 = vdwg.mxu0
    %v2106 = vrot.slane %v2026, 4
    %v2108 = vadd.f32 %v683, %v2106
    %v2110 = vrot.slane %v2102, 6
    %v2112 = vadd.f32 %v679, %v2110
    %v2113 = vxor.u32 %v2108, 2147483648
    %v2114 = vmul.f32 %v2113, 1.442695
    %v2115 = vpow.pop %v2114
    %v2116 = vadd.f32 %v2115, 1.0
    %v2117 = vrcp.pop %v2116
    %v2118 = vmul.f32 1.0, %v2117
    %v2119 = vtanh.pop %v2108
    %v2121 = vrot.slane %v1919, 6
    %v2123 = vmul.f32 %v2118, %v2121
    %2125 = vrot.lane.b32.xlu0 %v2119, 64
    %v2126 = vpop.permute.xlu0 %2125
    %v2128 = vmul.f32 %v2118, %v2126
    %2130 = vrot.lane.b32.xlu0 %v2128, 32
    %v2131 = vpop.permute.xlu0 %2130
    %v2133 = vadd.f32 %v2123, %v2131
    %v2134 = vtanh.pop %v2133
    %2136 = vrot.lane.b32.xlu0 %v2134, 64
    %v2137 = vpop.permute.xlu0 %2136
    %v2139 = vmul.f32 %v2118, %v2137
    %v2140 = vxor.u32 %v2112, 2147483648
    %v2141 = vmul.f32 %v2140, 1.442695
    %v2142 = vpow.pop %v2141
    %v2143 = vadd.f32 %v2142, 1.0
    %v2144 = vrcp.pop %v2143
    %v2145 = vmul.f32 1.0, %v2144
    %v2146 = vtanh.pop %v2112
    %v2148 = vrot.slane %v1946, 2
    %v2150 = vmul.f32 %v2145, %v2148
    %2152 = vrot.lane.b32.xlu0 %v2146, 64
    %v2153 = vpop.permute.xlu0 %2152
    %v2155 = vmul.f32 %v2145, %v2153
    %2157 = vrot.lane.b32.xlu0 %v2155, 32
    %v2158 = vpop.permute.xlu0 %2157
    %v2160 = vadd.f32 %v2150, %v2158
    %v2161 = vtanh.pop %v2160
    %2163 = vrot.lane.b32.xlu0 %v2161, 64
    %v2164 = vpop.permute.xlu0 %2163
    %v2166 = vmul.f32 %v2145, %v2164
    %v2168 = vrot.slane %v2139, 4
    %2169 = vrot.lane.b32.xlu0 %v2168, 32
    %v2170 = vpop.permute.xlu0 %2169
    %v2171 = vsel %vm695, %v2170, 0
    %2173 = vmatprep.subr.mxu0 0.0
    %2174 = vmatpush1.msra.mxu0 %v687
    %2175 = vmatprep.subr.mxu0 0.0
    %2176 = vmatpush1.msra.mxu0 %v688
    %2177 = vmatprep.subr.mxu0 0.0
    %2178 = vmatpush1.msra.mxu0 %v689
    %2179 = vmatprep.subr.mxu0 0.0
    %2180 = vmatpush1.msra.mxu0 %v690
    %2181 = vmatprep.subr.mxu0 0.0
    %2182 = vmatpush1.msra.mxu0 0.0
    %2183 = vmatprep.subr.mxu0 0.0
    %2184 = vmatpush1.msra.mxu0 0.0
    %2185 = vmatprep.subr.mxu0 0.0
    %2186 = vmatpush1.msra.mxu0 0.0
    %2187 = vmatprep.subr.mxu0 0.0
    %2188 = vmatpush1.msra.mxu0 0.0
    %2189 = vmatprep.subr.mxu0 0.0
    %2190 = vmatpush1.msra.mxu0 0.0
    %2191 = vmatprep.subr.mxu0 0.0
    %2192 = vmatpush1.msra.mxu0 0.0
    %2193 = vmatprep.subr.mxu0 0.0
    %2194 = vmatpush1.msra.mxu0 0.0
    %2195 = vmatprep.subr.mxu0 0.0
    %2196 = vmatpush1.msra.mxu0 0.0
    %2197 = vmatprep.subr.mxu0 0.0
    %2198 = vmatpush1.msra.mxu0 0.0
    %2199 = vmatprep.subr.mxu0 0.0
    %2200 = vmatpush1.msra.mxu0 0.0
    %2201 = vmatprep.subr.mxu0 0.0
    %2202 = vmatpush1.msra.mxu0 0.0
    %2203 = vmatprep.subr.mxu0 0.0
    %2204 = vmatpush1.msra.mxu0 0.0
    %2205 = vmatprep.subr.mxu0 0.0
    %2206 = vmatpush1.msra.mxu0 0.0
    %2207 = vmatprep.subr.mxu0 0.0
    %2208 = vmatpush1.msra.mxu0 0.0
    %2209 = vmatprep.subr.mxu0 0.0
    %2210 = vmatpush1.msra.mxu0 0.0
    %2211 = vmatprep.subr.mxu0 0.0
    %2212 = vmatpush1.msra.mxu0 0.0
    %2213 = vmatprep.subr.mxu0 0.0
    %2214 = vmatpush1.msra.mxu0 0.0
    %2215 = vmatprep.subr.mxu0 0.0
    %2216 = vmatpush1.msra.mxu0 0.0
    %2217 = vmatprep.subr.mxu0 0.0
    %2218 = vmatpush1.msra.mxu0 0.0
    %2219 = vmatprep.subr.mxu0 0.0
    %2220 = vmatpush1.msra.mxu0 0.0
    %2221 = vmatprep.subr.mxu0 0.0
    %2222 = vmatpush1.msra.mxu0 0.0
    %2223 = vmatprep.subr.mxu0 0.0
    %2224 = vmatpush1.msra.mxu0 0.0
    %2225 = vmatprep.subr.mxu0 0.0
    %2226 = vmatpush1.msra.mxu0 0.0
    %2227 = vmatprep.subr.mxu0 0.0
    %2228 = vmatpush1.msra.mxu0 0.0
    %2229 = vmatprep.subr.mxu0 0.0
    %2230 = vmatpush1.msra.mxu0 0.0
    %2231 = vmatprep.subr.mxu0 0.0
    %2232 = vmatpush1.msra.mxu0 0.0
    %2233 = vmatprep.subr.mxu0 0.0
    %2234 = vmatpush1.msra.mxu0 0.0
    %2235 = vmatprep.subr.mxu0 0.0
    %2236 = vmatpush1.msra.mxu0 0.0
    %2237 = vmatprep.mubr.f32.mxu0 0.0
    %2238 = vmatmul.mubr.f32.gmra.mrb[0].mxu0 %v2171
    %v2239 = vpop.f32.mrb[0].mxu0
    %v2240 = vadd.f32 0.0, %v2239
    %v2241 = vpop.f32.mrb[0].mxu0
    %2242 = vdwg.mxu0
    %v2244 = vrot.slane %v2166, 2
    %2245 = vrot.lane.b32.xlu0 %v2244, 32
    %v2246 = vpop.permute.xlu0 %2245
    %v2247 = vsel %vm695, %v2246, 0
    %2249 = vmatprep.subr.mxu0 0.0
    %2250 = vmatpush1.msra.mxu0 %v691
    %2251 = vmatprep.subr.mxu0 0.0
    %2252 = vmatpush1.msra.mxu0 %v692
    %2253 = vmatprep.subr.mxu0 0.0
    %2254 = vmatpush1.msra.mxu0 %v693
    %2255 = vmatprep.subr.mxu0 0.0
    %2256 = vmatpush1.msra.mxu0 %v694
    %2257 = vmatprep.subr.mxu0 0.0
    %2258 = vmatpush1.msra.mxu0 0.0
    %2259 = vmatprep.subr.mxu0 0.0
    %2260 = vmatpush1.msra.mxu0 0.0
    %2261 = vmatprep.subr.mxu0 0.0
    %2262 = vmatpush1.msra.mxu0 0.0
    %2263 = vmatprep.subr.mxu0 0.0
    %2264 = vmatpush1.msra.mxu0 0.0
    %2265 = vmatprep.subr.mxu0 0.0
    %2266 = vmatpush1.msra.mxu0 0.0
    %2267 = vmatprep.subr.mxu0 0.0
    %2268 = vmatpush1.msra.mxu0 0.0
    %2269 = vmatprep.subr.mxu0 0.0
    %2270 = vmatpush1.msra.mxu0 0.0
    %2271 = vmatprep.subr.mxu0 0.0
    %2272 = vmatpush1.msra.mxu0 0.0
    %2273 = vmatprep.subr.mxu0 0.0
    %2274 = vmatpush1.msra.mxu0 0.0
    %2275 = vmatprep.subr.mxu0 0.0
    %2276 = vmatpush1.msra.mxu0 0.0
    %2277 = vmatprep.subr.mxu0 0.0
    %2278 = vmatpush1.msra.mxu0 0.0
    %2279 = vmatprep.subr.mxu0 0.0
    %2280 = vmatpush1.msra.mxu0 0.0
    %2281 = vmatprep.subr.mxu0 0.0
    %2282 = vmatpush1.msra.mxu0 0.0
    %2283 = vmatprep.subr.mxu0 0.0
    %2284 = vmatpush1.msra.mxu0 0.0
    %2285 = vmatprep.subr.mxu0 0.0
    %2286 = vmatpush1.msra.mxu0 0.0
    %2287 = vmatprep.subr.mxu0 0.0
    %2288 = vmatpush1.msra.mxu0 0.0
    %2289 = vmatprep.subr.mxu0 0.0
    %2290 = vmatpush1.msra.mxu0 0.0
    %2291 = vmatprep.subr.mxu0 0.0
    %2292 = vmatpush1.msra.mxu0 0.0
    %2293 = vmatprep.subr.mxu0 0.0
    %2294 = vmatpush1.msra.mxu0 0.0
    %2295 = vmatprep.subr.mxu0 0.0
    %2296 = vmatpush1.msra.mxu0 0.0
    %2297 = vmatprep.subr.mxu0 0.0
    %2298 = vmatpush1.msra.mxu0 0.0
    %2299 = vmatprep.subr.mxu0 0.0
    %2300 = vmatpush1.msra.mxu0 0.0
    %2301 = vmatprep.subr.mxu0 0.0
    %2302 = vmatpush1.msra.mxu0 0.0
    %2303 = vmatprep.subr.mxu0 0.0
    %2304 = vmatpush1.msra.mxu0 0.0
    %2305 = vmatprep.subr.mxu0 0.0
    %2306 = vmatpush1.msra.mxu0 0.0
    %2307 = vmatprep.subr.mxu0 0.0
    %2308 = vmatpush1.msra.mxu0 0.0
    %2309 = vmatprep.subr.mxu0 0.0
    %2310 = vmatpush1.msra.mxu0 0.0
    %2311 = vmatprep.subr.mxu0 0.0
    %2312 = vmatpush1.msra.mxu0 0.0
    %2313 = vmatprep.mubr.f32.mxu0 0.0
    %2314 = vmatmul.mubr.f32.gmra.mrb[0].mxu0 %v2247
    %v2315 = vpop.f32.mrb[0].mxu0
    %v2316 = vadd.f32 0.0, %v2315
    %v2317 = vpop.f32.mrb[0].mxu0
    %2318 = vdwg.mxu0
    %v2320 = vrot.slane %v2240, 2
    %v2322 = vadd.f32 %v683, %v2320
    %v2323 = vadd.f32 %v679, %v2316
    %v2324 = vxor.u32 %v2322, 2147483648
    %v2325 = vmul.f32 %v2324, 1.442695
    %v2326 = vpow.pop %v2325
    %v2327 = vadd.f32 %v2326, 1.0
    %v2328 = vrcp.pop %v2327
    %v2329 = vmul.f32 1.0, %v2328
    %v2330 = vtanh.pop %v2322
    %v2332 = vrot.slane %v2133, 6
    %v2334 = vmul.f32 %v2329, %v2332
    %2336 = vrot.lane.b32.xlu0 %v2330, 64
    %v2337 = vpop.permute.xlu0 %2336
    %v2339 = vmul.f32 %v2329, %v2337
    %2341 = vrot.lane.b32.xlu0 %v2339, 32
    %v2342 = vpop.permute.xlu0 %2341
    %v2344 = vadd.f32 %v2334, %v2342
    %v2345 = vtanh.pop %v2344
    %2347 = vrot.lane.b32.xlu0 %v2345, 64
    %v2348 = vpop.permute.xlu0 %2347
    %v2350 = vmul.f32 %v2329, %v2348
    %v2351 = vxor.u32 %v2323, 2147483648
    %v2352 = vmul.f32 %v2351, 1.442695
    %v2353 = vpow.pop %v2352
    %v2354 = vadd.f32 %v2353, 1.0
    %v2355 = vrcp.pop %v2354
    %v2356 = vmul.f32 1.0, %v2355
    %v2357 = vtanh.pop %v2323
    %v2359 = vrot.slane %v2160, 2
    %v2361 = vmul.f32 %v2356, %v2359
    %2363 = vrot.lane.b32.xlu0 %v2357, 64
    %v2364 = vpop.permute.xlu0 %2363
    %v2366 = vmul.f32 %v2356, %v2364
    %2368 = vrot.lane.b32.xlu0 %v2366, 32
    %v2369 = vpop.permute.xlu0 %2368
    %v2371 = vadd.f32 %v2361, %v2369
    %v2372 = vtanh.pop %v2371
    %2374 = vrot.lane.b32.xlu0 %v2372, 64
    %v2375 = vpop.permute.xlu0 %2374
    %v2377 = vmul.f32 %v2356, %v2375
    %v2379 = vrot.slane %v2350, 6
    %v2382 = vrot.slane %v2377, 6
    %vm2384 = vcmask 1041408
    %v2385 = vsel %vm2384, %v2379, %v2382
    %v2386 = vld [vmem:[#allocation10] sm:$0xff]
    %v2387 = vld [vmem:[#allocation10 + $0x8] sm:$0xff]
    %v2388 = vld [vmem:[#allocation10 + $0x10] sm:$0xff]
    %v2389 = vld [vmem:[#allocation10 + $0x18] sm:$0xff]
    %v2390 = vld [vmem:[%s6] sm:$0x1]
    %v2392 = vlaneseq
    %v2393 = vshrl.u32 %v2392, 7
    %v2394 = vsub.s32 0, %v2393
    %v2395 = vrot.slane %v2390, %v2394
    %2398 = vrot.lane.b32.xlu0 %v2385, 32
    %v2399 = vpop.permute.xlu0 %2398
    %v2400 = vsel %vm695, %v2399, 0
    %2402 = vmatprep.subr.mxu0 0.0
    %2403 = vmatpush1.msra.mxu0 %v2386
    %2404 = vmatprep.subr.mxu0 0.0
    %2405 = vmatpush1.msra.mxu0 %v2387
    %2406 = vmatprep.subr.mxu0 0.0
    %2407 = vmatpush1.msra.mxu0 %v2388
    %2408 = vmatprep.subr.mxu0 0.0
    %2409 = vmatpush1.msra.mxu0 %v2389
    %2410 = vmatprep.subr.mxu0 0.0
    %2411 = vmatpush1.msra.mxu0 0.0
    %2412 = vmatprep.subr.mxu0 0.0
    %2413 = vmatpush1.msra.mxu0 0.0
    %2414 = vmatprep.subr.mxu0 0.0
    %2415 = vmatpush1.msra.mxu0 0.0
    %2416 = vmatprep.subr.mxu0 0.0
    %2417 = vmatpush1.msra.mxu0 0.0
    %2418 = vmatprep.subr.mxu0 0.0
    %2419 = vmatpush1.msra.mxu0 0.0
    %2420 = vmatprep.subr.mxu0 0.0
    %2421 = vmatpush1.msra.mxu0 0.0
    %2422 = vmatprep.subr.mxu0 0.0
    %2423 = vmatpush1.msra.mxu0 0.0
    %2424 = vmatprep.subr.mxu0 0.0
    %2425 = vmatpush1.msra.mxu0 0.0
    %2426 = vmatprep.subr.mxu0 0.0
    %2427 = vmatpush1.msra.mxu0 0.0
    %2428 = vmatprep.subr.mxu0 0.0
    %2429 = vmatpush1.msra.mxu0 0.0
    %2430 = vmatprep.subr.mxu0 0.0
    %2431 = vmatpush1.msra.mxu0 0.0
    %2432 = vmatprep.subr.mxu0 0.0
    %2433 = vmatpush1.msra.mxu0 0.0
    %2434 = vmatprep.subr.mxu0 0.0
    %2435 = vmatpush1.msra.mxu0 0.0
    %2436 = vmatprep.subr.mxu0 0.0
    %2437 = vmatpush1.msra.mxu0 0.0
    %2438 = vmatprep.subr.mxu0 0.0
    %2439 = vmatpush1.msra.mxu0 0.0
    %2440 = vmatprep.subr.mxu0 0.0
    %2441 = vmatpush1.msra.mxu0 0.0
    %2442 = vmatprep.subr.mxu0 0.0
    %2443 = vmatpush1.msra.mxu0 0.0
    %2444 = vmatprep.subr.mxu0 0.0
    %2445 = vmatpush1.msra.mxu0 0.0
    %2446 = vmatprep.subr.mxu0 0.0
    %2447 = vmatpush1.msra.mxu0 0.0
    %2448 = vmatprep.subr.mxu0 0.0
    %2449 = vmatpush1.msra.mxu0 0.0
    %2450 = vmatprep.subr.mxu0 0.0
    %2451 = vmatpush1.msra.mxu0 0.0
    %2452 = vmatprep.subr.mxu0 0.0
    %2453 = vmatpush1.msra.mxu0 0.0
    %2454 = vmatprep.subr.mxu0 0.0
    %2455 = vmatpush1.msra.mxu0 0.0
    %2456 = vmatprep.subr.mxu0 0.0
    %2457 = vmatpush1.msra.mxu0 0.0
    %2458 = vmatprep.subr.mxu0 0.0
    %2459 = vmatpush1.msra.mxu0 0.0
    %2460 = vmatprep.subr.mxu0 0.0
    %2461 = vmatpush1.msra.mxu0 0.0
    %2462 = vmatprep.subr.mxu0 0.0
    %2463 = vmatpush1.msra.mxu0 0.0
    %2464 = vmatprep.subr.mxu0 0.0
    %2465 = vmatpush1.msra.mxu0 0.0
    %2466 = vmatprep.mubr.f32.mxu0 0.0
    %2467 = vmatmul.mubr.f32.gmra.mrb[0].mxu0 %v2400
    %v2468 = vpop.f32.mrb[0].mxu0
    %v2469 = vadd.f32 %v2395, %v2468
    %v2470 = vpop.f32.mrb[0].mxu0
    %2471 = vdwg.mxu0
    %2472 = vst [vmem:[#allocation11] sm:$0xf] %v2469
    // Predicated region
    $region50: #{tpu_custom_call.1} parent=1 // pred_check
      _
    $region51: #{tpu_custom_call.1} parent=1 // pred_check_branch
      %2474 = sbr.rel (0) target = $region53
    $region52: #{tpu_custom_call.1} parent=1 // pred_region
      %s2476 = ssub.s32 64, 64
      %2477 = vsyncadd [#allocation4], %s2476
      %s2479 = sshll.u32 [#allocation11], 4
      %s2480 = int_to_ptr.vmem [resolvable:$true] %s2479
      %2482 = dma.vmem_to_hbm [thread:$0]  %s2480, 64, %s7, [#allocation4]
    $region53: #{tpu_custom_call.1} parent=1 // pred_fallthru
      _
    // Predicated region
    $region54: #{tpu_custom_call.1} parent=1 // pred_check
      _
    $region55: #{tpu_custom_call.1} parent=1 // pred_check_branch
      %2484 = sbr.rel (0) target = $region57
    $region56: #{tpu_custom_call.1} parent=1 // pred_region
      %2485 = dma.done [#allocation4], 64
    $region57: #{tpu_custom_call.1} parent=1 // pred_fallthru
      _
    %2486 = vsyncpa [#allocation3], 1
    %2487 = vsyncpa [#allocation6], 1
    %2488 = vsyncpa [#allocation9], 1
    %2489 = vsyncpa [#allocation4], 1

</llo_original>
